<compile_context>
chip_gen: v7x
topology: tpu7x:2x2x1
jax: 0.10.0
libtpu: 0.0.40
codegen_flags: <defaults>
</compile_context>

<pallas_src>
import functools

import jax
import jax.numpy as jnp
from jax.experimental import pallas as pl
from jax.experimental.pallas import tpu as pltpu


_TAPS = tuple((dy, dx) for dy in range(3) for dx in range(3))


# ----------------------------- Pallas kernel --------------------------------

def _content_extractor_kernel(x_ref, w0_ref, b0_ref, wb_ref, bb_ref, o_ref,
                              featp_ref, col_ref, *, H, W, C, CIN_P, n_blocks):
    """Whole ContentExtractor trunk for one batch element, feature kept in VMEM.

    x_ref    : (1, CIN_P, H*W)      input image, channels padded to CIN_P
    w0_ref   : (C, 9*CIN_P)         conv_first weights, im2col-packed
    b0_ref   : (C, 1)
    wb_ref   : (2*n_blocks, C, 9*C) body conv weights, im2col-packed
    bb_ref   : (2*n_blocks, C, 1)
    o_ref    : (1, C, H*W)
    featp_ref: (max(C,CIN_P), H*W + 2*(W+1))  zero-bordered flat feature buffer
    col_ref  : (9*max(C,CIN_P), H*W)          im2col buffer
    """
    HW = H * W
    P = W + 1  # halo width of the flattened, zero-bordered feature buffer

    # Horizontal (dx) boundary masks; the vertical (dy) halo is handled by the real
    # zero border of featp_ref.  Computed once and reused by every conv/tap.
    xcoord = jax.lax.broadcasted_iota(jnp.int32, (1, HW), 1) % W
    not_left = xcoord > 0           # dx == 0 neighbours are invalid on column 0
    not_right = xcoord < W - 1      # dx == 2 neighbours are invalid on column W-1

    # Zero the bordered feature buffer once; only its centre is overwritten below,
    # so the halo stays zero for every layer (in-kernel "same" padding).
    featp_ref[...] = jnp.zeros_like(featp_ref)

    def conv3x3(cin, w_flat, bias):
        # featp_ref[0:cin, P:P+HW] holds this conv's input feature (flattened C, HW).
        # Build the (9*cin, HW) im2col buffer with 9 shifted + masked lane slices,
        # then issue a single MXU matmul with K = 9*cin.
        for t, (dy, dx) in enumerate(_TAPS):
            s = (dy - 1) * W + (dx - 1)
            tap = featp_ref[0:cin, P + s:P + s + HW]
            if dx == 0:
                tap = jnp.where(not_left, tap, 0.0)
            elif dx == 2:
                tap = jnp.where(not_right, tap, 0.0)
            col_ref[t * cin:(t + 1) * cin, :] = tap
        y = jnp.dot(w_flat, col_ref[0:9 * cin, :],
                    preferred_element_type=jnp.float32)
        return y + bias                       # bias (C, 1) broadcasts over lanes

    # ---- conv_first + LeakyReLU(0.1) ----
    featp_ref[0:CIN_P, P:P + HW] = x_ref[0, :, :].astype(jnp.float32)
    y = conv3x3(CIN_P, w0_ref[...], b0_ref[...])
    feat = jnp.where(y > 0, y, 0.1 * y)

    # ---- residual trunk: n_blocks x (relu(conv1) -> conv2 -> skip add) ----
    for i in range(n_blocks):
        featp_ref[0:C, P:P + HW] = feat
        t1 = jnp.maximum(conv3x3(C, wb_ref[2 * i], bb_ref[2 * i]), 0.0)
        featp_ref[0:C, P:P + HW] = t1
        feat = feat + conv3x3(C, wb_ref[2 * i + 1], bb_ref[2 * i + 1])

    o_ref[0, :, :] = feat.astype(o_ref.dtype)


# ------------------------------- wrapper -------------------------------------

def content_extractor_forward(x_nchw, params):
    """ContentExtractor.forward: NCHW in -> NCHW feature maps out (one fused kernel)."""
    N, Cin, H, W = x_nchw.shape
    nf = params["conv_first_w"].shape[-1]
    n_blocks = len(params["body"])
    HW = H * W
    cin_p = ((Cin + 7) // 8) * 8          # pad input channels to a sublane multiple
    cmax = max(nf, cin_p)

    # Pack inputs / weights into the kernel's (C, H*W) / (Cout, 9*Cin) layouts.
    x_flat = x_nchw.reshape(N, Cin, HW)
    if cin_p != Cin:
        x_flat = jnp.pad(x_flat, ((0, 0), (0, cin_p - Cin), (0, 0)))

    w0 = params["conv_first_w"]                                     # (3,3,Cin,nf) HWIO
    if cin_p != Cin:
        w0 = jnp.pad(w0, ((0, 0), (0, 0), (0, cin_p - Cin), (0, 0)))
    w0_flat = w0.reshape(9 * cin_p, nf).T                           # (nf, 9*cin_p)
    b0 = params["conv_first_b"].reshape(nf, 1)

    wb = jnp.stack([w.reshape(9 * nf, nf).T
                    for blk in params["body"] for w in (blk[0], blk[2])])  # (2B, nf, 9nf)
    bb = jnp.stack([b.reshape(nf, 1)
                    for blk in params["body"] for b in (blk[1], blk[3])])  # (2B, nf, 1)

    kern = functools.partial(_content_extractor_kernel,
                             H=H, W=W, C=nf, CIN_P=cin_p, n_blocks=n_blocks)

    out = pl.pallas_call(
        kern,
        out_shape=jax.ShapeDtypeStruct((N, nf, HW), x_nchw.dtype),
        grid=(N,),
        in_specs=[
            pl.BlockSpec((1, cin_p, HW), lambda n: (n, 0, 0)),
            pl.BlockSpec((nf, 9 * cin_p), lambda n: (0, 0)),
            pl.BlockSpec((nf, 1), lambda n: (0, 0)),
            pl.BlockSpec((2 * n_blocks, nf, 9 * nf), lambda n: (0, 0, 0)),
            pl.BlockSpec((2 * n_blocks, nf, 1), lambda n: (0, 0, 0)),
        ],
        out_specs=pl.BlockSpec((1, nf, HW), lambda n: (n, 0, 0)),
        scratch_shapes=[
            pltpu.VMEM((cmax, HW + 2 * (W + 1)), jnp.float32),   # zero-bordered feature
            pltpu.VMEM((9 * cmax, HW), jnp.float32),             # im2col buffer
        ],
        compiler_params=pltpu.CompilerParams(
            dimension_semantics=("parallel",),
        ),
    )(x_flat, w0_flat, b0, wb, bb)

    return out.reshape(N, nf, H, W)


# ------------------------------ parameters -----------------------------------

def init_params(key, in_nc=3, nf=32, n_blocks=2, dtype=jnp.float32):
    """Deterministic parameter init mirroring default_init_weights(scale=0.1)."""
    def conv_init(k, cin, cout, scale):
        kw, _ = jax.random.split(k)
        fan_in = cin * 9
        std = (2.0 / fan_in) ** 0.5  # kaiming normal
        w = jax.random.normal(kw, (3, 3, cin, cout), dtype) * std * scale
        bias = jnp.zeros((cout,), dtype)
        return w, bias

    keys = jax.random.split(key, 1 + 2 * n_blocks)
    params = {}
    params["conv_first_w"], params["conv_first_b"] = conv_init(keys[0], in_nc, nf, 0.1)
    body = []
    for i in range(n_blocks):
        w1, b1 = conv_init(keys[1 + 2 * i], nf, nf, 0.1)
        w2, b2 = conv_init(keys[2 + 2 * i], nf, nf, 0.1)
        body.append((w1, b1, w2, b2))
    params["body"] = body
    return params


# ------------------------------ reference -----------------------------------

def _ref_conv3x3(x_nhwc, w, b):
    y = jax.lax.conv_general_dilated(
        x_nhwc, w, window_strides=(1, 1), padding="SAME",
        dimension_numbers=("NHWC", "HWIO", "NHWC"),
    )
    return y + b


def reference_forward(x_nchw, params):
    x = jnp.transpose(x_nchw, (0, 2, 3, 1))
    y = _ref_conv3x3(x, params["conv_first_w"], params["conv_first_b"])
    feat = jnp.where(y > 0, y, 0.1 * y)
    for (w1, b1, w2, b2) in params["body"]:
        t = jnp.maximum(_ref_conv3x3(feat, w1, b1), 0.0)
        feat = feat + _ref_conv3x3(t, w2, b2)
    return jnp.transpose(feat, (0, 3, 1, 2))


# --------------------------------- main --------------------------------------

if __name__ == "__main__":
    key = jax.random.PRNGKey(0)
    kx, kp = jax.random.split(key)

    # Small shapes consistent with the module: in_nc=3, nf=32, n_blocks=2.
    N, C, H, W = 2, 3, 16, 16
    x = jax.random.normal(kx, (N, C, H, W), jnp.float32)
    params = init_params(kp, in_nc=C, nf=32, n_blocks=2)

    out = jax.block_until_ready(content_extractor_forward(x, params))
    ref = jax.block_until_ready(reference_forward(x, params))

    assert out.shape == (N, 32, H, W), out.shape
    assert jnp.allclose(out, ref, atol=1e-3, rtol=1e-3), float(
        jnp.max(jnp.abs(out - ref))
    )

    print("KERNEL_OK")
</pallas_src>

<mosaic_0001>
module attributes {stable_mosaic.version = 11 : i64} {
  func.func @_content_extractor_kernel(%arg0: i32, %arg1: memref<1x8x256xf32, #tpu.memory_space<vmem>>, %arg2: memref<32x72xf32, #tpu.memory_space<vmem>>, %arg3: memref<32x1xf32, #tpu.memory_space<vmem>>, %arg4: memref<4x32x288xf32, #tpu.memory_space<vmem>>, %arg5: memref<4x32x1xf32, #tpu.memory_space<vmem>>, %arg6: memref<1x32x256xf32, #tpu.memory_space<vmem>>, %arg7: memref<32x290xf32, #tpu.memory_space<vmem>>, %arg8: memref<288x256xf32, #tpu.memory_space<vmem>>) attributes {dimension_semantics = [#tpu.dimension_semantics<parallel>], iteration_bounds = array<i64: 2>, scalar_prefetch = 0 : i64, scratch_operands = 2 : i64, tpu.core_type = #tpu.core_type<tc>, window_params = [{transform_indices = @transform_0, window_bounds = array<i64: 1, 8, 256>}, {pipeline_mode = #tpu.pipeline_mode<synchronous>, transform_indices = @transform_1, window_bounds = array<i64: 32, 72>}, {pipeline_mode = #tpu.pipeline_mode<synchronous>, transform_indices = @transform_2, window_bounds = array<i64: 32, 1>}, {pipeline_mode = #tpu.pipeline_mode<synchronous>, transform_indices = @transform_3, window_bounds = array<i64: 4, 32, 288>}, {pipeline_mode = #tpu.pipeline_mode<synchronous>, transform_indices = @transform_4, window_bounds = array<i64: 4, 32, 1>}, {transform_indices = @transform_5, window_bounds = array<i64: 1, 32, 256>}]} {
    %0 = tpu.iota {dimensions = array<i32: 1>} : vector<1x256xi32>
    %c16_i32 = arith.constant 16 : i32
    %c0_i32 = arith.constant 0 : i32
    %1 = arith.cmpi eq, %c16_i32, %c0_i32 : i32
    %c1_i32 = arith.constant 1 : i32
    %2 = arith.select %1, %c1_i32, %c16_i32 : i32
    %3 = vector.broadcast %2 : i32 to vector<1x256xi32>
    %4 = arith.remsi %0, %3 : vector<1x256xi32>
    %c0_i32_0 = arith.constant 0 : i32
    %5 = vector.broadcast %c0_i32_0 : i32 to vector<1x256xi32>
    %6 = arith.cmpi ne, %4, %5 : vector<1x256xi32>
    %c0_i32_1 = arith.constant 0 : i32
    %7 = vector.broadcast %c0_i32_1 : i32 to vector<1x256xi32>
    %8 = arith.cmpi slt, %4, %7 : vector<1x256xi32>
    %c0_i32_2 = arith.constant 0 : i32
    %9 = arith.cmpi slt, %2, %c0_i32_2 : i32
    %10 = vector.broadcast %9 : i1 to vector<1x256xi1>
    %11 = vector.broadcast %10 : vector<1x256xi1> to vector<1x256xi1>
    %12 = arith.xori %8, %11 : vector<1x256xi1>
    %13 = arith.andi %12, %6 : vector<1x256xi1>
    %14 = vector.broadcast %2 : i32 to vector<1x256xi32>
    %15 = arith.addi %4, %14 : vector<1x256xi32>
    %16 = arith.select %13, %15, %4 : vector<1x256xi1>, vector<1x256xi32>
    %c0_i32_3 = arith.constant 0 : i32
    %17 = vector.broadcast %c0_i32_3 : i32 to vector<1x256xi32>
    %18 = arith.cmpi sgt, %16, %17 : vector<1x256xi32>
    %c15_i32 = arith.constant 15 : i32
    %19 = vector.broadcast %c15_i32 : i32 to vector<1x256xi32>
    %20 = arith.cmpi slt, %16, %19 : vector<1x256xi32>
    %cst = arith.constant 0.000000e+00 : f32
    %21 = vector.broadcast %cst : f32 to vector<32x290xf32>
    %c0 = arith.constant 0 : index
    %c0_4 = arith.constant 0 : index
    %22 = vector.load %arg7[%c0, %c0_4] : memref<32x290xf32, #tpu.memory_space<vmem>>, vector<32x290xf32>
    tpu.vector_store %arg7[%c0, %c0_4], %21 {strides = array<i32>} : memref<32x290xf32, #tpu.memory_space<vmem>>, vector<32x290xf32>,
    %c0_5 = arith.constant 0 : index
    %c0_6 = arith.constant 0 : index
    %c0_7 = arith.constant 0 : index
    %23 = vector.load %arg1[%c0_5, %c0_6, %c0_7] : memref<1x8x256xf32, #tpu.memory_space<vmem>>, vector<1x8x256xf32>
    %24 = vector.shape_cast %23 : vector<1x8x256xf32> to vector<8x256xf32>
    %c0_8 = arith.constant 0 : index
    %c17 = arith.constant 17 : index
    %25 = vector.load %arg7[%c0_8, %c17] : memref<32x290xf32, #tpu.memory_space<vmem>>, vector<8x256xf32>
    tpu.vector_store %arg7[%c0_8, %c17], %24 {strides = array<i32>} : memref<32x290xf32, #tpu.memory_space<vmem>>, vector<8x256xf32>,
    %c0_9 = arith.constant 0 : index
    %c0_10 = arith.constant 0 : index
    %26 = vector.load %arg2[%c0_9, %c0_10] : memref<32x72xf32, #tpu.memory_space<vmem>>, vector<32x72xf32>
    %c0_11 = arith.constant 0 : index
    %c0_12 = arith.constant 0 : index
    %27 = vector.load %arg3[%c0_11, %c0_12] : memref<32x1xf32, #tpu.memory_space<vmem>>, vector<32x1xf32>
    %c0_13 = arith.constant 0 : index
    %c0_14 = arith.constant 0 : index
    %28 = vector.load %arg7[%c0_13, %c0_14] : memref<32x290xf32, #tpu.memory_space<vmem>>, vector<8x256xf32>
    %cst_15 = arith.constant 0.000000e+00 : f32
    %29 = vector.shape_cast %18 : vector<1x256xi1> to vector<1x256xi1>
    %30 = vector.broadcast %29 : vector<1x256xi1> to vector<8x256xi1>
    %31 = vector.broadcast %cst_15 : f32 to vector<8x256xf32>
    %32 = arith.select %30, %28, %31 : vector<8x256xi1>, vector<8x256xf32>
    %c0_16 = arith.constant 0 : index
    %c0_17 = arith.constant 0 : index
    %33 = vector.load %arg8[%c0_16, %c0_17] : memref<288x256xf32, #tpu.memory_space<vmem>>, vector<8x256xf32>
    tpu.vector_store %arg8[%c0_16, %c0_17], %32 {strides = array<i32>} : memref<288x256xf32, #tpu.memory_space<vmem>>, vector<8x256xf32>,
    %c0_18 = arith.constant 0 : index
    %c1 = arith.constant 1 : index
    %34 = vector.load %arg7[%c0_18, %c1] : memref<32x290xf32, #tpu.memory_space<vmem>>, vector<8x256xf32>
    %c8 = arith.constant 8 : index
    %c0_19 = arith.constant 0 : index
    %35 = vector.load %arg8[%c8, %c0_19] : memref<288x256xf32, #tpu.memory_space<vmem>>, vector<8x256xf32>
    tpu.vector_store %arg8[%c8, %c0_19], %34 {strides = array<i32>} : memref<288x256xf32, #tpu.memory_space<vmem>>, vector<8x256xf32>,
    %c0_20 = arith.constant 0 : index
    %c2 = arith.constant 2 : index
    %36 = vector.load %arg7[%c0_20, %c2] : memref<32x290xf32, #tpu.memory_space<vmem>>, vector<8x256xf32>
    %cst_21 = arith.constant 0.000000e+00 : f32
    %37 = vector.shape_cast %20 : vector<1x256xi1> to vector<1x256xi1>
    %38 = vector.broadcast %37 : vector<1x256xi1> to vector<8x256xi1>
    %39 = vector.broadcast %cst_21 : f32 to vector<8x256xf32>
    %40 = arith.select %38, %36, %39 : vector<8x256xi1>, vector<8x256xf32>
    %c16 = arith.constant 16 : index
    %c0_22 = arith.constant 0 : index
    %41 = vector.load %arg8[%c16, %c0_22] : memref<288x256xf32, #tpu.memory_space<vmem>>, vector<8x256xf32>
    tpu.vector_store %arg8[%c16, %c0_22], %40 {strides = array<i32>} : memref<288x256xf32, #tpu.memory_space<vmem>>, vector<8x256xf32>,
    %c0_23 = arith.constant 0 : index
    %c16_24 = arith.constant 16 : index
    %42 = vector.load %arg7[%c0_23, %c16_24] : memref<32x290xf32, #tpu.memory_space<vmem>>, vector<8x256xf32>
    %cst_25 = arith.constant 0.000000e+00 : f32
    %43 = vector.shape_cast %18 : vector<1x256xi1> to vector<1x256xi1>
    %44 = vector.broadcast %43 : vector<1x256xi1> to vector<8x256xi1>
    %45 = vector.broadcast %cst_25 : f32 to vector<8x256xf32>
    %46 = arith.select %44, %42, %45 : vector<8x256xi1>, vector<8x256xf32>
    %c24 = arith.constant 24 : index
    %c0_26 = arith.constant 0 : index
    %47 = vector.load %arg8[%c24, %c0_26] : memref<288x256xf32, #tpu.memory_space<vmem>>, vector<8x256xf32>
    tpu.vector_store %arg8[%c24, %c0_26], %46 {strides = array<i32>} : memref<288x256xf32, #tpu.memory_space<vmem>>, vector<8x256xf32>,
    %c0_27 = arith.constant 0 : index
    %c17_28 = arith.constant 17 : index
    %48 = vector.load %arg7[%c0_27, %c17_28] : memref<32x290xf32, #tpu.memory_space<vmem>>, vector<8x256xf32>
    %c32 = arith.constant 32 : index
    %c0_29 = arith.constant 0 : index
    %49 = vector.load %arg8[%c32, %c0_29] : memref<288x256xf32, #tpu.memory_space<vmem>>, vector<8x256xf32>
    tpu.vector_store %arg8[%c32, %c0_29], %48 {strides = array<i32>} : memref<288x256xf32, #tpu.memory_space<vmem>>, vector<8x256xf32>,
    %c0_30 = arith.constant 0 : index
    %c18 = arith.constant 18 : index
    %50 = vector.load %arg7[%c0_30, %c18] : memref<32x290xf32, #tpu.memory_space<vmem>>, vector<8x256xf32>
    %cst_31 = arith.constant 0.000000e+00 : f32
    %51 = vector.shape_cast %20 : vector<1x256xi1> to vector<1x256xi1>
    %52 = vector.broadcast %51 : vector<1x256xi1> to vector<8x256xi1>
    %53 = vector.broadcast %cst_31 : f32 to vector<8x256xf32>
    %54 = arith.select %52, %50, %53 : vector<8x256xi1>, vector<8x256xf32>
    %c40 = arith.constant 40 : index
    %c0_32 = arith.constant 0 : index
    %55 = vector.load %arg8[%c40, %c0_32] : memref<288x256xf32, #tpu.memory_space<vmem>>, vector<8x256xf32>
    tpu.vector_store %arg8[%c40, %c0_32], %54 {strides = array<i32>} : memref<288x256xf32, #tpu.memory_space<vmem>>, vector<8x256xf32>,
    %c0_33 = arith.constant 0 : index
    %c32_34 = arith.constant 32 : index
    %56 = vector.load %arg7[%c0_33, %c32_34] : memref<32x290xf32, #tpu.memory_space<vmem>>, vector<8x256xf32>
    %cst_35 = arith.constant 0.000000e+00 : f32
    %57 = vector.shape_cast %18 : vector<1x256xi1> to vector<1x256xi1>
    %58 = vector.broadcast %57 : vector<1x256xi1> to vector<8x256xi1>
    %59 = vector.broadcast %cst_35 : f32 to vector<8x256xf32>
    %60 = arith.select %58, %56, %59 : vector<8x256xi1>, vector<8x256xf32>
    %c48 = arith.constant 48 : index
    %c0_36 = arith.constant 0 : index
    %61 = vector.load %arg8[%c48, %c0_36] : memref<288x256xf32, #tpu.memory_space<vmem>>, vector<8x256xf32>
    tpu.vector_store %arg8[%c48, %c0_36], %60 {strides = array<i32>} : memref<288x256xf32, #tpu.memory_space<vmem>>, vector<8x256xf32>,
    %c0_37 = arith.constant 0 : index
    %c33 = arith.constant 33 : index
    %62 = vector.load %arg7[%c0_37, %c33] : memref<32x290xf32, #tpu.memory_space<vmem>>, vector<8x256xf32>
    %c56 = arith.constant 56 : index
    %c0_38 = arith.constant 0 : index
    %63 = vector.load %arg8[%c56, %c0_38] : memref<288x256xf32, #tpu.memory_space<vmem>>, vector<8x256xf32>
    tpu.vector_store %arg8[%c56, %c0_38], %62 {strides = array<i32>} : memref<288x256xf32, #tpu.memory_space<vmem>>, vector<8x256xf32>,
    %c0_39 = arith.constant 0 : index
    %c34 = arith.constant 34 : index
    %64 = vector.load %arg7[%c0_39, %c34] : memref<32x290xf32, #tpu.memory_space<vmem>>, vector<8x256xf32>
    %cst_40 = arith.constant 0.000000e+00 : f32
    %65 = vector.shape_cast %20 : vector<1x256xi1> to vector<1x256xi1>
    %66 = vector.broadcast %65 : vector<1x256xi1> to vector<8x256xi1>
    %67 = vector.broadcast %cst_40 : f32 to vector<8x256xf32>
    %68 = arith.select %66, %64, %67 : vector<8x256xi1>, vector<8x256xf32>
    %c64 = arith.constant 64 : index
    %c0_41 = arith.constant 0 : index
    %69 = vector.load %arg8[%c64, %c0_41] : memref<288x256xf32, #tpu.memory_space<vmem>>, vector<8x256xf32>
    tpu.vector_store %arg8[%c64, %c0_41], %68 {strides = array<i32>} : memref<288x256xf32, #tpu.memory_space<vmem>>, vector<8x256xf32>,
    %c0_42 = arith.constant 0 : index
    %c0_43 = arith.constant 0 : index
    %70 = vector.load %arg8[%c0_42, %c0_43] : memref<288x256xf32, #tpu.memory_space<vmem>>, vector<72x256xf32>
    %cst_44 = arith.constant dense<0.000000e+00> : vector<32x256xf32>
    %71 = tpu.matmul %26, %70, %cst_44 {dimension_numbers = #tpu.dot_dimension_numbers<[1], [0], [0], [1], [0, 0, 1, 1], [], []>} : vector<32x72xf32>, vector<72x256xf32>, vector<32x256xf32> -> vector<32x256xf32>
    %72 = vector.broadcast %27 : vector<32x1xf32> to vector<32x256xf32>
    %73 = arith.addf %71, %72 : vector<32x256xf32>
    %cst_45 = arith.constant 0.000000e+00 : f32
    %74 = vector.broadcast %cst_45 : f32 to vector<32x256xf32>
    %75 = arith.cmpf ogt, %73, %74 : vector<32x256xf32>
    %cst_46 = arith.constant 1.000000e-01 : f32
    %76 = vector.broadcast %cst_46 : f32 to vector<32x256xf32>
    %77 = arith.mulf %76, %73 : vector<32x256xf32>
    %78 = arith.select %75, %73, %77 : vector<32x256xi1>, vector<32x256xf32>
    %c0_47 = arith.constant 0 : index
    %c17_48 = arith.constant 17 : index
    %79 = vector.load %arg7[%c0_47, %c17_48] : memref<32x290xf32, #tpu.memory_space<vmem>>, vector<32x256xf32>
    tpu.vector_store %arg7[%c0_47, %c17_48], %78 {strides = array<i32>} : memref<32x290xf32, #tpu.memory_space<vmem>>, vector<32x256xf32>,
    %c0_49 = arith.constant 0 : index
    %c0_50 = arith.constant 0 : index
    %c0_51 = arith.constant 0 : index
    %80 = vector.load %arg4[%c0_49, %c0_50, %c0_51] : memref<4x32x288xf32, #tpu.memory_space<vmem>>, vector<1x32x288xf32>
    %81 = vector.shape_cast %80 : vector<1x32x288xf32> to vector<32x288xf32>
    %c0_52 = arith.constant 0 : index
    %c0_53 = arith.constant 0 : index
    %c0_54 = arith.constant 0 : index
    %82 = vector.load %arg5[%c0_52, %c0_53, %c0_54] : memref<4x32x1xf32, #tpu.memory_space<vmem>>, vector<1x32x1xf32>
    %83 = vector.shape_cast %82 : vector<1x32x1xf32> to vector<32x1xf32>
    %c0_55 = arith.constant 0 : index
    %c0_56 = arith.constant 0 : index
    %84 = vector.load %arg7[%c0_55, %c0_56] : memref<32x290xf32, #tpu.memory_space<vmem>>, vector<32x256xf32>
    %cst_57 = arith.constant 0.000000e+00 : f32
    %85 = vector.shape_cast %18 : vector<1x256xi1> to vector<1x256xi1>
    %86 = vector.broadcast %85 : vector<1x256xi1> to vector<32x256xi1>
    %87 = vector.broadcast %cst_57 : f32 to vector<32x256xf32>
    %88 = arith.select %86, %84, %87 : vector<32x256xi1>, vector<32x256xf32>
    %c0_58 = arith.constant 0 : index
    %c0_59 = arith.constant 0 : index
    %89 = vector.load %arg8[%c0_58, %c0_59] : memref<288x256xf32, #tpu.memory_space<vmem>>, vector<32x256xf32>
    tpu.vector_store %arg8[%c0_58, %c0_59], %88 {strides = array<i32>} : memref<288x256xf32, #tpu.memory_space<vmem>>, vector<32x256xf32>,
    %c0_60 = arith.constant 0 : index
    %c1_61 = arith.constant 1 : index
    %90 = vector.load %arg7[%c0_60, %c1_61] : memref<32x290xf32, #tpu.memory_space<vmem>>, vector<32x256xf32>
    %c32_62 = arith.constant 32 : index
    %c0_63 = arith.constant 0 : index
    %91 = vector.load %arg8[%c32_62, %c0_63] : memref<288x256xf32, #tpu.memory_space<vmem>>, vector<32x256xf32>
    tpu.vector_store %arg8[%c32_62, %c0_63], %90 {strides = array<i32>} : memref<288x256xf32, #tpu.memory_space<vmem>>, vector<32x256xf32>,
    %c0_64 = arith.constant 0 : index
    %c2_65 = arith.constant 2 : index
    %92 = vector.load %arg7[%c0_64, %c2_65] : memref<32x290xf32, #tpu.memory_space<vmem>>, vector<32x256xf32>
    %cst_66 = arith.constant 0.000000e+00 : f32
    %93 = vector.shape_cast %20 : vector<1x256xi1> to vector<1x256xi1>
    %94 = vector.broadcast %93 : vector<1x256xi1> to vector<32x256xi1>
    %95 = vector.broadcast %cst_66 : f32 to vector<32x256xf32>
    %96 = arith.select %94, %92, %95 : vector<32x256xi1>, vector<32x256xf32>
    %c64_67 = arith.constant 64 : index
    %c0_68 = arith.constant 0 : index
    %97 = vector.load %arg8[%c64_67, %c0_68] : memref<288x256xf32, #tpu.memory_space<vmem>>, vector<32x256xf32>
    tpu.vector_store %arg8[%c64_67, %c0_68], %96 {strides = array<i32>} : memref<288x256xf32, #tpu.memory_space<vmem>>, vector<32x256xf32>,
    %c0_69 = arith.constant 0 : index
    %c16_70 = arith.constant 16 : index
    %98 = vector.load %arg7[%c0_69, %c16_70] : memref<32x290xf32, #tpu.memory_space<vmem>>, vector<32x256xf32>
    %cst_71 = arith.constant 0.000000e+00 : f32
    %99 = vector.shape_cast %18 : vector<1x256xi1> to vector<1x256xi1>
    %100 = vector.broadcast %99 : vector<1x256xi1> to vector<32x256xi1>
    %101 = vector.broadcast %cst_71 : f32 to vector<32x256xf32>
    %102 = arith.select %100, %98, %101 : vector<32x256xi1>, vector<32x256xf32>
    %c96 = arith.constant 96 : index
    %c0_72 = arith.constant 0 : index
    %103 = vector.load %arg8[%c96, %c0_72] : memref<288x256xf32, #tpu.memory_space<vmem>>, vector<32x256xf32>
    tpu.vector_store %arg8[%c96, %c0_72], %102 {strides = array<i32>} : memref<288x256xf32, #tpu.memory_space<vmem>>, vector<32x256xf32>,
    %c0_73 = arith.constant 0 : index
    %c17_74 = arith.constant 17 : index
    %104 = vector.load %arg7[%c0_73, %c17_74] : memref<32x290xf32, #tpu.memory_space<vmem>>, vector<32x256xf32>
    %c128 = arith.constant 128 : index
    %c0_75 = arith.constant 0 : index
    %105 = vector.load %arg8[%c128, %c0_75] : memref<288x256xf32, #tpu.memory_space<vmem>>, vector<32x256xf32>
    tpu.vector_store %arg8[%c128, %c0_75], %104 {strides = array<i32>} : memref<288x256xf32, #tpu.memory_space<vmem>>, vector<32x256xf32>,
    %c0_76 = arith.constant 0 : index
    %c18_77 = arith.constant 18 : index
    %106 = vector.load %arg7[%c0_76, %c18_77] : memref<32x290xf32, #tpu.memory_space<vmem>>, vector<32x256xf32>
    %cst_78 = arith.constant 0.000000e+00 : f32
    %107 = vector.shape_cast %20 : vector<1x256xi1> to vector<1x256xi1>
    %108 = vector.broadcast %107 : vector<1x256xi1> to vector<32x256xi1>
    %109 = vector.broadcast %cst_78 : f32 to vector<32x256xf32>
    %110 = arith.select %108, %106, %109 : vector<32x256xi1>, vector<32x256xf32>
    %c160 = arith.constant 160 : index
    %c0_79 = arith.constant 0 : index
    %111 = vector.load %arg8[%c160, %c0_79] : memref<288x256xf32, #tpu.memory_space<vmem>>, vector<32x256xf32>
    tpu.vector_store %arg8[%c160, %c0_79], %110 {strides = array<i32>} : memref<288x256xf32, #tpu.memory_space<vmem>>, vector<32x256xf32>,
    %c0_80 = arith.constant 0 : index
    %c32_81 = arith.constant 32 : index
    %112 = vector.load %arg7[%c0_80, %c32_81] : memref<32x290xf32, #tpu.memory_space<vmem>>, vector<32x256xf32>
    %cst_82 = arith.constant 0.000000e+00 : f32
    %113 = vector.shape_cast %18 : vector<1x256xi1> to vector<1x256xi1>
    %114 = vector.broadcast %113 : vector<1x256xi1> to vector<32x256xi1>
    %115 = vector.broadcast %cst_82 : f32 to vector<32x256xf32>
    %116 = arith.select %114, %112, %115 : vector<32x256xi1>, vector<32x256xf32>
    %c192 = arith.constant 192 : index
    %c0_83 = arith.constant 0 : index
    %117 = vector.load %arg8[%c192, %c0_83] : memref<288x256xf32, #tpu.memory_space<vmem>>, vector<32x256xf32>
    tpu.vector_store %arg8[%c192, %c0_83], %116 {strides = array<i32>} : memref<288x256xf32, #tpu.memory_space<vmem>>, vector<32x256xf32>,
    %c0_84 = arith.constant 0 : index
    %c33_85 = arith.constant 33 : index
    %118 = vector.load %arg7[%c0_84, %c33_85] : memref<32x290xf32, #tpu.memory_space<vmem>>, vector<32x256xf32>
    %c224 = arith.constant 224 : index
    %c0_86 = arith.constant 0 : index
    %119 = vector.load %arg8[%c224, %c0_86] : memref<288x256xf32, #tpu.memory_space<vmem>>, vector<32x256xf32>
    tpu.vector_store %arg8[%c224, %c0_86], %118 {strides = array<i32>} : memref<288x256xf32, #tpu.memory_space<vmem>>, vector<32x256xf32>,
    %c0_87 = arith.constant 0 : index
    %c34_88 = arith.constant 34 : index
    %120 = vector.load %arg7[%c0_87, %c34_88] : memref<32x290xf32, #tpu.memory_space<vmem>>, vector<32x256xf32>
    %cst_89 = arith.constant 0.000000e+00 : f32
    %121 = vector.shape_cast %20 : vector<1x256xi1> to vector<1x256xi1>
    %122 = vector.broadcast %121 : vector<1x256xi1> to vector<32x256xi1>
    %123 = vector.broadcast %cst_89 : f32 to vector<32x256xf32>
    %124 = arith.select %122, %120, %123 : vector<32x256xi1>, vector<32x256xf32>
    %c256 = arith.constant 256 : index
    %c0_90 = arith.constant 0 : index
    %125 = vector.load %arg8[%c256, %c0_90] : memref<288x256xf32, #tpu.memory_space<vmem>>, vector<32x256xf32>
    tpu.vector_store %arg8[%c256, %c0_90], %124 {strides = array<i32>} : memref<288x256xf32, #tpu.memory_space<vmem>>, vector<32x256xf32>,
    %c0_91 = arith.constant 0 : index
    %c0_92 = arith.constant 0 : index
    %126 = vector.load %arg8[%c0_91, %c0_92] : memref<288x256xf32, #tpu.memory_space<vmem>>, vector<288x256xf32>
    %cst_93 = arith.constant dense<0.000000e+00> : vector<32x256xf32>
    %127 = tpu.matmul %81, %126, %cst_93 {dimension_numbers = #tpu.dot_dimension_numbers<[1], [0], [0], [1], [0, 0, 1, 1], [], []>} : vector<32x288xf32>, vector<288x256xf32>, vector<32x256xf32> -> vector<32x256xf32>
    %128 = vector.broadcast %83 : vector<32x1xf32> to vector<32x256xf32>
    %129 = arith.addf %127, %128 : vector<32x256xf32>
    %cst_94 = arith.constant 0.000000e+00 : f32
    %130 = vector.broadcast %cst_94 : f32 to vector<32x256xf32>
    %131 = arith.maximumf %129, %130 : vector<32x256xf32>
    %c0_95 = arith.constant 0 : index
    %c17_96 = arith.constant 17 : index
    %132 = vector.load %arg7[%c0_95, %c17_96] : memref<32x290xf32, #tpu.memory_space<vmem>>, vector<32x256xf32>
    tpu.vector_store %arg7[%c0_95, %c17_96], %131 {strides = array<i32>} : memref<32x290xf32, #tpu.memory_space<vmem>>, vector<32x256xf32>,
    %c1_97 = arith.constant 1 : index
    %c0_98 = arith.constant 0 : index
    %c0_99 = arith.constant 0 : index
    %133 = vector.load %arg4[%c1_97, %c0_98, %c0_99] : memref<4x32x288xf32, #tpu.memory_space<vmem>>, vector<1x32x288xf32>
    %134 = vector.shape_cast %133 : vector<1x32x288xf32> to vector<32x288xf32>
    %c1_100 = arith.constant 1 : index
    %c0_101 = arith.constant 0 : index
    %c0_102 = arith.constant 0 : index
    %135 = vector.load %arg5[%c1_100, %c0_101, %c0_102] : memref<4x32x1xf32, #tpu.memory_space<vmem>>, vector<1x32x1xf32>
    %136 = vector.shape_cast %135 : vector<1x32x1xf32> to vector<32x1xf32>
    %c0_103 = arith.constant 0 : index
    %c0_104 = arith.constant 0 : index
    %137 = vector.load %arg7[%c0_103, %c0_104] : memref<32x290xf32, #tpu.memory_space<vmem>>, vector<32x256xf32>
    %cst_105 = arith.constant 0.000000e+00 : f32
    %138 = vector.shape_cast %18 : vector<1x256xi1> to vector<1x256xi1>
    %139 = vector.broadcast %138 : vector<1x256xi1> to vector<32x256xi1>
    %140 = vector.broadcast %cst_105 : f32 to vector<32x256xf32>
    %141 = arith.select %139, %137, %140 : vector<32x256xi1>, vector<32x256xf32>
    %c0_106 = arith.constant 0 : index
    %c0_107 = arith.constant 0 : index
    %142 = vector.load %arg8[%c0_106, %c0_107] : memref<288x256xf32, #tpu.memory_space<vmem>>, vector<32x256xf32>
    tpu.vector_store %arg8[%c0_106, %c0_107], %141 {strides = array<i32>} : memref<288x256xf32, #tpu.memory_space<vmem>>, vector<32x256xf32>,
    %c0_108 = arith.constant 0 : index
    %c1_109 = arith.constant 1 : index
    %143 = vector.load %arg7[%c0_108, %c1_109] : memref<32x290xf32, #tpu.memory_space<vmem>>, vector<32x256xf32>
    %c32_110 = arith.constant 32 : index
    %c0_111 = arith.constant 0 : index
    %144 = vector.load %arg8[%c32_110, %c0_111] : memref<288x256xf32, #tpu.memory_space<vmem>>, vector<32x256xf32>
    tpu.vector_store %arg8[%c32_110, %c0_111], %143 {strides = array<i32>} : memref<288x256xf32, #tpu.memory_space<vmem>>, vector<32x256xf32>,
    %c0_112 = arith.constant 0 : index
    %c2_113 = arith.constant 2 : index
    %145 = vector.load %arg7[%c0_112, %c2_113] : memref<32x290xf32, #tpu.memory_space<vmem>>, vector<32x256xf32>
    %cst_114 = arith.constant 0.000000e+00 : f32
    %146 = vector.shape_cast %20 : vector<1x256xi1> to vector<1x256xi1>
    %147 = vector.broadcast %146 : vector<1x256xi1> to vector<32x256xi1>
    %148 = vector.broadcast %cst_114 : f32 to vector<32x256xf32>
    %149 = arith.select %147, %145, %148 : vector<32x256xi1>, vector<32x256xf32>
    %c64_115 = arith.constant 64 : index
    %c0_116 = arith.constant 0 : index
    %150 = vector.load %arg8[%c64_115, %c0_116] : memref<288x256xf32, #tpu.memory_space<vmem>>, vector<32x256xf32>
    tpu.vector_store %arg8[%c64_115, %c0_116], %149 {strides = array<i32>} : memref<288x256xf32, #tpu.memory_space<vmem>>, vector<32x256xf32>,
    %c0_117 = arith.constant 0 : index
    %c16_118 = arith.constant 16 : index
    %151 = vector.load %arg7[%c0_117, %c16_118] : memref<32x290xf32, #tpu.memory_space<vmem>>, vector<32x256xf32>
    %cst_119 = arith.constant 0.000000e+00 : f32
    %152 = vector.shape_cast %18 : vector<1x256xi1> to vector<1x256xi1>
    %153 = vector.broadcast %152 : vector<1x256xi1> to vector<32x256xi1>
    %154 = vector.broadcast %cst_119 : f32 to vector<32x256xf32>
    %155 = arith.select %153, %151, %154 : vector<32x256xi1>, vector<32x256xf32>
    %c96_120 = arith.constant 96 : index
    %c0_121 = arith.constant 0 : index
    %156 = vector.load %arg8[%c96_120, %c0_121] : memref<288x256xf32, #tpu.memory_space<vmem>>, vector<32x256xf32>
    tpu.vector_store %arg8[%c96_120, %c0_121], %155 {strides = array<i32>} : memref<288x256xf32, #tpu.memory_space<vmem>>, vector<32x256xf32>,
    %c0_122 = arith.constant 0 : index
    %c17_123 = arith.constant 17 : index
    %157 = vector.load %arg7[%c0_122, %c17_123] : memref<32x290xf32, #tpu.memory_space<vmem>>, vector<32x256xf32>
    %c128_124 = arith.constant 128 : index
    %c0_125 = arith.constant 0 : index
    %158 = vector.load %arg8[%c128_124, %c0_125] : memref<288x256xf32, #tpu.memory_space<vmem>>, vector<32x256xf32>
    tpu.vector_store %arg8[%c128_124, %c0_125], %157 {strides = array<i32>} : memref<288x256xf32, #tpu.memory_space<vmem>>, vector<32x256xf32>,
    %c0_126 = arith.constant 0 : index
    %c18_127 = arith.constant 18 : index
    %159 = vector.load %arg7[%c0_126, %c18_127] : memref<32x290xf32, #tpu.memory_space<vmem>>, vector<32x256xf32>
    %cst_128 = arith.constant 0.000000e+00 : f32
    %160 = vector.shape_cast %20 : vector<1x256xi1> to vector<1x256xi1>
    %161 = vector.broadcast %160 : vector<1x256xi1> to vector<32x256xi1>
    %162 = vector.broadcast %cst_128 : f32 to vector<32x256xf32>
    %163 = arith.select %161, %159, %162 : vector<32x256xi1>, vector<32x256xf32>
    %c160_129 = arith.constant 160 : index
    %c0_130 = arith.constant 0 : index
    %164 = vector.load %arg8[%c160_129, %c0_130] : memref<288x256xf32, #tpu.memory_space<vmem>>, vector<32x256xf32>
    tpu.vector_store %arg8[%c160_129, %c0_130], %163 {strides = array<i32>} : memref<288x256xf32, #tpu.memory_space<vmem>>, vector<32x256xf32>,
    %c0_131 = arith.constant 0 : index
    %c32_132 = arith.constant 32 : index
    %165 = vector.load %arg7[%c0_131, %c32_132] : memref<32x290xf32, #tpu.memory_space<vmem>>, vector<32x256xf32>
    %cst_133 = arith.constant 0.000000e+00 : f32
    %166 = vector.shape_cast %18 : vector<1x256xi1> to vector<1x256xi1>
    %167 = vector.broadcast %166 : vector<1x256xi1> to vector<32x256xi1>
    %168 = vector.broadcast %cst_133 : f32 to vector<32x256xf32>
    %169 = arith.select %167, %165, %168 : vector<32x256xi1>, vector<32x256xf32>
    %c192_134 = arith.constant 192 : index
    %c0_135 = arith.constant 0 : index
    %170 = vector.load %arg8[%c192_134, %c0_135] : memref<288x256xf32, #tpu.memory_space<vmem>>, vector<32x256xf32>
    tpu.vector_store %arg8[%c192_134, %c0_135], %169 {strides = array<i32>} : memref<288x256xf32, #tpu.memory_space<vmem>>, vector<32x256xf32>,
    %c0_136 = arith.constant 0 : index
    %c33_137 = arith.constant 33 : index
    %171 = vector.load %arg7[%c0_136, %c33_137] : memref<32x290xf32, #tpu.memory_space<vmem>>, vector<32x256xf32>
    %c224_138 = arith.constant 224 : index
    %c0_139 = arith.constant 0 : index
    %172 = vector.load %arg8[%c224_138, %c0_139] : memref<288x256xf32, #tpu.memory_space<vmem>>, vector<32x256xf32>
    tpu.vector_store %arg8[%c224_138, %c0_139], %171 {strides = array<i32>} : memref<288x256xf32, #tpu.memory_space<vmem>>, vector<32x256xf32>,
    %c0_140 = arith.constant 0 : index
    %c34_141 = arith.constant 34 : index
    %173 = vector.load %arg7[%c0_140, %c34_141] : memref<32x290xf32, #tpu.memory_space<vmem>>, vector<32x256xf32>
    %cst_142 = arith.constant 0.000000e+00 : f32
    %174 = vector.shape_cast %20 : vector<1x256xi1> to vector<1x256xi1>
    %175 = vector.broadcast %174 : vector<1x256xi1> to vector<32x256xi1>
    %176 = vector.broadcast %cst_142 : f32 to vector<32x256xf32>
    %177 = arith.select %175, %173, %176 : vector<32x256xi1>, vector<32x256xf32>
    %c256_143 = arith.constant 256 : index
    %c0_144 = arith.constant 0 : index
    %178 = vector.load %arg8[%c256_143, %c0_144] : memref<288x256xf32, #tpu.memory_space<vmem>>, vector<32x256xf32>
    tpu.vector_store %arg8[%c256_143, %c0_144], %177 {strides = array<i32>} : memref<288x256xf32, #tpu.memory_space<vmem>>, vector<32x256xf32>,
    %c0_145 = arith.constant 0 : index
    %c0_146 = arith.constant 0 : index
    %179 = vector.load %arg8[%c0_145, %c0_146] : memref<288x256xf32, #tpu.memory_space<vmem>>, vector<288x256xf32>
    %cst_147 = arith.constant dense<0.000000e+00> : vector<32x256xf32>
    %180 = tpu.matmul %134, %179, %cst_147 {dimension_numbers = #tpu.dot_dimension_numbers<[1], [0], [0], [1], [0, 0, 1, 1], [], []>} : vector<32x288xf32>, vector<288x256xf32>, vector<32x256xf32> -> vector<32x256xf32>
    %181 = vector.broadcast %136 : vector<32x1xf32> to vector<32x256xf32>
    %182 = arith.addf %180, %181 : vector<32x256xf32>
    %183 = arith.addf %78, %182 : vector<32x256xf32>
    %c0_148 = arith.constant 0 : index
    %c17_149 = arith.constant 17 : index
    %184 = vector.load %arg7[%c0_148, %c17_149] : memref<32x290xf32, #tpu.memory_space<vmem>>, vector<32x256xf32>
    tpu.vector_store %arg7[%c0_148, %c17_149], %183 {strides = array<i32>} : memref<32x290xf32, #tpu.memory_space<vmem>>, vector<32x256xf32>,
    %c2_150 = arith.constant 2 : index
    %c0_151 = arith.constant 0 : index
    %c0_152 = arith.constant 0 : index
    %185 = vector.load %arg4[%c2_150, %c0_151, %c0_152] : memref<4x32x288xf32, #tpu.memory_space<vmem>>, vector<1x32x288xf32>
    %186 = vector.shape_cast %185 : vector<1x32x288xf32> to vector<32x288xf32>
    %c2_153 = arith.constant 2 : index
    %c0_154 = arith.constant 0 : index
    %c0_155 = arith.constant 0 : index
    %187 = vector.load %arg5[%c2_153, %c0_154, %c0_155] : memref<4x32x1xf32, #tpu.memory_space<vmem>>, vector<1x32x1xf32>
    %188 = vector.shape_cast %187 : vector<1x32x1xf32> to vector<32x1xf32>
    %c0_156 = arith.constant 0 : index
    %c0_157 = arith.constant 0 : index
    %189 = vector.load %arg7[%c0_156, %c0_157] : memref<32x290xf32, #tpu.memory_space<vmem>>, vector<32x256xf32>
    %cst_158 = arith.constant 0.000000e+00 : f32
    %190 = vector.shape_cast %18 : vector<1x256xi1> to vector<1x256xi1>
    %191 = vector.broadcast %190 : vector<1x256xi1> to vector<32x256xi1>
    %192 = vector.broadcast %cst_158 : f32 to vector<32x256xf32>
    %193 = arith.select %191, %189, %192 : vector<32x256xi1>, vector<32x256xf32>
    %c0_159 = arith.constant 0 : index
    %c0_160 = arith.constant 0 : index
    %194 = vector.load %arg8[%c0_159, %c0_160] : memref<288x256xf32, #tpu.memory_space<vmem>>, vector<32x256xf32>
    tpu.vector_store %arg8[%c0_159, %c0_160], %193 {strides = array<i32>} : memref<288x256xf32, #tpu.memory_space<vmem>>, vector<32x256xf32>,
    %c0_161 = arith.constant 0 : index
    %c1_162 = arith.constant 1 : index
    %195 = vector.load %arg7[%c0_161, %c1_162] : memref<32x290xf32, #tpu.memory_space<vmem>>, vector<32x256xf32>
    %c32_163 = arith.constant 32 : index
    %c0_164 = arith.constant 0 : index
    %196 = vector.load %arg8[%c32_163, %c0_164] : memref<288x256xf32, #tpu.memory_space<vmem>>, vector<32x256xf32>
    tpu.vector_store %arg8[%c32_163, %c0_164], %195 {strides = array<i32>} : memref<288x256xf32, #tpu.memory_space<vmem>>, vector<32x256xf32>,
    %c0_165 = arith.constant 0 : index
    %c2_166 = arith.constant 2 : index
    %197 = vector.load %arg7[%c0_165, %c2_166] : memref<32x290xf32, #tpu.memory_space<vmem>>, vector<32x256xf32>
    %cst_167 = arith.constant 0.000000e+00 : f32
    %198 = vector.shape_cast %20 : vector<1x256xi1> to vector<1x256xi1>
    %199 = vector.broadcast %198 : vector<1x256xi1> to vector<32x256xi1>
    %200 = vector.broadcast %cst_167 : f32 to vector<32x256xf32>
    %201 = arith.select %199, %197, %200 : vector<32x256xi1>, vector<32x256xf32>
    %c64_168 = arith.constant 64 : index
    %c0_169 = arith.constant 0 : index
    %202 = vector.load %arg8[%c64_168, %c0_169] : memref<288x256xf32, #tpu.memory_space<vmem>>, vector<32x256xf32>
    tpu.vector_store %arg8[%c64_168, %c0_169], %201 {strides = array<i32>} : memref<288x256xf32, #tpu.memory_space<vmem>>, vector<32x256xf32>,
    %c0_170 = arith.constant 0 : index
    %c16_171 = arith.constant 16 : index
    %203 = vector.load %arg7[%c0_170, %c16_171] : memref<32x290xf32, #tpu.memory_space<vmem>>, vector<32x256xf32>
    %cst_172 = arith.constant 0.000000e+00 : f32
    %204 = vector.shape_cast %18 : vector<1x256xi1> to vector<1x256xi1>
    %205 = vector.broadcast %204 : vector<1x256xi1> to vector<32x256xi1>
    %206 = vector.broadcast %cst_172 : f32 to vector<32x256xf32>
    %207 = arith.select %205, %203, %206 : vector<32x256xi1>, vector<32x256xf32>
    %c96_173 = arith.constant 96 : index
    %c0_174 = arith.constant 0 : index
    %208 = vector.load %arg8[%c96_173, %c0_174] : memref<288x256xf32, #tpu.memory_space<vmem>>, vector<32x256xf32>
    tpu.vector_store %arg8[%c96_173, %c0_174], %207 {strides = array<i32>} : memref<288x256xf32, #tpu.memory_space<vmem>>, vector<32x256xf32>,
    %c0_175 = arith.constant 0 : index
    %c17_176 = arith.constant 17 : index
    %209 = vector.load %arg7[%c0_175, %c17_176] : memref<32x290xf32, #tpu.memory_space<vmem>>, vector<32x256xf32>
    %c128_177 = arith.constant 128 : index
    %c0_178 = arith.constant 0 : index
    %210 = vector.load %arg8[%c128_177, %c0_178] : memref<288x256xf32, #tpu.memory_space<vmem>>, vector<32x256xf32>
    tpu.vector_store %arg8[%c128_177, %c0_178], %209 {strides = array<i32>} : memref<288x256xf32, #tpu.memory_space<vmem>>, vector<32x256xf32>,
    %c0_179 = arith.constant 0 : index
    %c18_180 = arith.constant 18 : index
    %211 = vector.load %arg7[%c0_179, %c18_180] : memref<32x290xf32, #tpu.memory_space<vmem>>, vector<32x256xf32>
    %cst_181 = arith.constant 0.000000e+00 : f32
    %212 = vector.shape_cast %20 : vector<1x256xi1> to vector<1x256xi1>
    %213 = vector.broadcast %212 : vector<1x256xi1> to vector<32x256xi1>
    %214 = vector.broadcast %cst_181 : f32 to vector<32x256xf32>
    %215 = arith.select %213, %211, %214 : vector<32x256xi1>, vector<32x256xf32>
    %c160_182 = arith.constant 160 : index
    %c0_183 = arith.constant 0 : index
    %216 = vector.load %arg8[%c160_182, %c0_183] : memref<288x256xf32, #tpu.memory_space<vmem>>, vector<32x256xf32>
    tpu.vector_store %arg8[%c160_182, %c0_183], %215 {strides = array<i32>} : memref<288x256xf32, #tpu.memory_space<vmem>>, vector<32x256xf32>,
    %c0_184 = arith.constant 0 : index
    %c32_185 = arith.constant 32 : index
    %217 = vector.load %arg7[%c0_184, %c32_185] : memref<32x290xf32, #tpu.memory_space<vmem>>, vector<32x256xf32>
    %cst_186 = arith.constant 0.000000e+00 : f32
    %218 = vector.shape_cast %18 : vector<1x256xi1> to vector<1x256xi1>
    %219 = vector.broadcast %218 : vector<1x256xi1> to vector<32x256xi1>
    %220 = vector.broadcast %cst_186 : f32 to vector<32x256xf32>
    %221 = arith.select %219, %217, %220 : vector<32x256xi1>, vector<32x256xf32>
    %c192_187 = arith.constant 192 : index
    %c0_188 = arith.constant 0 : index
    %222 = vector.load %arg8[%c192_187, %c0_188] : memref<288x256xf32, #tpu.memory_space<vmem>>, vector<32x256xf32>
    tpu.vector_store %arg8[%c192_187, %c0_188], %221 {strides = array<i32>} : memref<288x256xf32, #tpu.memory_space<vmem>>, vector<32x256xf32>,
    %c0_189 = arith.constant 0 : index
    %c33_190 = arith.constant 33 : index
    %223 = vector.load %arg7[%c0_189, %c33_190] : memref<32x290xf32, #tpu.memory_space<vmem>>, vector<32x256xf32>
    %c224_191 = arith.constant 224 : index
    %c0_192 = arith.constant 0 : index
    %224 = vector.load %arg8[%c224_191, %c0_192] : memref<288x256xf32, #tpu.memory_space<vmem>>, vector<32x256xf32>
    tpu.vector_store %arg8[%c224_191, %c0_192], %223 {strides = array<i32>} : memref<288x256xf32, #tpu.memory_space<vmem>>, vector<32x256xf32>,
    %c0_193 = arith.constant 0 : index
    %c34_194 = arith.constant 34 : index
    %225 = vector.load %arg7[%c0_193, %c34_194] : memref<32x290xf32, #tpu.memory_space<vmem>>, vector<32x256xf32>
    %cst_195 = arith.constant 0.000000e+00 : f32
    %226 = vector.shape_cast %20 : vector<1x256xi1> to vector<1x256xi1>
    %227 = vector.broadcast %226 : vector<1x256xi1> to vector<32x256xi1>
    %228 = vector.broadcast %cst_195 : f32 to vector<32x256xf32>
    %229 = arith.select %227, %225, %228 : vector<32x256xi1>, vector<32x256xf32>
    %c256_196 = arith.constant 256 : index
    %c0_197 = arith.constant 0 : index
    %230 = vector.load %arg8[%c256_196, %c0_197] : memref<288x256xf32, #tpu.memory_space<vmem>>, vector<32x256xf32>
    tpu.vector_store %arg8[%c256_196, %c0_197], %229 {strides = array<i32>} : memref<288x256xf32, #tpu.memory_space<vmem>>, vector<32x256xf32>,
    %c0_198 = arith.constant 0 : index
    %c0_199 = arith.constant 0 : index
    %231 = vector.load %arg8[%c0_198, %c0_199] : memref<288x256xf32, #tpu.memory_space<vmem>>, vector<288x256xf32>
    %cst_200 = arith.constant dense<0.000000e+00> : vector<32x256xf32>
    %232 = tpu.matmul %186, %231, %cst_200 {dimension_numbers = #tpu.dot_dimension_numbers<[1], [0], [0], [1], [0, 0, 1, 1], [], []>} : vector<32x288xf32>, vector<288x256xf32>, vector<32x256xf32> -> vector<32x256xf32>
    %233 = vector.broadcast %188 : vector<32x1xf32> to vector<32x256xf32>
    %234 = arith.addf %232, %233 : vector<32x256xf32>
    %cst_201 = arith.constant 0.000000e+00 : f32
    %235 = vector.broadcast %cst_201 : f32 to vector<32x256xf32>
    %236 = arith.maximumf %234, %235 : vector<32x256xf32>
    %c0_202 = arith.constant 0 : index
    %c17_203 = arith.constant 17 : index
    %237 = vector.load %arg7[%c0_202, %c17_203] : memref<32x290xf32, #tpu.memory_space<vmem>>, vector<32x256xf32>
    tpu.vector_store %arg7[%c0_202, %c17_203], %236 {strides = array<i32>} : memref<32x290xf32, #tpu.memory_space<vmem>>, vector<32x256xf32>,
    %c3 = arith.constant 3 : index
    %c0_204 = arith.constant 0 : index
    %c0_205 = arith.constant 0 : index
    %238 = vector.load %arg4[%c3, %c0_204, %c0_205] : memref<4x32x288xf32, #tpu.memory_space<vmem>>, vector<1x32x288xf32>
    %239 = vector.shape_cast %238 : vector<1x32x288xf32> to vector<32x288xf32>
    %c3_206 = arith.constant 3 : index
    %c0_207 = arith.constant 0 : index
    %c0_208 = arith.constant 0 : index
    %240 = vector.load %arg5[%c3_206, %c0_207, %c0_208] : memref<4x32x1xf32, #tpu.memory_space<vmem>>, vector<1x32x1xf32>
    %241 = vector.shape_cast %240 : vector<1x32x1xf32> to vector<32x1xf32>
    %c0_209 = arith.constant 0 : index
    %c0_210 = arith.constant 0 : index
    %242 = vector.load %arg7[%c0_209, %c0_210] : memref<32x290xf32, #tpu.memory_space<vmem>>, vector<32x256xf32>
    %cst_211 = arith.constant 0.000000e+00 : f32
    %243 = vector.shape_cast %18 : vector<1x256xi1> to vector<1x256xi1>
    %244 = vector.broadcast %243 : vector<1x256xi1> to vector<32x256xi1>
    %245 = vector.broadcast %cst_211 : f32 to vector<32x256xf32>
    %246 = arith.select %244, %242, %245 : vector<32x256xi1>, vector<32x256xf32>
    %c0_212 = arith.constant 0 : index
    %c0_213 = arith.constant 0 : index
    %247 = vector.load %arg8[%c0_212, %c0_213] : memref<288x256xf32, #tpu.memory_space<vmem>>, vector<32x256xf32>
    tpu.vector_store %arg8[%c0_212, %c0_213], %246 {strides = array<i32>} : memref<288x256xf32, #tpu.memory_space<vmem>>, vector<32x256xf32>,
    %c0_214 = arith.constant 0 : index
    %c1_215 = arith.constant 1 : index
    %248 = vector.load %arg7[%c0_214, %c1_215] : memref<32x290xf32, #tpu.memory_space<vmem>>, vector<32x256xf32>
    %c32_216 = arith.constant 32 : index
    %c0_217 = arith.constant 0 : index
    %249 = vector.load %arg8[%c32_216, %c0_217] : memref<288x256xf32, #tpu.memory_space<vmem>>, vector<32x256xf32>
    tpu.vector_store %arg8[%c32_216, %c0_217], %248 {strides = array<i32>} : memref<288x256xf32, #tpu.memory_space<vmem>>, vector<32x256xf32>,
    %c0_218 = arith.constant 0 : index
    %c2_219 = arith.constant 2 : index
    %250 = vector.load %arg7[%c0_218, %c2_219] : memref<32x290xf32, #tpu.memory_space<vmem>>, vector<32x256xf32>
    %cst_220 = arith.constant 0.000000e+00 : f32
    %251 = vector.shape_cast %20 : vector<1x256xi1> to vector<1x256xi1>
    %252 = vector.broadcast %251 : vector<1x256xi1> to vector<32x256xi1>
    %253 = vector.broadcast %cst_220 : f32 to vector<32x256xf32>
    %254 = arith.select %252, %250, %253 : vector<32x256xi1>, vector<32x256xf32>
    %c64_221 = arith.constant 64 : index
    %c0_222 = arith.constant 0 : index
    %255 = vector.load %arg8[%c64_221, %c0_222] : memref<288x256xf32, #tpu.memory_space<vmem>>, vector<32x256xf32>
    tpu.vector_store %arg8[%c64_221, %c0_222], %254 {strides = array<i32>} : memref<288x256xf32, #tpu.memory_space<vmem>>, vector<32x256xf32>,
    %c0_223 = arith.constant 0 : index
    %c16_224 = arith.constant 16 : index
    %256 = vector.load %arg7[%c0_223, %c16_224] : memref<32x290xf32, #tpu.memory_space<vmem>>, vector<32x256xf32>
    %cst_225 = arith.constant 0.000000e+00 : f32
    %257 = vector.shape_cast %18 : vector<1x256xi1> to vector<1x256xi1>
    %258 = vector.broadcast %257 : vector<1x256xi1> to vector<32x256xi1>
    %259 = vector.broadcast %cst_225 : f32 to vector<32x256xf32>
    %260 = arith.select %258, %256, %259 : vector<32x256xi1>, vector<32x256xf32>
    %c96_226 = arith.constant 96 : index
    %c0_227 = arith.constant 0 : index
    %261 = vector.load %arg8[%c96_226, %c0_227] : memref<288x256xf32, #tpu.memory_space<vmem>>, vector<32x256xf32>
    tpu.vector_store %arg8[%c96_226, %c0_227], %260 {strides = array<i32>} : memref<288x256xf32, #tpu.memory_space<vmem>>, vector<32x256xf32>,
    %c0_228 = arith.constant 0 : index
    %c17_229 = arith.constant 17 : index
    %262 = vector.load %arg7[%c0_228, %c17_229] : memref<32x290xf32, #tpu.memory_space<vmem>>, vector<32x256xf32>
    %c128_230 = arith.constant 128 : index
    %c0_231 = arith.constant 0 : index
    %263 = vector.load %arg8[%c128_230, %c0_231] : memref<288x256xf32, #tpu.memory_space<vmem>>, vector<32x256xf32>
    tpu.vector_store %arg8[%c128_230, %c0_231], %262 {strides = array<i32>} : memref<288x256xf32, #tpu.memory_space<vmem>>, vector<32x256xf32>,
    %c0_232 = arith.constant 0 : index
    %c18_233 = arith.constant 18 : index
    %264 = vector.load %arg7[%c0_232, %c18_233] : memref<32x290xf32, #tpu.memory_space<vmem>>, vector<32x256xf32>
    %cst_234 = arith.constant 0.000000e+00 : f32
    %265 = vector.shape_cast %20 : vector<1x256xi1> to vector<1x256xi1>
    %266 = vector.broadcast %265 : vector<1x256xi1> to vector<32x256xi1>
    %267 = vector.broadcast %cst_234 : f32 to vector<32x256xf32>
    %268 = arith.select %266, %264, %267 : vector<32x256xi1>, vector<32x256xf32>
    %c160_235 = arith.constant 160 : index
    %c0_236 = arith.constant 0 : index
    %269 = vector.load %arg8[%c160_235, %c0_236] : memref<288x256xf32, #tpu.memory_space<vmem>>, vector<32x256xf32>
    tpu.vector_store %arg8[%c160_235, %c0_236], %268 {strides = array<i32>} : memref<288x256xf32, #tpu.memory_space<vmem>>, vector<32x256xf32>,
    %c0_237 = arith.constant 0 : index
    %c32_238 = arith.constant 32 : index
    %270 = vector.load %arg7[%c0_237, %c32_238] : memref<32x290xf32, #tpu.memory_space<vmem>>, vector<32x256xf32>
    %cst_239 = arith.constant 0.000000e+00 : f32
    %271 = vector.shape_cast %18 : vector<1x256xi1> to vector<1x256xi1>
    %272 = vector.broadcast %271 : vector<1x256xi1> to vector<32x256xi1>
    %273 = vector.broadcast %cst_239 : f32 to vector<32x256xf32>
    %274 = arith.select %272, %270, %273 : vector<32x256xi1>, vector<32x256xf32>
    %c192_240 = arith.constant 192 : index
    %c0_241 = arith.constant 0 : index
    %275 = vector.load %arg8[%c192_240, %c0_241] : memref<288x256xf32, #tpu.memory_space<vmem>>, vector<32x256xf32>
    tpu.vector_store %arg8[%c192_240, %c0_241], %274 {strides = array<i32>} : memref<288x256xf32, #tpu.memory_space<vmem>>, vector<32x256xf32>,
    %c0_242 = arith.constant 0 : index
    %c33_243 = arith.constant 33 : index
    %276 = vector.load %arg7[%c0_242, %c33_243] : memref<32x290xf32, #tpu.memory_space<vmem>>, vector<32x256xf32>
    %c224_244 = arith.constant 224 : index
    %c0_245 = arith.constant 0 : index
    %277 = vector.load %arg8[%c224_244, %c0_245] : memref<288x256xf32, #tpu.memory_space<vmem>>, vector<32x256xf32>
    tpu.vector_store %arg8[%c224_244, %c0_245], %276 {strides = array<i32>} : memref<288x256xf32, #tpu.memory_space<vmem>>, vector<32x256xf32>,
    %c0_246 = arith.constant 0 : index
    %c34_247 = arith.constant 34 : index
    %278 = vector.load %arg7[%c0_246, %c34_247] : memref<32x290xf32, #tpu.memory_space<vmem>>, vector<32x256xf32>
    %cst_248 = arith.constant 0.000000e+00 : f32
    %279 = vector.shape_cast %20 : vector<1x256xi1> to vector<1x256xi1>
    %280 = vector.broadcast %279 : vector<1x256xi1> to vector<32x256xi1>
    %281 = vector.broadcast %cst_248 : f32 to vector<32x256xf32>
    %282 = arith.select %280, %278, %281 : vector<32x256xi1>, vector<32x256xf32>
    %c256_249 = arith.constant 256 : index
    %c0_250 = arith.constant 0 : index
    %283 = vector.load %arg8[%c256_249, %c0_250] : memref<288x256xf32, #tpu.memory_space<vmem>>, vector<32x256xf32>
    tpu.vector_store %arg8[%c256_249, %c0_250], %282 {strides = array<i32>} : memref<288x256xf32, #tpu.memory_space<vmem>>, vector<32x256xf32>,
    %c0_251 = arith.constant 0 : index
    %c0_252 = arith.constant 0 : index
    %284 = vector.load %arg8[%c0_251, %c0_252] : memref<288x256xf32, #tpu.memory_space<vmem>>, vector<288x256xf32>
    %cst_253 = arith.constant dense<0.000000e+00> : vector<32x256xf32>
    %285 = tpu.matmul %239, %284, %cst_253 {dimension_numbers = #tpu.dot_dimension_numbers<[1], [0], [0], [1], [0, 0, 1, 1], [], []>} : vector<32x288xf32>, vector<288x256xf32>, vector<32x256xf32> -> vector<32x256xf32>
    %286 = vector.broadcast %241 : vector<32x1xf32> to vector<32x256xf32>
    %287 = arith.addf %285, %286 : vector<32x256xf32>
    %288 = arith.addf %183, %287 : vector<32x256xf32>
    %c0_254 = arith.constant 0 : index
    %c0_255 = arith.constant 0 : index
    %c0_256 = arith.constant 0 : index
    %289 = vector.load %arg6[%c0_254, %c0_255, %c0_256] : memref<1x32x256xf32, #tpu.memory_space<vmem>>, vector<1x32x256xf32>
    %290 = vector.shape_cast %289 : vector<1x32x256xf32> to vector<32x256xf32>
    %291 = vector.shape_cast %288 : vector<32x256xf32> to vector<1x32x256xf32>
    tpu.vector_store %arg6[%c0_254, %c0_255, %c0_256], %291 {strides = array<i32>} : memref<1x32x256xf32, #tpu.memory_space<vmem>>, vector<1x32x256xf32>,
    return
  }
  func.func @transform_0(%arg0: i32) -> (i32, i32, i32) {
    %c0_i32 = arith.constant 0 : i32
    %c0_i32_0 = arith.constant 0 : i32
    %c0_i32_1 = arith.constant 0 : i32
    return %arg0, %c0_i32, %c0_i32_0 : i32, i32, i32
  }
  func.func @transform_1(%arg0: i32) -> (i32, i32) {
    %c0_i32 = arith.constant 0 : i32
    %c0_i32_0 = arith.constant 0 : i32
    %c0_i32_1 = arith.constant 0 : i32
    return %c0_i32, %c0_i32_0 : i32, i32
  }
  func.func @transform_2(%arg0: i32) -> (i32, i32) {
    %c0_i32 = arith.constant 0 : i32
    %c0_i32_0 = arith.constant 0 : i32
    %c0_i32_1 = arith.constant 0 : i32
    return %c0_i32, %c0_i32_0 : i32, i32
  }
  func.func @transform_3(%arg0: i32) -> (i32, i32, i32) {
    %c0_i32 = arith.constant 0 : i32
    %c0_i32_0 = arith.constant 0 : i32
    %c0_i32_1 = arith.constant 0 : i32
    %c0_i32_2 = arith.constant 0 : i32
    return %c0_i32, %c0_i32_0, %c0_i32_1 : i32, i32, i32
  }
  func.func @transform_4(%arg0: i32) -> (i32, i32, i32) {
    %c0_i32 = arith.constant 0 : i32
    %c0_i32_0 = arith.constant 0 : i32
    %c0_i32_1 = arith.constant 0 : i32
    %c0_i32_2 = arith.constant 0 : i32
    return %c0_i32, %c0_i32_0, %c0_i32_1 : i32, i32, i32
  }
  func.func @transform_5(%arg0: i32) -> (i32, i32, i32) {
    %c0_i32 = arith.constant 0 : i32
    %c0_i32_0 = arith.constant 0 : i32
    %c0_i32_1 = arith.constant 0 : i32
    return %arg0, %c0_i32, %c0_i32_0 : i32, i32, i32
  }
}

</mosaic_0001>

<llo_original>
// kernel: tpu_custom_call.1
$region0: #{tpu_custom_call.1}
  #allocation0 [shape = 'u32[]', space=smem, size = 0x4, offset = 0x4, fixed_abs, tag = 'smem constant byte address 0x4 - core index']
  #allocation1 [shape = 'u32[144,128]{1,0:T(1,128)}', space=vmem, size = 0x12000, scoped, tag = 'internal scratch']
  #allocation2 [shape = 'f32[32,290]{1,0:T(8,128)}', space=vmem, size = 0xc000, scoped, tag = 'scratch operand']
  #allocation3 [shape = 'f32[288,256]{1,0:T(8,128)}', space=vmem, size = 0x48000, scoped, tag = 'scratch operand']
  %s0 = inlined_call_operand.vmem [shape: f32[2,8,256], index: 0, kind: input, shape index: {}]
  %s1 = inlined_call_operand.vmem [shape: f32[32,72], index: 1, kind: input, shape index: {}]
  %s2 = inlined_call_operand.vmem [shape: f32[32,1], index: 2, kind: input, shape index: {}]
  %s3 = inlined_call_operand.hbm [shape: f32[4,32,288], index: 3, kind: input, shape index: {}]
  %s4 = inlined_call_operand.vmem [shape: f32[4,32,1], index: 4, kind: input, shape index: {}]
  %s5 = inlined_call_operand.hbm [shape: f32[2,32,256], index: 5, kind: output, shape index: {}]
  %s6 = sld [smem:[#allocation0]]
  $region57: #{tpu_custom_call.1} parent=0
    _
  %s8 = ssub.s32 1, %s6
  %s9 = scalar_select 0, %s8, %s6
  $region1: #{tpu_custom_call.1} parent=0
    #allocation4 [shape = 'u8[196608]{0}', space=vmem, size = 0x30000, scoped, tag = 'input window, operand 3, single buffered']
    #allocation5 [shape = 's32[2]{0}', space=sflag, size = 0x8, scoped, tag = 'scoped memory for tpu_custom_call.1']
    #allocation6 [shape = 's32[2]{0}', space=sflag, size = 0x8, scoped, tag = 'scoped memory for tpu_custom_call.1']
    #allocation7 [shape = 'u8[65536]{0}', space=vmem, size = 0x10000, scoped, tag = 'output window, operand 0']
    %10 = vsyncpa [#allocation5], 0
    %11 = vsyncpa [#allocation6], 0
    %s12 = scalar_lea.sflag [#allocation6], 1
    %13 = vsyncpa %s12, 0
    loop: start=0, step=1, limit=4
    $region2: #{tpu_custom_call.1} parent=1 // loop_pre_header
      _
    $region3: #{tpu_custom_call.1} parent=1 // loop_header
      %s15 = sphi 0, %s19
      %p16 = scmp.ge.s32.totalorder %s15, 4
      %s25 = sphi 0, %s27
      %s28 = sphi 0, %s25
      %s29 = sphi 0, %s28
      %s45 = sphi 0, %s29
      %s49 = sphi 0, %s49
      %s51 = sphi 0, %s49
      %s52 = sphi 0, %s51
      %s66 = sphi 0, %s52
      %s70 = sphi 0, %s70
      %s72 = sphi 0, %s70
      %s73 = sphi 0, %s72
      %s87 = sphi 0, %s73
      %s91 = sphi 0, %s91
      %s93 = sphi 0, %s91
      %s94 = sphi 0, %s93
      %s108 = sphi 0, %s94
      %s112 = sphi 0, %s112
      %s114 = sphi 0, %s112
      %s115 = sphi 0, %s114
      %s129 = sphi 0, %s115
      %s135 = sphi 0, %s137
      %s138 = sphi 0, %s135
      %s139 = sphi 0, %s138
      %s155 = sphi 0, %s139
    $region4: #{tpu_custom_call.1} parent=1 // loop_header_branch
      %18 = sbr.rel (%p16) target = $region8
    $region5: #{tpu_custom_call.1} parent=1 // loop_body
      %s20 = ssub.s32 %s15, 1
      %s21 = ssub.s32 %s15, 2
      %s22 = sadd.s32 %s15, 1
      %s23 = ssub.s32 %s15, %s22
      %p24 = scmp.eq.s32.totalorder %s23, 0
      %s26 = sadd.s32 %s25, 1
      %s27 = scalar_select %p24, %s25, %s26
      %p30 = pneg %p24
      %p31 = scmp.eq.s32.totalorder %s15, 1
      %p32 = por %p30, %p31
      %p33 = scmp.ne.s32.totalorder %s25, %s28
      %p34 = scmp.eq.s32.totalorder %s15, 0
      %p35 = por %p33, %p34
      %p36 = scmp.ne.s32.totalorder %s25, %s28
      %p37 = scmp.eq.s32.totalorder %s20, 1
      %p38 = por %p36, %p37
      %p39 = scmp.ne.s32.totalorder %s28, %s29
      %p40 = scmp.eq.s32.totalorder %s20, 0
      %p41 = por %p39, %p40
      %p42 = scmp.ne.s32.totalorder %s28, %s29
      %p43 = scmp.eq.s32.totalorder %s21, 1
      %p44 = por %p42, %p43
      %p46 = scmp.ne.s32.totalorder %s29, %s45
      %p47 = scmp.eq.s32.totalorder %s21, 0
      %p48 = por %p46, %p47
      %s50 = sadd.s32 %s49, 1
      %p53 = scmp.eq.s32.totalorder %s15, 1
      %p54 = scmp.ne.s32.totalorder %s49, %s51
      %p55 = scmp.eq.s32.totalorder %s15, 0
      %p56 = por %p54, %p55
      %p57 = scmp.ne.s32.totalorder %s49, %s51
      %p58 = scmp.eq.s32.totalorder %s20, 1
      %p59 = por %p57, %p58
      %p60 = scmp.ne.s32.totalorder %s51, %s52
      %p61 = scmp.eq.s32.totalorder %s20, 0
      %p62 = por %p60, %p61
      %p63 = scmp.ne.s32.totalorder %s51, %s52
      %p64 = scmp.eq.s32.totalorder %s21, 1
      %p65 = por %p63, %p64
      %p67 = scmp.ne.s32.totalorder %s52, %s66
      %p68 = scmp.eq.s32.totalorder %s21, 0
      %p69 = por %p67, %p68
      %s71 = sadd.s32 %s70, 1
      %p74 = scmp.eq.s32.totalorder %s15, 1
      %p75 = scmp.ne.s32.totalorder %s70, %s72
      %p76 = scmp.eq.s32.totalorder %s15, 0
      %p77 = por %p75, %p76
      %p78 = scmp.ne.s32.totalorder %s70, %s72
      %p79 = scmp.eq.s32.totalorder %s20, 1
      %p80 = por %p78, %p79
      %p81 = scmp.ne.s32.totalorder %s72, %s73
      %p82 = scmp.eq.s32.totalorder %s20, 0
      %p83 = por %p81, %p82
      %p84 = scmp.ne.s32.totalorder %s72, %s73
      %p85 = scmp.eq.s32.totalorder %s21, 1
      %p86 = por %p84, %p85
      %p88 = scmp.ne.s32.totalorder %s73, %s87
      %p89 = scmp.eq.s32.totalorder %s21, 0
      %p90 = por %p88, %p89
      %s92 = sadd.s32 %s91, 1
      %p95 = scmp.eq.s32.totalorder %s15, 1
      %p96 = scmp.ne.s32.totalorder %s91, %s93
      %p97 = scmp.eq.s32.totalorder %s15, 0
      %p98 = por %p96, %p97
      %p99 = scmp.ne.s32.totalorder %s91, %s93
      %p100 = scmp.eq.s32.totalorder %s20, 1
      %p101 = por %p99, %p100
      %p102 = scmp.ne.s32.totalorder %s93, %s94
      %p103 = scmp.eq.s32.totalorder %s20, 0
      %p104 = por %p102, %p103
      %p105 = scmp.ne.s32.totalorder %s93, %s94
      %p106 = scmp.eq.s32.totalorder %s21, 1
      %p107 = por %p105, %p106
      %p109 = scmp.ne.s32.totalorder %s94, %s108
      %p110 = scmp.eq.s32.totalorder %s21, 0
      %p111 = por %p109, %p110
      %s113 = sadd.s32 %s112, 1
      %p116 = scmp.eq.s32.totalorder %s15, 1
      %p117 = scmp.ne.s32.totalorder %s112, %s114
      %p118 = scmp.eq.s32.totalorder %s15, 0
      %p119 = por %p117, %p118
      %p120 = scmp.ne.s32.totalorder %s112, %s114
      %p121 = scmp.eq.s32.totalorder %s20, 1
      %p122 = por %p120, %p121
      %p123 = scmp.ne.s32.totalorder %s114, %s115
      %p124 = scmp.eq.s32.totalorder %s20, 0
      %p125 = por %p123, %p124
      %p126 = scmp.ne.s32.totalorder %s114, %s115
      %p127 = scmp.eq.s32.totalorder %s21, 1
      %p128 = por %p126, %p127
      %p130 = scmp.ne.s32.totalorder %s115, %s129
      %p131 = scmp.eq.s32.totalorder %s21, 0
      %p132 = por %p130, %p131
      %s133 = ssub.s32 %s15, %s22
      %p134 = scmp.eq.s32.totalorder %s133, 0
      %s136 = sadd.s32 %s135, 1
      %s137 = scalar_select %p134, %s135, %s136
      %p140 = pneg %p134
      %p141 = scmp.eq.s32.totalorder %s15, 1
      %p142 = por %p140, %p141
      %p143 = scmp.ne.s32.totalorder %s135, %s138
      %p144 = scmp.eq.s32.totalorder %s15, 0
      %p145 = por %p143, %p144
      %p146 = scmp.ne.s32.totalorder %s135, %s138
      %p147 = scmp.eq.s32.totalorder %s20, 1
      %p148 = por %p146, %p147
      %p149 = scmp.ne.s32.totalorder %s138, %s139
      %p150 = scmp.eq.s32.totalorder %s20, 0
      %p151 = por %p149, %p150
      %p152 = scmp.ne.s32.totalorder %s138, %s139
      %p153 = scmp.eq.s32.totalorder %s21, 1
      %p154 = por %p152, %p153
      %p156 = scmp.ne.s32.totalorder %s139, %s155
      %p157 = scmp.eq.s32.totalorder %s21, 0
      %p158 = por %p156, %p157
      %p159 = scmp.le.s32.totalorder 1, %s15
      %p160 = scmp.lt.s32.totalorder %s15, 3
      %p161 = pnand %p159, %p160
      %p162 = pneg %p161
      // Predicated region
      $region9: #{tpu_custom_call.1} parent=5 // pred_check
        _
      $region10: #{tpu_custom_call.1} parent=5 // pred_check_branch
        %164 = sbr.rel (%p161) target = $region12
      $region11: #{tpu_custom_call.1} parent=5 // pred_region
        %s165 = ssub.s32 %s15, 1
        // Predicated region
        $region13: #{tpu_custom_call.1} parent=11 // pred_check
          %p166 = pneg %p62
        $region14: #{tpu_custom_call.1} parent=11 // pred_check_branch
          %168 = sbr.rel (%p166) target = $region16
        $region15: #{tpu_custom_call.1} parent=11 // pred_region
          _
        $region16: #{tpu_custom_call.1} parent=11 // pred_fallthru
          _
        // Predicated region
        $region17: #{tpu_custom_call.1} parent=11 // pred_check
          %p169 = pneg %p83
        $region18: #{tpu_custom_call.1} parent=11 // pred_check_branch
          %171 = sbr.rel (%p169) target = $region20
        $region19: #{tpu_custom_call.1} parent=11 // pred_region
          _
        $region20: #{tpu_custom_call.1} parent=11 // pred_fallthru
          _
        // Predicated region
        $region21: #{tpu_custom_call.1} parent=11 // pred_check
          %p172 = pneg %p104
        $region22: #{tpu_custom_call.1} parent=11 // pred_check_branch
          %174 = sbr.rel (%p172) target = $region24
        $region23: #{tpu_custom_call.1} parent=11 // pred_region
          %s176 = ssub.s32 6144, 6144
          %177 = vsyncadd [#allocation5], %s176
          %s178 = sshll.u32 [#allocation4], 4
          %s179 = int_to_ptr.vmem [resolvable:$true] %s178
          %184 = dma.hbm_to_vmem [thread:$0]  %s3, 6144, %s179, [#allocation5], 384, 384, 24
        $region24: #{tpu_custom_call.1} parent=11 // pred_fallthru
          _
        // Predicated region
        $region25: #{tpu_custom_call.1} parent=11 // pred_check
          %p185 = pneg %p125
        $region26: #{tpu_custom_call.1} parent=11 // pred_check_branch
          %187 = sbr.rel (%p185) target = $region28
        $region27: #{tpu_custom_call.1} parent=11 // pred_region
          _
        $region28: #{tpu_custom_call.1} parent=11 // pred_fallthru
          _
      $region12: #{tpu_custom_call.1} parent=5 // pred_fallthru
        _
      %p188 = scmp.lt.s32.totalorder %s15, 2
      // Predicated region
      $region29: #{tpu_custom_call.1} parent=5 // pred_check
        %p189 = pneg %p188
      $region30: #{tpu_custom_call.1} parent=5 // pred_check_branch
        %191 = sbr.rel (%p189) target = $region32
      $region31: #{tpu_custom_call.1} parent=5 // pred_region
        // Predicated region
        $region33: #{tpu_custom_call.1} parent=31 // pred_check
          %p192 = pneg %p35
        $region34: #{tpu_custom_call.1} parent=31 // pred_check_branch
          %194 = sbr.rel (%p192) target = $region36
        $region35: #{tpu_custom_call.1} parent=31 // pred_region
          %p195 = scmp.lt.s32.totalorder %s15, 1
          %s196 = scalar_select %p195, %s15, 1
          %s197 = smul.addr %s196, 2
          %s198 = smul.addr %s197, 8
          %s199 = scalar_lea.vmem %s0, %s198
        $region36: #{tpu_custom_call.1} parent=31 // pred_fallthru
          _
      $region32: #{tpu_custom_call.1} parent=5 // pred_fallthru
        _
      %p200 = scmp.le.s32.totalorder 1, %s15
      %p201 = scmp.lt.s32.totalorder %s15, 3
      %p202 = pnand %p200, %p201
      %p203 = pneg %p202
      // Predicated region
      $region37: #{tpu_custom_call.1} parent=5 // pred_check
        _
      $region38: #{tpu_custom_call.1} parent=5 // pred_check_branch
        %205 = sbr.rel (%p202) target = $region40
      $region39: #{tpu_custom_call.1} parent=5 // pred_region
        %s206 = ssub.s32 %s15, 1
        // Predicated region
        $region41: #{tpu_custom_call.1} parent=39 // pred_check
          %p207 = pneg %p104
        $region42: #{tpu_custom_call.1} parent=39 // pred_check_branch
          %209 = sbr.rel (%p207) target = $region44
        $region43: #{tpu_custom_call.1} parent=39 // pred_region
          %210 = dma.done [#allocation5], 6144
        $region44: #{tpu_custom_call.1} parent=39 // pred_fallthru
          _
        %p211 = scmp.lt.s32.totalorder %s20, 1
        %s212 = scalar_select %p211, %s20, 1
        %s213 = smul.addr %s212, 2
        %s214 = smul.addr %s213, 8
        %s215 = scalar_lea.vmem %s0, %s214
        %p216 = pneg %p41
        %p217 = pneg %p38
        %p218 = pneg %p62
        %p219 = pneg %p59
        %p220 = pneg %p83
        %p221 = pneg %p80
        %p222 = pneg %p104
        %p223 = pneg %p101
        %p224 = pneg %p125
        %p225 = pneg %p122
        %p226 = pneg %p151
        %p227 = pneg %p148
        %s228 = sand.u32 %s138, 1
        %s229 = scalar_lea.sflag [#allocation6], %s228
        %s230 = sand.u32 %s138, 1
        %s231 = smul.addr %s230, 64
        %s232 = scalar_lea.vmem [#allocation7], %s231
        %p233 = scmp.lt.s32.totalorder %s20, 1
        %s234 = scalar_select %p233, %s20, 1
        %s235 = smul.addr %s234, 2
        %s236 = smul.addr %s235, 8
        %s237 = scalar_lea.vmem %s0, %s236
        %v238 = vlaneseq
        %v239 = vand.u32 %v238, 127
        %v240 = vadd.s32 %v239, 128
        %vm241 = vcmp.lt.s32.totalorder %v239, 0
        %v242 = vsub.s32 0, %v239
        %v243 = vsel %vm241, %v242, %v239
        %v244 = vshrl.u32 %v243, 4
        %v245 = vand.u32 %v243, 15
        %v246 = vsub.s32 0, %v245
        %v247 = vsel %vm241, %v246, %v245
        %vm248 = vcmp.lt.s32.totalorder %v240, 0
        %v249 = vsub.s32 0, %v240
        %v250 = vsel %vm248, %v249, %v240
        %v251 = vshrl.u32 %v250, 4
        %v252 = vand.u32 %v250, 15
        %v253 = vsub.s32 0, %v252
        %v254 = vsel %vm248, %v253, %v252
        %vm255 = vcmp.ne.s32.totalorder %v247, 0
        %vm256 = vcmp.ne.s32.totalorder %v254, 0
        %vm257 = vcmp.lt.s32.totalorder %v247, 0
        %vm258 = vcmp.lt.s32.totalorder %v254, 0
        %vm259 = vmand %vm257, %vm255
        %vm260 = vmand %vm258, %vm256
        %v261 = vadd.s32 %v247, 16
        %v262 = vadd.s32 %v254, 16
        %v263 = vsel %vm259, %v261, %v247
        %v264 = vsel %vm260, %v262, %v254
        %vm265 = vcmp.gt.s32.totalorder %v263, 0
        %vm266 = vcmp.gt.s32.totalorder %v264, 0
        %vm267 = vcmp.lt.s32.totalorder %v263, 15
        %vm268 = vcmp.lt.s32.totalorder %v264, 15
        %269 = vst [vmem:[#allocation2] sm:$0xff] 0.0
        %270 = vst [vmem:[#allocation2 + $0x8] sm:$0xff] 0.0
        %vm271 = vcmask 277504
        %272 = vst.msk [vmem:[#allocation2 + $0x10] sm:$0xff] %vm271, 0.0
        %273 = vst [vmem:[#allocation2 + $0x18] sm:$0xff] 0.0
        %274 = vst [vmem:[#allocation2 + $0x20] sm:$0xff] 0.0
        %275 = vst.msk [vmem:[#allocation2 + $0x28] sm:$0xff] %vm271, 0.0
        %276 = vst [vmem:[#allocation2 + $0x30] sm:$0xff] 0.0
        %277 = vst [vmem:[#allocation2 + $0x38] sm:$0xff] 0.0
        %278 = vst.msk [vmem:[#allocation2 + $0x40] sm:$0xff] %vm271, 0.0
        %279 = vst [vmem:[#allocation2 + $0x48] sm:$0xff] 0.0
        %280 = vst [vmem:[#allocation2 + $0x50] sm:$0xff] 0.0
        %281 = vst.msk [vmem:[#allocation2 + $0x58] sm:$0xff] %vm271, 0.0
        %v282 = vld [vmem:[%s237] sm:$0xff]
        %v283 = vld [vmem:[%s237 + $0x8] sm:$0xff]
        %286 = vrot.lane.b32.xlu0 %v282, 17
        %v287 = vpop.permute.xlu0 %286
        %288 = vrot.lane.b32.xlu0 %v283, 17
        %v289 = vpop.permute.xlu0 %288
        %vm290 = vcmask 138240
        %v291 = vsel %vm290, %v287, %v289
        %vm295 = vcmask 1047688
        %296 = vst.msk [vmem:[#allocation2] sm:$0xff] %vm295, %v287
        %297 = vst [vmem:[#allocation2 + $0x8] sm:$0xff] %v291
        %298 = vst.msk [vmem:[#allocation2 + $0x10] sm:$0xff] %vm290, %v289
        %v299 = vld [vmem:[%s1] sm:$0xff]
        %v300 = vld [vmem:[%s1 + $0x8] sm:$0xff]
        %v301 = vld [vmem:[%s1 + $0x10] sm:$0xff]
        %v302 = vld [vmem:[%s1 + $0x18] sm:$0xff]
        %v303 = vld [vmem:[%s2] sm:$0xff]
        %v304 = vld [vmem:[%s2 + $0x8] sm:$0xff]
        %v305 = vld [vmem:[%s2 + $0x10] sm:$0xff]
        %v306 = vld [vmem:[%s2 + $0x18] sm:$0xff]
        %v307 = vld [vmem:[#allocation2] sm:$0xff]
        %v308 = vld [vmem:[#allocation2 + $0x8] sm:$0xff]
        %v309 = vsel %vm265, 1, 0
        %v310 = vsel %vm266, 1, 0
        %vm311 = vcmp.eq.s32.totalorder %v309, 1
        %vm312 = vcmp.eq.s32.totalorder %v310, 1
        %v313 = vsel %vm311, %v307, 0.0
        %v314 = vsel %vm312, %v308, 0.0
        %315 = vst [vmem:[#allocation3] sm:$0xff] %v313
        %316 = vst [vmem:[#allocation3 + $0x8] sm:$0xff] %v314
        %v317 = vld [vmem:[#allocation2] sm:$0xff]
        %v318 = vld [vmem:[#allocation2 + $0x8] sm:$0xff]
        %v319 = vld [vmem:[#allocation2 + $0x10] sm:$0xff]
        %323 = vrot.lane.b32.xlu0 %v317, 127
        %v324 = vpop.permute.xlu0 %323
        %325 = vrot.lane.b32.xlu0 %v318, 127
        %v326 = vpop.permute.xlu0 %325
        %327 = vrot.lane.b32.xlu0 %v319, 127
        %v328 = vpop.permute.xlu0 %327
        %vm329 = vcmask 1039360
        %v330 = vsel %vm329, %v324, %v326
        %v331 = vsel %vm329, %v326, %v328
        %334 = vst [vmem:[#allocation3 + $0x10] sm:$0xff] %v330
        %335 = vst [vmem:[#allocation3 + $0x18] sm:$0xff] %v331
        %v336 = vld [vmem:[#allocation2] sm:$0xff]
        %v337 = vld [vmem:[#allocation2 + $0x8] sm:$0xff]
        %v338 = vld [vmem:[#allocation2 + $0x10] sm:$0xff]
        %v339 = vsel %vm267, 1, 0
        %v340 = vsel %vm268, 1, 0
        %vm341 = vcmp.eq.s32.totalorder %v339, 1
        %vm342 = vcmp.eq.s32.totalorder %v340, 1
        %346 = vrot.lane.b32.xlu0 %v336, 126
        %v347 = vpop.permute.xlu0 %346
        %348 = vrot.lane.b32.xlu0 %v337, 126
        %v349 = vpop.permute.xlu0 %348
        %350 = vrot.lane.b32.xlu0 %v338, 126
        %v351 = vpop.permute.xlu0 %350
        %vm352 = vcmask 1031168
        %v353 = vsel %vm352, %v347, %v349
        %v354 = vsel %vm352, %v349, %v351
        %v357 = vsel %vm341, %v353, 0.0
        %v358 = vsel %vm342, %v354, 0.0
        %359 = vst [vmem:[#allocation3 + $0x20] sm:$0xff] %v357
        %360 = vst [vmem:[#allocation3 + $0x28] sm:$0xff] %v358
        %v361 = vld [vmem:[#allocation2] sm:$0xff]
        %v362 = vld [vmem:[#allocation2 + $0x8] sm:$0xff]
        %v363 = vld [vmem:[#allocation2 + $0x10] sm:$0xff]
        %367 = vrot.lane.b32.xlu0 %v361, 112
        %v368 = vpop.permute.xlu0 %367
        %369 = vrot.lane.b32.xlu0 %v362, 112
        %v370 = vpop.permute.xlu0 %369
        %371 = vrot.lane.b32.xlu0 %v363, 112
        %v372 = vpop.permute.xlu0 %371
        %vm373 = vcmask 916480
        %v374 = vsel %vm373, %v368, %v370
        %v375 = vsel %vm373, %v370, %v372
        %v378 = vsel %vm311, %v374, 0.0
        %v379 = vsel %vm312, %v375, 0.0
        %380 = vst [vmem:[#allocation3 + $0x30] sm:$0xff] %v378
        %381 = vst [vmem:[#allocation3 + $0x38] sm:$0xff] %v379
        %v382 = vld [vmem:[#allocation2] sm:$0xff]
        %v383 = vld [vmem:[#allocation2 + $0x8] sm:$0xff]
        %v384 = vld [vmem:[#allocation2 + $0x10] sm:$0xff]
        %388 = vrot.lane.b32.xlu0 %v382, 111
        %v389 = vpop.permute.xlu0 %388
        %390 = vrot.lane.b32.xlu0 %v383, 111
        %v391 = vpop.permute.xlu0 %390
        %392 = vrot.lane.b32.xlu0 %v384, 111
        %v393 = vpop.permute.xlu0 %392
        %vm394 = vcmask 908288
        %v395 = vsel %vm394, %v389, %v391
        %v396 = vsel %vm394, %v391, %v393
        %399 = vst [vmem:[#allocation3 + $0x40] sm:$0xff] %v395
        %400 = vst [vmem:[#allocation3 + $0x48] sm:$0xff] %v396
        %v401 = vld [vmem:[#allocation2] sm:$0xff]
        %v402 = vld [vmem:[#allocation2 + $0x8] sm:$0xff]
        %v403 = vld [vmem:[#allocation2 + $0x10] sm:$0xff]
        %407 = vrot.lane.b32.xlu0 %v401, 110
        %v408 = vpop.permute.xlu0 %407
        %409 = vrot.lane.b32.xlu0 %v402, 110
        %v410 = vpop.permute.xlu0 %409
        %411 = vrot.lane.b32.xlu0 %v403, 110
        %v412 = vpop.permute.xlu0 %411
        %vm413 = vcmask 900096
        %v414 = vsel %vm413, %v408, %v410
        %v415 = vsel %vm413, %v410, %v412
        %v418 = vsel %vm341, %v414, 0.0
        %v419 = vsel %vm342, %v415, 0.0
        %420 = vst [vmem:[#allocation3 + $0x50] sm:$0xff] %v418
        %421 = vst [vmem:[#allocation3 + $0x58] sm:$0xff] %v419
        %v422 = vld [vmem:[#allocation2] sm:$0xff]
        %v423 = vld [vmem:[#allocation2 + $0x8] sm:$0xff]
        %v424 = vld [vmem:[#allocation2 + $0x10] sm:$0xff]
        %428 = vrot.lane.b32.xlu0 %v422, 96
        %v429 = vpop.permute.xlu0 %428
        %430 = vrot.lane.b32.xlu0 %v423, 96
        %v431 = vpop.permute.xlu0 %430
        %432 = vrot.lane.b32.xlu0 %v424, 96
        %v433 = vpop.permute.xlu0 %432
        %vm434 = vcmask 785408
        %v435 = vsel %vm434, %v429, %v431
        %v436 = vsel %vm434, %v431, %v433
        %v439 = vsel %vm311, %v435, 0.0
        %v440 = vsel %vm312, %v436, 0.0
        %441 = vst [vmem:[#allocation3 + $0x60] sm:$0xff] %v439
        %442 = vst [vmem:[#allocation3 + $0x68] sm:$0xff] %v440
        %v443 = vld [vmem:[#allocation2] sm:$0xff]
        %v444 = vld [vmem:[#allocation2 + $0x8] sm:$0xff]
        %v445 = vld [vmem:[#allocation2 + $0x10] sm:$0xff]
        %449 = vrot.lane.b32.xlu0 %v443, 95
        %v450 = vpop.permute.xlu0 %449
        %451 = vrot.lane.b32.xlu0 %v444, 95
        %v452 = vpop.permute.xlu0 %451
        %453 = vrot.lane.b32.xlu0 %v445, 95
        %v454 = vpop.permute.xlu0 %453
        %vm455 = vcmask 777216
        %v456 = vsel %vm455, %v450, %v452
        %v457 = vsel %vm455, %v452, %v454
        %460 = vst [vmem:[#allocation3 + $0x70] sm:$0xff] %v456
        %461 = vst [vmem:[#allocation3 + $0x78] sm:$0xff] %v457
        %v462 = vld [vmem:[#allocation2] sm:$0xff]
        %v463 = vld [vmem:[#allocation2 + $0x8] sm:$0xff]
        %v464 = vld [vmem:[#allocation2 + $0x10] sm:$0xff]
        %468 = vrot.lane.b32.xlu0 %v462, 94
        %v469 = vpop.permute.xlu0 %468
        %470 = vrot.lane.b32.xlu0 %v463, 94
        %v471 = vpop.permute.xlu0 %470
        %472 = vrot.lane.b32.xlu0 %v464, 94
        %v473 = vpop.permute.xlu0 %472
        %vm474 = vcmask 769024
        %v475 = vsel %vm474, %v469, %v471
        %v476 = vsel %vm474, %v471, %v473
        %v479 = vsel %vm341, %v475, 0.0
        %v480 = vsel %vm342, %v476, 0.0
        %481 = vst [vmem:[#allocation3 + $0x80] sm:$0xff] %v479
        %482 = vst [vmem:[#allocation3 + $0x88] sm:$0xff] %v480
        %v483 = vld [vmem:[#allocation3] sm:$0xff]
        %v484 = vld [vmem:[#allocation3 + $0x8] sm:$0xff]
        %v485 = vld [vmem:[#allocation3 + $0x10] sm:$0xff]
        %v486 = vld [vmem:[#allocation3 + $0x18] sm:$0xff]
        %v487 = vld [vmem:[#allocation3 + $0x20] sm:$0xff]
        %v488 = vld [vmem:[#allocation3 + $0x28] sm:$0xff]
        %v489 = vld [vmem:[#allocation3 + $0x30] sm:$0xff]
        %v490 = vld [vmem:[#allocation3 + $0x38] sm:$0xff]
        %v491 = vld [vmem:[#allocation3 + $0x40] sm:$0xff]
        %v492 = vld [vmem:[#allocation3 + $0x48] sm:$0xff]
        %v493 = vld [vmem:[#allocation3 + $0x50] sm:$0xff]
        %v494 = vld [vmem:[#allocation3 + $0x58] sm:$0xff]
        %v495 = vld [vmem:[#allocation3 + $0x60] sm:$0xff]
        %v496 = vld [vmem:[#allocation3 + $0x68] sm:$0xff]
        %v497 = vld [vmem:[#allocation3 + $0x70] sm:$0xff]
        %v498 = vld [vmem:[#allocation3 + $0x78] sm:$0xff]
        %v499 = vld [vmem:[#allocation3 + $0x80] sm:$0xff]
        %v500 = vld [vmem:[#allocation3 + $0x88] sm:$0xff]
        %502 = vset.pattern.permute.xlu0 0
        %503 = vperm.xlu0 %502, %v303
        %v504 = vpop.permute.xlu0 %503
        %507 = vset.pattern.permute.xlu0 0
        %508 = vperm.xlu0 %507, %v304
        %v509 = vpop.permute.xlu0 %508
        %512 = vset.pattern.permute.xlu0 0
        %513 = vperm.xlu0 %512, %v305
        %v514 = vpop.permute.xlu0 %513
        %517 = vset.pattern.permute.xlu0 0
        %518 = vperm.xlu0 %517, %v306
        %v519 = vpop.permute.xlu0 %518
        %vm521 = vcmask 588800
        %v523 = vsel %vm521, %v299, 0
        %v526 = vsel %vm521, %v300, 0
        %v529 = vsel %vm521, %v301, 0
        %v532 = vsel %vm521, %v302, 0
        %534 = vmatprep.subr.mxu0 %v484
        %535 = vmatpush1.msra.mxu0 %v483
        %536 = vmatprep.subr.mxu0 %v486
        %537 = vmatpush1.msra.mxu0 %v485
        %538 = vmatprep.subr.mxu0 %v488
        %539 = vmatpush1.msra.mxu0 %v487
        %540 = vmatprep.subr.mxu0 %v490
        %541 = vmatpush1.msra.mxu0 %v489
        %542 = vmatprep.subr.mxu0 %v492
        %543 = vmatpush1.msra.mxu0 %v491
        %544 = vmatprep.subr.mxu0 %v494
        %545 = vmatpush1.msra.mxu0 %v493
        %546 = vmatprep.subr.mxu0 %v496
        %547 = vmatpush1.msra.mxu0 %v495
        %548 = vmatprep.subr.mxu0 %v498
        %549 = vmatpush1.msra.mxu0 %v497
        %550 = vmatprep.subr.mxu0 %v500
        %551 = vmatpush1.msra.mxu0 %v499
        %552 = vmatprep.subr.mxu0 0.0
        %553 = vmatpush1.msra.mxu0 0.0
        %554 = vmatprep.subr.mxu0 0.0
        %555 = vmatpush1.msra.mxu0 0.0
        %556 = vmatprep.subr.mxu0 0.0
        %557 = vmatpush1.msra.mxu0 0.0
        %558 = vmatprep.subr.mxu0 0.0
        %559 = vmatpush1.msra.mxu0 0.0
        %560 = vmatprep.subr.mxu0 0.0
        %561 = vmatpush1.msra.mxu0 0.0
        %562 = vmatprep.subr.mxu0 0.0
        %563 = vmatpush1.msra.mxu0 0.0
        %564 = vmatprep.subr.mxu0 0.0
        %565 = vmatpush1.msra.mxu0 0.0
        %566 = vmatprep.subr.mxu0 0.0
        %567 = vmatpush1.msra.mxu0 0.0
        %568 = vmatprep.subr.mxu0 0.0
        %569 = vmatpush1.msra.mxu0 0.0
        %570 = vmatprep.subr.mxu0 0.0
        %571 = vmatpush1.msra.mxu0 0.0
        %572 = vmatprep.subr.mxu0 0.0
        %573 = vmatpush1.msra.mxu0 0.0
        %574 = vmatprep.subr.mxu0 0.0
        %575 = vmatpush1.msra.mxu0 0.0
        %576 = vmatprep.subr.mxu0 0.0
        %577 = vmatpush1.msra.mxu0 0.0
        %578 = vmatprep.subr.mxu0 0.0
        %579 = vmatpush1.msra.mxu0 0.0
        %580 = vmatprep.subr.mxu0 0.0
        %581 = vmatpush1.msra.mxu0 0.0
        %582 = vmatprep.subr.mxu0 0.0
        %583 = vmatpush1.msra.mxu0 0.0
        %584 = vmatprep.subr.mxu0 0.0
        %585 = vmatpush1.msra.mxu0 0.0
        %586 = vmatprep.subr.mxu0 0.0
        %587 = vmatpush1.msra.mxu0 0.0
        %588 = vmatprep.subr.mxu0 0.0
        %589 = vmatpush1.msra.mxu0 0.0
        %590 = vmatprep.subr.mxu0 0.0
        %591 = vmatpush1.msra.mxu0 0.0
        %592 = vmatprep.subr.mxu0 0.0
        %593 = vmatpush1.msra.mxu0 0.0
        %594 = vmatprep.subr.mxu0 0.0
        %595 = vmatpush1.msra.mxu0 0.0
        %596 = vmatprep.subr.mxu0 0.0
        %597 = vmatpush1.msra.mxu0 0.0
        %598 = vmatprep.mubr.f32.mxu0 0.0
        %599 = vmatmul.mubr.f32.gmra.mrb[0].mxu0 %v523
        %v600 = vpop.f32.mrb[0].mxu0
        %v601 = vadd.f32 %v504, %v600
        %v602 = vpop.f32.mrb[0].mxu0
        %v603 = vadd.f32 %v504, %v602
        %604 = vmatprep.mubr.f32.mxu0 0.0
        %605 = vmatmul.mubr.f32.gmra.mrb[0].mxu0 %v526
        %v606 = vpop.f32.mrb[0].mxu0
        %v607 = vadd.f32 %v509, %v606
        %v608 = vpop.f32.mrb[0].mxu0
        %v609 = vadd.f32 %v509, %v608
        %610 = vmatprep.mubr.f32.mxu0 0.0
        %611 = vmatmul.mubr.f32.gmra.mrb[0].mxu0 %v529
        %v612 = vpop.f32.mrb[0].mxu0
        %v613 = vadd.f32 %v514, %v612
        %v614 = vpop.f32.mrb[0].mxu0
        %v615 = vadd.f32 %v514, %v614
        %616 = vmatprep.mubr.f32.mxu0 0.0
        %617 = vmatmul.mubr.f32.gmra.mrb[0].mxu0 %v532
        %v618 = vpop.f32.mrb[0].mxu0
        %v619 = vadd.f32 %v519, %v618
        %v620 = vpop.f32.mrb[0].mxu0
        %v621 = vadd.f32 %v519, %v620
        %622 = vdwg.mxu0
        %vm623 = vcmp.gt.f32.partialorder %v601, 0.0
        %vm624 = vcmp.gt.f32.partialorder %v603, 0.0
        %vm625 = vcmp.gt.f32.partialorder %v607, 0.0
        %vm626 = vcmp.gt.f32.partialorder %v609, 0.0
        %vm627 = vcmp.gt.f32.partialorder %v613, 0.0
        %vm628 = vcmp.gt.f32.partialorder %v615, 0.0
        %vm629 = vcmp.gt.f32.partialorder %v619, 0.0
        %vm630 = vcmp.gt.f32.partialorder %v621, 0.0
        %v631 = vmul.f32 %v601, 0.1
        %v632 = vmul.f32 %v603, 0.1
        %v633 = vmul.f32 %v607, 0.1
        %v634 = vmul.f32 %v609, 0.1
        %v635 = vmul.f32 %v613, 0.1
        %v636 = vmul.f32 %v615, 0.1
        %v637 = vmul.f32 %v619, 0.1
        %v638 = vmul.f32 %v621, 0.1
        %v639 = vsel %vm623, %v601, %v631
        %v640 = vsel %vm624, %v603, %v632
        %v641 = vsel %vm625, %v607, %v633
        %v642 = vsel %vm626, %v609, %v634
        %v643 = vsel %vm627, %v613, %v635
        %v644 = vsel %vm628, %v615, %v636
        %v645 = vsel %vm629, %v619, %v637
        %v646 = vsel %vm630, %v621, %v638
        %655 = vrot.lane.b32.xlu0 %v639, 17
        %v656 = vpop.permute.xlu0 %655
        %657 = vrot.lane.b32.xlu0 %v640, 17
        %v658 = vpop.permute.xlu0 %657
        %659 = vrot.lane.b32.xlu0 %v641, 17
        %v660 = vpop.permute.xlu0 %659
        %661 = vrot.lane.b32.xlu0 %v642, 17
        %v662 = vpop.permute.xlu0 %661
        %663 = vrot.lane.b32.xlu0 %v643, 17
        %v664 = vpop.permute.xlu0 %663
        %665 = vrot.lane.b32.xlu0 %v644, 17
        %v666 = vpop.permute.xlu0 %665
        %667 = vrot.lane.b32.xlu0 %v645, 17
        %v668 = vpop.permute.xlu0 %667
        %669 = vrot.lane.b32.xlu0 %v646, 17
        %v670 = vpop.permute.xlu0 %669
        %v671 = vsel %vm290, %v656, %v658
        %v672 = vsel %vm290, %v660, %v662
        %v673 = vsel %vm290, %v664, %v666
        %v674 = vsel %vm290, %v668, %v670
        %687 = vst.msk [vmem:[#allocation2] sm:$0xff] %vm295, %v656
        %688 = vst [vmem:[#allocation2 + $0x8] sm:$0xff] %v671
        %689 = vst.msk [vmem:[#allocation2 + $0x10] sm:$0xff] %vm290, %v658
        %690 = vst.msk [vmem:[#allocation2 + $0x18] sm:$0xff] %vm295, %v660
        %691 = vst [vmem:[#allocation2 + $0x20] sm:$0xff] %v672
        %692 = vst.msk [vmem:[#allocation2 + $0x28] sm:$0xff] %vm290, %v662
        %693 = vst.msk [vmem:[#allocation2 + $0x30] sm:$0xff] %vm295, %v664
        %694 = vst [vmem:[#allocation2 + $0x38] sm:$0xff] %v673
        %695 = vst.msk [vmem:[#allocation2 + $0x40] sm:$0xff] %vm290, %v666
        %696 = vst.msk [vmem:[#allocation2 + $0x48] sm:$0xff] %vm295, %v668
        %697 = vst [vmem:[#allocation2 + $0x50] sm:$0xff] %v674
        %698 = vst.msk [vmem:[#allocation2 + $0x58] sm:$0xff] %vm290, %v670
        %v699 = vld [vmem:[#allocation4] sm:$0xff]
        %v700 = vld [vmem:[#allocation4 + $0x8] sm:$0xff]
        %v701 = vld [vmem:[#allocation4 + $0x10] sm:$0xff]
        %v702 = vld [vmem:[#allocation4 + $0x18] sm:$0xff]
        %v703 = vld [vmem:[#allocation4 + $0x20] sm:$0xff]
        %v704 = vld [vmem:[#allocation4 + $0x28] sm:$0xff]
        %v705 = vld [vmem:[#allocation4 + $0x30] sm:$0xff]
        %v706 = vld [vmem:[#allocation4 + $0x38] sm:$0xff]
        %v707 = vld [vmem:[#allocation4 + $0x40] sm:$0xff]
        %v708 = vld [vmem:[#allocation4 + $0x48] sm:$0xff]
        %v709 = vld [vmem:[#allocation4 + $0x50] sm:$0xff]
        %v710 = vld [vmem:[#allocation4 + $0x58] sm:$0xff]
        %v711 = vld [vmem:[%s4] sm:$0xff]
        %v712 = vld [vmem:[%s4 + $0x8] sm:$0xff]
        %v713 = vld [vmem:[%s4 + $0x10] sm:$0xff]
        %v714 = vld [vmem:[%s4 + $0x18] sm:$0xff]
        %v715 = vld [vmem:[#allocation2] sm:$0xff]
        %v716 = vld [vmem:[#allocation2 + $0x8] sm:$0xff]
        %v717 = vld [vmem:[#allocation2 + $0x18] sm:$0xff]
        %v718 = vld [vmem:[#allocation2 + $0x20] sm:$0xff]
        %v719 = vld [vmem:[#allocation2 + $0x30] sm:$0xff]
        %v720 = vld [vmem:[#allocation2 + $0x38] sm:$0xff]
        %v721 = vld [vmem:[#allocation2 + $0x48] sm:$0xff]
        %v722 = vld [vmem:[#allocation2 + $0x50] sm:$0xff]
        %v723 = vsel %vm311, %v715, 0.0
        %v724 = vsel %vm312, %v716, 0.0
        %v725 = vsel %vm311, %v717, 0.0
        %v726 = vsel %vm312, %v718, 0.0
        %v727 = vsel %vm311, %v719, 0.0
        %v728 = vsel %vm312, %v720, 0.0
        %v729 = vsel %vm311, %v721, 0.0
        %v730 = vsel %vm312, %v722, 0.0
        %731 = vst [vmem:[#allocation3] sm:$0xff] %v723
        %732 = vst [vmem:[#allocation3 + $0x8] sm:$0xff] %v724
        %733 = vst [vmem:[#allocation3 + $0x10] sm:$0xff] %v725
        %734 = vst [vmem:[#allocation3 + $0x18] sm:$0xff] %v726
        %735 = vst [vmem:[#allocation3 + $0x20] sm:$0xff] %v727
        %736 = vst [vmem:[#allocation3 + $0x28] sm:$0xff] %v728
        %737 = vst [vmem:[#allocation3 + $0x30] sm:$0xff] %v729
        %738 = vst [vmem:[#allocation3 + $0x38] sm:$0xff] %v730
        %v739 = vld [vmem:[#allocation2] sm:$0xff]
        %v740 = vld [vmem:[#allocation2 + $0x8] sm:$0xff]
        %v741 = vld [vmem:[#allocation2 + $0x10] sm:$0xff]
        %v742 = vld [vmem:[#allocation2 + $0x18] sm:$0xff]
        %v743 = vld [vmem:[#allocation2 + $0x20] sm:$0xff]
        %v744 = vld [vmem:[#allocation2 + $0x28] sm:$0xff]
        %v745 = vld [vmem:[#allocation2 + $0x30] sm:$0xff]
        %v746 = vld [vmem:[#allocation2 + $0x38] sm:$0xff]
        %v747 = vld [vmem:[#allocation2 + $0x40] sm:$0xff]
        %v748 = vld [vmem:[#allocation2 + $0x48] sm:$0xff]
        %v749 = vld [vmem:[#allocation2 + $0x50] sm:$0xff]
        %v750 = vld [vmem:[#allocation2 + $0x58] sm:$0xff]
        %763 = vrot.lane.b32.xlu0 %v739, 127
        %v764 = vpop.permute.xlu0 %763
        %765 = vrot.lane.b32.xlu0 %v740, 127
        %v766 = vpop.permute.xlu0 %765
        %767 = vrot.lane.b32.xlu0 %v741, 127
        %v768 = vpop.permute.xlu0 %767
        %769 = vrot.lane.b32.xlu0 %v742, 127
        %v770 = vpop.permute.xlu0 %769
        %771 = vrot.lane.b32.xlu0 %v743, 127
        %v772 = vpop.permute.xlu0 %771
        %773 = vrot.lane.b32.xlu0 %v744, 127
        %v774 = vpop.permute.xlu0 %773
        %775 = vrot.lane.b32.xlu0 %v745, 127
        %v776 = vpop.permute.xlu0 %775
        %777 = vrot.lane.b32.xlu0 %v746, 127
        %v778 = vpop.permute.xlu0 %777
        %779 = vrot.lane.b32.xlu0 %v747, 127
        %v780 = vpop.permute.xlu0 %779
        %781 = vrot.lane.b32.xlu0 %v748, 127
        %v782 = vpop.permute.xlu0 %781
        %783 = vrot.lane.b32.xlu0 %v749, 127
        %v784 = vpop.permute.xlu0 %783
        %785 = vrot.lane.b32.xlu0 %v750, 127
        %v786 = vpop.permute.xlu0 %785
        %v787 = vsel %vm329, %v764, %v766
        %v788 = vsel %vm329, %v766, %v768
        %v789 = vsel %vm329, %v770, %v772
        %v790 = vsel %vm329, %v772, %v774
        %v791 = vsel %vm329, %v776, %v778
        %v792 = vsel %vm329, %v778, %v780
        %v793 = vsel %vm329, %v782, %v784
        %v794 = vsel %vm329, %v784, %v786
        %803 = vst [vmem:[#allocation3 + $0x40] sm:$0xff] %v787
        %804 = vst [vmem:[#allocation3 + $0x48] sm:$0xff] %v788
        %805 = vst [vmem:[#allocation3 + $0x50] sm:$0xff] %v789
        %806 = vst [vmem:[#allocation3 + $0x58] sm:$0xff] %v790
        %807 = vst [vmem:[#allocation3 + $0x60] sm:$0xff] %v791
        %808 = vst [vmem:[#allocation3 + $0x68] sm:$0xff] %v792
        %809 = vst [vmem:[#allocation3 + $0x70] sm:$0xff] %v793
        %810 = vst [vmem:[#allocation3 + $0x78] sm:$0xff] %v794
        %v811 = vld [vmem:[#allocation2] sm:$0xff]
        %v812 = vld [vmem:[#allocation2 + $0x8] sm:$0xff]
        %v813 = vld [vmem:[#allocation2 + $0x10] sm:$0xff]
        %v814 = vld [vmem:[#allocation2 + $0x18] sm:$0xff]
        %v815 = vld [vmem:[#allocation2 + $0x20] sm:$0xff]
        %v816 = vld [vmem:[#allocation2 + $0x28] sm:$0xff]
        %v817 = vld [vmem:[#allocation2 + $0x30] sm:$0xff]
        %v818 = vld [vmem:[#allocation2 + $0x38] sm:$0xff]
        %v819 = vld [vmem:[#allocation2 + $0x40] sm:$0xff]
        %v820 = vld [vmem:[#allocation2 + $0x48] sm:$0xff]
        %v821 = vld [vmem:[#allocation2 + $0x50] sm:$0xff]
        %v822 = vld [vmem:[#allocation2 + $0x58] sm:$0xff]
        %835 = vrot.lane.b32.xlu0 %v811, 126
        %v836 = vpop.permute.xlu0 %835
        %837 = vrot.lane.b32.xlu0 %v812, 126
        %v838 = vpop.permute.xlu0 %837
        %839 = vrot.lane.b32.xlu0 %v813, 126
        %v840 = vpop.permute.xlu0 %839
        %841 = vrot.lane.b32.xlu0 %v814, 126
        %v842 = vpop.permute.xlu0 %841
        %843 = vrot.lane.b32.xlu0 %v815, 126
        %v844 = vpop.permute.xlu0 %843
        %845 = vrot.lane.b32.xlu0 %v816, 126
        %v846 = vpop.permute.xlu0 %845
        %847 = vrot.lane.b32.xlu0 %v817, 126
        %v848 = vpop.permute.xlu0 %847
        %849 = vrot.lane.b32.xlu0 %v818, 126
        %v850 = vpop.permute.xlu0 %849
        %851 = vrot.lane.b32.xlu0 %v819, 126
        %v852 = vpop.permute.xlu0 %851
        %853 = vrot.lane.b32.xlu0 %v820, 126
        %v854 = vpop.permute.xlu0 %853
        %855 = vrot.lane.b32.xlu0 %v821, 126
        %v856 = vpop.permute.xlu0 %855
        %857 = vrot.lane.b32.xlu0 %v822, 126
        %v858 = vpop.permute.xlu0 %857
        %v859 = vsel %vm352, %v836, %v838
        %v860 = vsel %vm352, %v838, %v840
        %v861 = vsel %vm352, %v842, %v844
        %v862 = vsel %vm352, %v844, %v846
        %v863 = vsel %vm352, %v848, %v850
        %v864 = vsel %vm352, %v850, %v852
        %v865 = vsel %vm352, %v854, %v856
        %v866 = vsel %vm352, %v856, %v858
        %v875 = vsel %vm341, %v859, 0.0
        %v876 = vsel %vm342, %v860, 0.0
        %v877 = vsel %vm341, %v861, 0.0
        %v878 = vsel %vm342, %v862, 0.0
        %v879 = vsel %vm341, %v863, 0.0
        %v880 = vsel %vm342, %v864, 0.0
        %v881 = vsel %vm341, %v865, 0.0
        %v882 = vsel %vm342, %v866, 0.0
        %883 = vst [vmem:[#allocation3 + $0x80] sm:$0xff] %v875
        %884 = vst [vmem:[#allocation3 + $0x88] sm:$0xff] %v876
        %885 = vst [vmem:[#allocation3 + $0x90] sm:$0xff] %v877
        %886 = vst [vmem:[#allocation3 + $0x98] sm:$0xff] %v878
        %887 = vst [vmem:[#allocation3 + $0xa0] sm:$0xff] %v879
        %888 = vst [vmem:[#allocation3 + $0xa8] sm:$0xff] %v880
        %889 = vst [vmem:[#allocation3 + $0xb0] sm:$0xff] %v881
        %890 = vst [vmem:[#allocation3 + $0xb8] sm:$0xff] %v882
        %v891 = vld [vmem:[#allocation2] sm:$0xff]
        %v892 = vld [vmem:[#allocation2 + $0x8] sm:$0xff]
        %v893 = vld [vmem:[#allocation2 + $0x10] sm:$0xff]
        %v894 = vld [vmem:[#allocation2 + $0x18] sm:$0xff]
        %v895 = vld [vmem:[#allocation2 + $0x20] sm:$0xff]
        %v896 = vld [vmem:[#allocation2 + $0x28] sm:$0xff]
        %v897 = vld [vmem:[#allocation2 + $0x30] sm:$0xff]
        %v898 = vld [vmem:[#allocation2 + $0x38] sm:$0xff]
        %v899 = vld [vmem:[#allocation2 + $0x40] sm:$0xff]
        %v900 = vld [vmem:[#allocation2 + $0x48] sm:$0xff]
        %v901 = vld [vmem:[#allocation2 + $0x50] sm:$0xff]
        %v902 = vld [vmem:[#allocation2 + $0x58] sm:$0xff]
        %915 = vrot.lane.b32.xlu0 %v891, 112
        %v916 = vpop.permute.xlu0 %915
        %917 = vrot.lane.b32.xlu0 %v892, 112
        %v918 = vpop.permute.xlu0 %917
        %919 = vrot.lane.b32.xlu0 %v893, 112
        %v920 = vpop.permute.xlu0 %919
        %921 = vrot.lane.b32.xlu0 %v894, 112
        %v922 = vpop.permute.xlu0 %921
        %923 = vrot.lane.b32.xlu0 %v895, 112
        %v924 = vpop.permute.xlu0 %923
        %925 = vrot.lane.b32.xlu0 %v896, 112
        %v926 = vpop.permute.xlu0 %925
        %927 = vrot.lane.b32.xlu0 %v897, 112
        %v928 = vpop.permute.xlu0 %927
        %929 = vrot.lane.b32.xlu0 %v898, 112
        %v930 = vpop.permute.xlu0 %929
        %931 = vrot.lane.b32.xlu0 %v899, 112
        %v932 = vpop.permute.xlu0 %931
        %933 = vrot.lane.b32.xlu0 %v900, 112
        %v934 = vpop.permute.xlu0 %933
        %935 = vrot.lane.b32.xlu0 %v901, 112
        %v936 = vpop.permute.xlu0 %935
        %937 = vrot.lane.b32.xlu0 %v902, 112
        %v938 = vpop.permute.xlu0 %937
        %v939 = vsel %vm373, %v916, %v918
        %v940 = vsel %vm373, %v918, %v920
        %v941 = vsel %vm373, %v922, %v924
        %v942 = vsel %vm373, %v924, %v926
        %v943 = vsel %vm373, %v928, %v930
        %v944 = vsel %vm373, %v930, %v932
        %v945 = vsel %vm373, %v934, %v936
        %v946 = vsel %vm373, %v936, %v938
        %v955 = vsel %vm311, %v939, 0.0
        %v956 = vsel %vm312, %v940, 0.0
        %v957 = vsel %vm311, %v941, 0.0
        %v958 = vsel %vm312, %v942, 0.0
        %v959 = vsel %vm311, %v943, 0.0
        %v960 = vsel %vm312, %v944, 0.0
        %v961 = vsel %vm311, %v945, 0.0
        %v962 = vsel %vm312, %v946, 0.0
        %963 = vst [vmem:[#allocation3 + $0xc0] sm:$0xff] %v955
        %964 = vst [vmem:[#allocation3 + $0xc8] sm:$0xff] %v956
        %965 = vst [vmem:[#allocation3 + $0xd0] sm:$0xff] %v957
        %966 = vst [vmem:[#allocation3 + $0xd8] sm:$0xff] %v958
        %967 = vst [vmem:[#allocation3 + $0xe0] sm:$0xff] %v959
        %968 = vst [vmem:[#allocation3 + $0xe8] sm:$0xff] %v960
        %969 = vst [vmem:[#allocation3 + $0xf0] sm:$0xff] %v961
        %970 = vst [vmem:[#allocation3 + $0xf8] sm:$0xff] %v962
        %v971 = vld [vmem:[#allocation2] sm:$0xff]
        %v972 = vld [vmem:[#allocation2 + $0x8] sm:$0xff]
        %v973 = vld [vmem:[#allocation2 + $0x10] sm:$0xff]
        %v974 = vld [vmem:[#allocation2 + $0x18] sm:$0xff]
        %v975 = vld [vmem:[#allocation2 + $0x20] sm:$0xff]
        %v976 = vld [vmem:[#allocation2 + $0x28] sm:$0xff]
        %v977 = vld [vmem:[#allocation2 + $0x30] sm:$0xff]
        %v978 = vld [vmem:[#allocation2 + $0x38] sm:$0xff]
        %v979 = vld [vmem:[#allocation2 + $0x40] sm:$0xff]
        %v980 = vld [vmem:[#allocation2 + $0x48] sm:$0xff]
        %v981 = vld [vmem:[#allocation2 + $0x50] sm:$0xff]
        %v982 = vld [vmem:[#allocation2 + $0x58] sm:$0xff]
        %995 = vrot.lane.b32.xlu0 %v971, 111
        %v996 = vpop.permute.xlu0 %995
        %997 = vrot.lane.b32.xlu0 %v972, 111
        %v998 = vpop.permute.xlu0 %997
        %999 = vrot.lane.b32.xlu0 %v973, 111
        %v1000 = vpop.permute.xlu0 %999
        %1001 = vrot.lane.b32.xlu0 %v974, 111
        %v1002 = vpop.permute.xlu0 %1001
        %1003 = vrot.lane.b32.xlu0 %v975, 111
        %v1004 = vpop.permute.xlu0 %1003
        %1005 = vrot.lane.b32.xlu0 %v976, 111
        %v1006 = vpop.permute.xlu0 %1005
        %1007 = vrot.lane.b32.xlu0 %v977, 111
        %v1008 = vpop.permute.xlu0 %1007
        %1009 = vrot.lane.b32.xlu0 %v978, 111
        %v1010 = vpop.permute.xlu0 %1009
        %1011 = vrot.lane.b32.xlu0 %v979, 111
        %v1012 = vpop.permute.xlu0 %1011
        %1013 = vrot.lane.b32.xlu0 %v980, 111
        %v1014 = vpop.permute.xlu0 %1013
        %1015 = vrot.lane.b32.xlu0 %v981, 111
        %v1016 = vpop.permute.xlu0 %1015
        %1017 = vrot.lane.b32.xlu0 %v982, 111
        %v1018 = vpop.permute.xlu0 %1017
        %v1019 = vsel %vm394, %v996, %v998
        %v1020 = vsel %vm394, %v998, %v1000
        %v1021 = vsel %vm394, %v1002, %v1004
        %v1022 = vsel %vm394, %v1004, %v1006
        %v1023 = vsel %vm394, %v1008, %v1010
        %v1024 = vsel %vm394, %v1010, %v1012
        %v1025 = vsel %vm394, %v1014, %v1016
        %v1026 = vsel %vm394, %v1016, %v1018
        %1035 = vst [vmem:[#allocation3 + $0x100] sm:$0xff] %v1019
        %1036 = vst [vmem:[#allocation3 + $0x108] sm:$0xff] %v1020
        %1037 = vst [vmem:[#allocation3 + $0x110] sm:$0xff] %v1021
        %1038 = vst [vmem:[#allocation3 + $0x118] sm:$0xff] %v1022
        %1039 = vst [vmem:[#allocation3 + $0x120] sm:$0xff] %v1023
        %1040 = vst [vmem:[#allocation3 + $0x128] sm:$0xff] %v1024
        %1041 = vst [vmem:[#allocation3 + $0x130] sm:$0xff] %v1025
        %1042 = vst [vmem:[#allocation3 + $0x138] sm:$0xff] %v1026
        %v1043 = vld [vmem:[#allocation2] sm:$0xff]
        %v1044 = vld [vmem:[#allocation2 + $0x8] sm:$0xff]
        %v1045 = vld [vmem:[#allocation2 + $0x10] sm:$0xff]
        %v1046 = vld [vmem:[#allocation2 + $0x18] sm:$0xff]
        %v1047 = vld [vmem:[#allocation2 + $0x20] sm:$0xff]
        %v1048 = vld [vmem:[#allocation2 + $0x28] sm:$0xff]
        %v1049 = vld [vmem:[#allocation2 + $0x30] sm:$0xff]
        %v1050 = vld [vmem:[#allocation2 + $0x38] sm:$0xff]
        %v1051 = vld [vmem:[#allocation2 + $0x40] sm:$0xff]
        %v1052 = vld [vmem:[#allocation2 + $0x48] sm:$0xff]
        %v1053 = vld [vmem:[#allocation2 + $0x50] sm:$0xff]
        %v1054 = vld [vmem:[#allocation2 + $0x58] sm:$0xff]
        %1067 = vrot.lane.b32.xlu0 %v1043, 110
        %v1068 = vpop.permute.xlu0 %1067
        %1069 = vrot.lane.b32.xlu0 %v1044, 110
        %v1070 = vpop.permute.xlu0 %1069
        %1071 = vrot.lane.b32.xlu0 %v1045, 110
        %v1072 = vpop.permute.xlu0 %1071
        %1073 = vrot.lane.b32.xlu0 %v1046, 110
        %v1074 = vpop.permute.xlu0 %1073
        %1075 = vrot.lane.b32.xlu0 %v1047, 110
        %v1076 = vpop.permute.xlu0 %1075
        %1077 = vrot.lane.b32.xlu0 %v1048, 110
        %v1078 = vpop.permute.xlu0 %1077
        %1079 = vrot.lane.b32.xlu0 %v1049, 110
        %v1080 = vpop.permute.xlu0 %1079
        %1081 = vrot.lane.b32.xlu0 %v1050, 110
        %v1082 = vpop.permute.xlu0 %1081
        %1083 = vrot.lane.b32.xlu0 %v1051, 110
        %v1084 = vpop.permute.xlu0 %1083
        %1085 = vrot.lane.b32.xlu0 %v1052, 110
        %v1086 = vpop.permute.xlu0 %1085
        %1087 = vrot.lane.b32.xlu0 %v1053, 110
        %v1088 = vpop.permute.xlu0 %1087
        %1089 = vrot.lane.b32.xlu0 %v1054, 110
        %v1090 = vpop.permute.xlu0 %1089
        %v1091 = vsel %vm413, %v1068, %v1070
        %v1092 = vsel %vm413, %v1070, %v1072
        %v1093 = vsel %vm413, %v1074, %v1076
        %v1094 = vsel %vm413, %v1076, %v1078
        %v1095 = vsel %vm413, %v1080, %v1082
        %v1096 = vsel %vm413, %v1082, %v1084
        %v1097 = vsel %vm413, %v1086, %v1088
        %v1098 = vsel %vm413, %v1088, %v1090
        %v1107 = vsel %vm341, %v1091, 0.0
        %v1108 = vsel %vm342, %v1092, 0.0
        %v1109 = vsel %vm341, %v1093, 0.0
        %v1110 = vsel %vm342, %v1094, 0.0
        %v1111 = vsel %vm341, %v1095, 0.0
        %v1112 = vsel %vm342, %v1096, 0.0
        %v1113 = vsel %vm341, %v1097, 0.0
        %v1114 = vsel %vm342, %v1098, 0.0
        %1115 = vst [vmem:[#allocation3 + $0x140] sm:$0xff] %v1107
        %1116 = vst [vmem:[#allocation3 + $0x148] sm:$0xff] %v1108
        %1117 = vst [vmem:[#allocation3 + $0x150] sm:$0xff] %v1109
        %1118 = vst [vmem:[#allocation3 + $0x158] sm:$0xff] %v1110
        %1119 = vst [vmem:[#allocation3 + $0x160] sm:$0xff] %v1111
        %1120 = vst [vmem:[#allocation3 + $0x168] sm:$0xff] %v1112
        %1121 = vst [vmem:[#allocation3 + $0x170] sm:$0xff] %v1113
        %1122 = vst [vmem:[#allocation3 + $0x178] sm:$0xff] %v1114
        %v1123 = vld [vmem:[#allocation2] sm:$0xff]
        %v1124 = vld [vmem:[#allocation2 + $0x8] sm:$0xff]
        %v1125 = vld [vmem:[#allocation2 + $0x10] sm:$0xff]
        %v1126 = vld [vmem:[#allocation2 + $0x18] sm:$0xff]
        %v1127 = vld [vmem:[#allocation2 + $0x20] sm:$0xff]
        %v1128 = vld [vmem:[#allocation2 + $0x28] sm:$0xff]
        %v1129 = vld [vmem:[#allocation2 + $0x30] sm:$0xff]
        %v1130 = vld [vmem:[#allocation2 + $0x38] sm:$0xff]
        %v1131 = vld [vmem:[#allocation2 + $0x40] sm:$0xff]
        %v1132 = vld [vmem:[#allocation2 + $0x48] sm:$0xff]
        %v1133 = vld [vmem:[#allocation2 + $0x50] sm:$0xff]
        %v1134 = vld [vmem:[#allocation2 + $0x58] sm:$0xff]
        %1147 = vrot.lane.b32.xlu0 %v1123, 96
        %v1148 = vpop.permute.xlu0 %1147
        %1149 = vrot.lane.b32.xlu0 %v1124, 96
        %v1150 = vpop.permute.xlu0 %1149
        %1151 = vrot.lane.b32.xlu0 %v1125, 96
        %v1152 = vpop.permute.xlu0 %1151
        %1153 = vrot.lane.b32.xlu0 %v1126, 96
        %v1154 = vpop.permute.xlu0 %1153
        %1155 = vrot.lane.b32.xlu0 %v1127, 96
        %v1156 = vpop.permute.xlu0 %1155
        %1157 = vrot.lane.b32.xlu0 %v1128, 96
        %v1158 = vpop.permute.xlu0 %1157
        %1159 = vrot.lane.b32.xlu0 %v1129, 96
        %v1160 = vpop.permute.xlu0 %1159
        %1161 = vrot.lane.b32.xlu0 %v1130, 96
        %v1162 = vpop.permute.xlu0 %1161
        %1163 = vrot.lane.b32.xlu0 %v1131, 96
        %v1164 = vpop.permute.xlu0 %1163
        %1165 = vrot.lane.b32.xlu0 %v1132, 96
        %v1166 = vpop.permute.xlu0 %1165
        %1167 = vrot.lane.b32.xlu0 %v1133, 96
        %v1168 = vpop.permute.xlu0 %1167
        %1169 = vrot.lane.b32.xlu0 %v1134, 96
        %v1170 = vpop.permute.xlu0 %1169
        %v1171 = vsel %vm434, %v1148, %v1150
        %v1172 = vsel %vm434, %v1150, %v1152
        %v1173 = vsel %vm434, %v1154, %v1156
        %v1174 = vsel %vm434, %v1156, %v1158
        %v1175 = vsel %vm434, %v1160, %v1162
        %v1176 = vsel %vm434, %v1162, %v1164
        %v1177 = vsel %vm434, %v1166, %v1168
        %v1178 = vsel %vm434, %v1168, %v1170
        %v1187 = vsel %vm311, %v1171, 0.0
        %v1188 = vsel %vm312, %v1172, 0.0
        %v1189 = vsel %vm311, %v1173, 0.0
        %v1190 = vsel %vm312, %v1174, 0.0
        %v1191 = vsel %vm311, %v1175, 0.0
        %v1192 = vsel %vm312, %v1176, 0.0
        %v1193 = vsel %vm311, %v1177, 0.0
        %v1194 = vsel %vm312, %v1178, 0.0
        %1195 = vst [vmem:[#allocation3 + $0x180] sm:$0xff] %v1187
        %1196 = vst [vmem:[#allocation3 + $0x188] sm:$0xff] %v1188
        %1197 = vst [vmem:[#allocation3 + $0x190] sm:$0xff] %v1189
        %1198 = vst [vmem:[#allocation3 + $0x198] sm:$0xff] %v1190
        %1199 = vst [vmem:[#allocation3 + $0x1a0] sm:$0xff] %v1191
        %1200 = vst [vmem:[#allocation3 + $0x1a8] sm:$0xff] %v1192
        %1201 = vst [vmem:[#allocation3 + $0x1b0] sm:$0xff] %v1193
        %1202 = vst [vmem:[#allocation3 + $0x1b8] sm:$0xff] %v1194
        %v1203 = vld [vmem:[#allocation2] sm:$0xff]
        %v1204 = vld [vmem:[#allocation2 + $0x8] sm:$0xff]
        %v1205 = vld [vmem:[#allocation2 + $0x10] sm:$0xff]
        %v1206 = vld [vmem:[#allocation2 + $0x18] sm:$0xff]
        %v1207 = vld [vmem:[#allocation2 + $0x20] sm:$0xff]
        %v1208 = vld [vmem:[#allocation2 + $0x28] sm:$0xff]
        %v1209 = vld [vmem:[#allocation2 + $0x30] sm:$0xff]
        %v1210 = vld [vmem:[#allocation2 + $0x38] sm:$0xff]
        %v1211 = vld [vmem:[#allocation2 + $0x40] sm:$0xff]
        %v1212 = vld [vmem:[#allocation2 + $0x48] sm:$0xff]
        %v1213 = vld [vmem:[#allocation2 + $0x50] sm:$0xff]
        %v1214 = vld [vmem:[#allocation2 + $0x58] sm:$0xff]
        %1227 = vrot.lane.b32.xlu0 %v1203, 95
        %v1228 = vpop.permute.xlu0 %1227
        %1229 = vrot.lane.b32.xlu0 %v1204, 95
        %v1230 = vpop.permute.xlu0 %1229
        %1231 = vrot.lane.b32.xlu0 %v1205, 95
        %v1232 = vpop.permute.xlu0 %1231
        %1233 = vrot.lane.b32.xlu0 %v1206, 95
        %v1234 = vpop.permute.xlu0 %1233
        %1235 = vrot.lane.b32.xlu0 %v1207, 95
        %v1236 = vpop.permute.xlu0 %1235
        %1237 = vrot.lane.b32.xlu0 %v1208, 95
        %v1238 = vpop.permute.xlu0 %1237
        %1239 = vrot.lane.b32.xlu0 %v1209, 95
        %v1240 = vpop.permute.xlu0 %1239
        %1241 = vrot.lane.b32.xlu0 %v1210, 95
        %v1242 = vpop.permute.xlu0 %1241
        %1243 = vrot.lane.b32.xlu0 %v1211, 95
        %v1244 = vpop.permute.xlu0 %1243
        %1245 = vrot.lane.b32.xlu0 %v1212, 95
        %v1246 = vpop.permute.xlu0 %1245
        %1247 = vrot.lane.b32.xlu0 %v1213, 95
        %v1248 = vpop.permute.xlu0 %1247
        %1249 = vrot.lane.b32.xlu0 %v1214, 95
        %v1250 = vpop.permute.xlu0 %1249
        %v1251 = vsel %vm455, %v1228, %v1230
        %v1252 = vsel %vm455, %v1230, %v1232
        %v1253 = vsel %vm455, %v1234, %v1236
        %v1254 = vsel %vm455, %v1236, %v1238
        %v1255 = vsel %vm455, %v1240, %v1242
        %v1256 = vsel %vm455, %v1242, %v1244
        %v1257 = vsel %vm455, %v1246, %v1248
        %v1258 = vsel %vm455, %v1248, %v1250
        %1267 = vst [vmem:[#allocation3 + $0x1c0] sm:$0xff] %v1251
        %1268 = vst [vmem:[#allocation3 + $0x1c8] sm:$0xff] %v1252
        %1269 = vst [vmem:[#allocation3 + $0x1d0] sm:$0xff] %v1253
        %1270 = vst [vmem:[#allocation3 + $0x1d8] sm:$0xff] %v1254
        %1271 = vst [vmem:[#allocation3 + $0x1e0] sm:$0xff] %v1255
        %1272 = vst [vmem:[#allocation3 + $0x1e8] sm:$0xff] %v1256
        %1273 = vst [vmem:[#allocation3 + $0x1f0] sm:$0xff] %v1257
        %1274 = vst [vmem:[#allocation3 + $0x1f8] sm:$0xff] %v1258
        %v1275 = vld [vmem:[#allocation2] sm:$0xff]
        %v1276 = vld [vmem:[#allocation2 + $0x8] sm:$0xff]
        %v1277 = vld [vmem:[#allocation2 + $0x10] sm:$0xff]
        %v1278 = vld [vmem:[#allocation2 + $0x18] sm:$0xff]
        %v1279 = vld [vmem:[#allocation2 + $0x20] sm:$0xff]
        %v1280 = vld [vmem:[#allocation2 + $0x28] sm:$0xff]
        %v1281 = vld [vmem:[#allocation2 + $0x30] sm:$0xff]
        %v1282 = vld [vmem:[#allocation2 + $0x38] sm:$0xff]
        %v1283 = vld [vmem:[#allocation2 + $0x40] sm:$0xff]
        %v1284 = vld [vmem:[#allocation2 + $0x48] sm:$0xff]
        %v1285 = vld [vmem:[#allocation2 + $0x50] sm:$0xff]
        %v1286 = vld [vmem:[#allocation2 + $0x58] sm:$0xff]
        %1299 = vrot.lane.b32.xlu0 %v1275, 94
        %v1300 = vpop.permute.xlu0 %1299
        %1301 = vrot.lane.b32.xlu0 %v1276, 94
        %v1302 = vpop.permute.xlu0 %1301
        %1303 = vrot.lane.b32.xlu0 %v1277, 94
        %v1304 = vpop.permute.xlu0 %1303
        %1305 = vrot.lane.b32.xlu0 %v1278, 94
        %v1306 = vpop.permute.xlu0 %1305
        %1307 = vrot.lane.b32.xlu0 %v1279, 94
        %v1308 = vpop.permute.xlu0 %1307
        %1309 = vrot.lane.b32.xlu0 %v1280, 94
        %v1310 = vpop.permute.xlu0 %1309
        %1311 = vrot.lane.b32.xlu0 %v1281, 94
        %v1312 = vpop.permute.xlu0 %1311
        %1313 = vrot.lane.b32.xlu0 %v1282, 94
        %v1314 = vpop.permute.xlu0 %1313
        %1315 = vrot.lane.b32.xlu0 %v1283, 94
        %v1316 = vpop.permute.xlu0 %1315
        %1317 = vrot.lane.b32.xlu0 %v1284, 94
        %v1318 = vpop.permute.xlu0 %1317
        %1319 = vrot.lane.b32.xlu0 %v1285, 94
        %v1320 = vpop.permute.xlu0 %1319
        %1321 = vrot.lane.b32.xlu0 %v1286, 94
        %v1322 = vpop.permute.xlu0 %1321
        %v1323 = vsel %vm474, %v1300, %v1302
        %v1324 = vsel %vm474, %v1302, %v1304
        %v1325 = vsel %vm474, %v1306, %v1308
        %v1326 = vsel %vm474, %v1308, %v1310
        %v1327 = vsel %vm474, %v1312, %v1314
        %v1328 = vsel %vm474, %v1314, %v1316
        %v1329 = vsel %vm474, %v1318, %v1320
        %v1330 = vsel %vm474, %v1320, %v1322
        %v1339 = vsel %vm341, %v1323, 0.0
        %v1340 = vsel %vm342, %v1324, 0.0
        %v1341 = vsel %vm341, %v1325, 0.0
        %v1342 = vsel %vm342, %v1326, 0.0
        %v1343 = vsel %vm341, %v1327, 0.0
        %v1344 = vsel %vm342, %v1328, 0.0
        %v1345 = vsel %vm341, %v1329, 0.0
        %v1346 = vsel %vm342, %v1330, 0.0
        %1347 = vst [vmem:[#allocation3 + $0x200] sm:$0xff] %v1339
        %1348 = vst [vmem:[#allocation3 + $0x208] sm:$0xff] %v1340
        %1349 = vst [vmem:[#allocation3 + $0x210] sm:$0xff] %v1341
        %1350 = vst [vmem:[#allocation3 + $0x218] sm:$0xff] %v1342
        %1351 = vst [vmem:[#allocation3 + $0x220] sm:$0xff] %v1343
        %1352 = vst [vmem:[#allocation3 + $0x228] sm:$0xff] %v1344
        %1353 = vst [vmem:[#allocation3 + $0x230] sm:$0xff] %v1345
        %1354 = vst [vmem:[#allocation3 + $0x238] sm:$0xff] %v1346
        %v1355 = vld [vmem:[#allocation3] sm:$0xff]
        %v1356 = vld [vmem:[#allocation3 + $0x8] sm:$0xff]
        %v1357 = vld [vmem:[#allocation3 + $0x10] sm:$0xff]
        %v1358 = vld [vmem:[#allocation3 + $0x18] sm:$0xff]
        %v1359 = vld [vmem:[#allocation3 + $0x20] sm:$0xff]
        %v1360 = vld [vmem:[#allocation3 + $0x28] sm:$0xff]
        %v1361 = vld [vmem:[#allocation3 + $0x30] sm:$0xff]
        %v1362 = vld [vmem:[#allocation3 + $0x38] sm:$0xff]
        %v1363 = vld [vmem:[#allocation3 + $0x40] sm:$0xff]
        %v1364 = vld [vmem:[#allocation3 + $0x48] sm:$0xff]
        %v1365 = vld [vmem:[#allocation3 + $0x50] sm:$0xff]
        %v1366 = vld [vmem:[#allocation3 + $0x58] sm:$0xff]
        %v1367 = vld [vmem:[#allocation3 + $0x60] sm:$0xff]
        %v1368 = vld [vmem:[#allocation3 + $0x68] sm:$0xff]
        %v1369 = vld [vmem:[#allocation3 + $0x70] sm:$0xff]
        %v1370 = vld [vmem:[#allocation3 + $0x78] sm:$0xff]
        %v1371 = vld [vmem:[#allocation3 + $0x80] sm:$0xff]
        %v1372 = vld [vmem:[#allocation3 + $0x88] sm:$0xff]
        %v1373 = vld [vmem:[#allocation3 + $0x90] sm:$0xff]
        %v1374 = vld [vmem:[#allocation3 + $0x98] sm:$0xff]
        %v1375 = vld [vmem:[#allocation3 + $0xa0] sm:$0xff]
        %v1376 = vld [vmem:[#allocation3 + $0xa8] sm:$0xff]
        %v1377 = vld [vmem:[#allocation3 + $0xb0] sm:$0xff]
        %v1378 = vld [vmem:[#allocation3 + $0xb8] sm:$0xff]
        %v1379 = vld [vmem:[#allocation3 + $0xc0] sm:$0xff]
        %v1380 = vld [vmem:[#allocation3 + $0xc8] sm:$0xff]
        %v1381 = vld [vmem:[#allocation3 + $0xd0] sm:$0xff]
        %v1382 = vld [vmem:[#allocation3 + $0xd8] sm:$0xff]
        %v1383 = vld [vmem:[#allocation3 + $0xe0] sm:$0xff]
        %v1384 = vld [vmem:[#allocation3 + $0xe8] sm:$0xff]
        %v1385 = vld [vmem:[#allocation3 + $0xf0] sm:$0xff]
        %v1386 = vld [vmem:[#allocation3 + $0xf8] sm:$0xff]
        %v1387 = vld [vmem:[#allocation3 + $0x100] sm:$0xff]
        %v1388 = vld [vmem:[#allocation3 + $0x108] sm:$0xff]
        %v1389 = vld [vmem:[#allocation3 + $0x110] sm:$0xff]
        %v1390 = vld [vmem:[#allocation3 + $0x118] sm:$0xff]
        %v1391 = vld [vmem:[#allocation3 + $0x120] sm:$0xff]
        %v1392 = vld [vmem:[#allocation3 + $0x128] sm:$0xff]
        %v1393 = vld [vmem:[#allocation3 + $0x130] sm:$0xff]
        %v1394 = vld [vmem:[#allocation3 + $0x138] sm:$0xff]
        %v1395 = vld [vmem:[#allocation3 + $0x140] sm:$0xff]
        %v1396 = vld [vmem:[#allocation3 + $0x148] sm:$0xff]
        %v1397 = vld [vmem:[#allocation3 + $0x150] sm:$0xff]
        %v1398 = vld [vmem:[#allocation3 + $0x158] sm:$0xff]
        %v1399 = vld [vmem:[#allocation3 + $0x160] sm:$0xff]
        %v1400 = vld [vmem:[#allocation3 + $0x168] sm:$0xff]
        %v1401 = vld [vmem:[#allocation3 + $0x170] sm:$0xff]
        %v1402 = vld [vmem:[#allocation3 + $0x178] sm:$0xff]
        %v1403 = vld [vmem:[#allocation3 + $0x180] sm:$0xff]
        %v1404 = vld [vmem:[#allocation3 + $0x188] sm:$0xff]
        %v1405 = vld [vmem:[#allocation3 + $0x190] sm:$0xff]
        %v1406 = vld [vmem:[#allocation3 + $0x198] sm:$0xff]
        %v1407 = vld [vmem:[#allocation3 + $0x1a0] sm:$0xff]
        %v1408 = vld [vmem:[#allocation3 + $0x1a8] sm:$0xff]
        %v1409 = vld [vmem:[#allocation3 + $0x1b0] sm:$0xff]
        %v1410 = vld [vmem:[#allocation3 + $0x1b8] sm:$0xff]
        %v1411 = vld [vmem:[#allocation3 + $0x1c0] sm:$0xff]
        %v1412 = vld [vmem:[#allocation3 + $0x1c8] sm:$0xff]
        %v1413 = vld [vmem:[#allocation3 + $0x1d0] sm:$0xff]
        %v1414 = vld [vmem:[#allocation3 + $0x1d8] sm:$0xff]
        %v1415 = vld [vmem:[#allocation3 + $0x1e0] sm:$0xff]
        %v1416 = vld [vmem:[#allocation3 + $0x1e8] sm:$0xff]
        %v1417 = vld [vmem:[#allocation3 + $0x1f0] sm:$0xff]
        %v1418 = vld [vmem:[#allocation3 + $0x1f8] sm:$0xff]
        %v1419 = vld [vmem:[#allocation3 + $0x200] sm:$0xff]
        %v1420 = vld [vmem:[#allocation3 + $0x208] sm:$0xff]
        %v1421 = vld [vmem:[#allocation3 + $0x210] sm:$0xff]
        %v1422 = vld [vmem:[#allocation3 + $0x218] sm:$0xff]
        %v1423 = vld [vmem:[#allocation3 + $0x220] sm:$0xff]
        %v1424 = vld [vmem:[#allocation3 + $0x228] sm:$0xff]
        %v1425 = vld [vmem:[#allocation3 + $0x230] sm:$0xff]
        %v1426 = vld [vmem:[#allocation3 + $0x238] sm:$0xff]
        %1428 = vset.pattern.permute.xlu0 0
        %1429 = vperm.xlu0 %1428, %v711
        %v1430 = vpop.permute.xlu0 %1429
        %1433 = vset.pattern.permute.xlu0 0
        %1434 = vperm.xlu0 %1433, %v712
        %v1435 = vpop.permute.xlu0 %1434
        %1438 = vset.pattern.permute.xlu0 0
        %1439 = vperm.xlu0 %1438, %v713
        %v1440 = vpop.permute.xlu0 %1439
        %1443 = vset.pattern.permute.xlu0 0
        %1444 = vperm.xlu0 %1443, %v714
        %v1445 = vpop.permute.xlu0 %1444
        %vm1447 = vcmask 261120
        %v1449 = vsel %vm1447, %v701, 0
        %v1452 = vsel %vm1447, %v704, 0
        %v1455 = vsel %vm1447, %v707, 0
        %v1458 = vsel %vm1447, %v710, 0
        %1460 = vmatprep.subr.mxu0 %v1356
        %1461 = vmatpush1.msra.mxu0 %v1355
        %1462 = vmatprep.subr.mxu0 %v1358
        %1463 = vmatpush1.msra.mxu0 %v1357
        %1464 = vmatprep.subr.mxu0 %v1360
        %1465 = vmatpush1.msra.mxu0 %v1359
        %1466 = vmatprep.subr.mxu0 %v1362
        %1467 = vmatpush1.msra.mxu0 %v1361
        %1468 = vmatprep.subr.mxu0 %v1364
        %1469 = vmatpush1.msra.mxu0 %v1363
        %1470 = vmatprep.subr.mxu0 %v1366
        %1471 = vmatpush1.msra.mxu0 %v1365
        %1472 = vmatprep.subr.mxu0 %v1368
        %1473 = vmatpush1.msra.mxu0 %v1367
        %1474 = vmatprep.subr.mxu0 %v1370
        %1475 = vmatpush1.msra.mxu0 %v1369
        %1476 = vmatprep.subr.mxu0 %v1372
        %1477 = vmatpush1.msra.mxu0 %v1371
        %1478 = vmatprep.subr.mxu0 %v1374
        %1479 = vmatpush1.msra.mxu0 %v1373
        %1480 = vmatprep.subr.mxu0 %v1376
        %1481 = vmatpush1.msra.mxu0 %v1375
        %1482 = vmatprep.subr.mxu0 %v1378
        %1483 = vmatpush1.msra.mxu0 %v1377
        %1484 = vmatprep.subr.mxu0 %v1380
        %1485 = vmatpush1.msra.mxu0 %v1379
        %1486 = vmatprep.subr.mxu0 %v1382
        %1487 = vmatpush1.msra.mxu0 %v1381
        %1488 = vmatprep.subr.mxu0 %v1384
        %1489 = vmatpush1.msra.mxu0 %v1383
        %1490 = vmatprep.subr.mxu0 %v1386
        %1491 = vmatpush1.msra.mxu0 %v1385
        %1492 = vmatprep.subr.mxu0 %v1388
        %1493 = vmatpush1.msra.mxu0 %v1387
        %1494 = vmatprep.subr.mxu0 %v1390
        %1495 = vmatpush1.msra.mxu0 %v1389
        %1496 = vmatprep.subr.mxu0 %v1392
        %1497 = vmatpush1.msra.mxu0 %v1391
        %1498 = vmatprep.subr.mxu0 %v1394
        %1499 = vmatpush1.msra.mxu0 %v1393
        %1500 = vmatprep.subr.mxu0 %v1396
        %1501 = vmatpush1.msra.mxu0 %v1395
        %1502 = vmatprep.subr.mxu0 %v1398
        %1503 = vmatpush1.msra.mxu0 %v1397
        %1504 = vmatprep.subr.mxu0 %v1400
        %1505 = vmatpush1.msra.mxu0 %v1399
        %1506 = vmatprep.subr.mxu0 %v1402
        %1507 = vmatpush1.msra.mxu0 %v1401
        %1508 = vmatprep.subr.mxu0 %v1404
        %1509 = vmatpush1.msra.mxu0 %v1403
        %1510 = vmatprep.subr.mxu0 %v1406
        %1511 = vmatpush1.msra.mxu0 %v1405
        %1512 = vmatprep.subr.mxu0 %v1408
        %1513 = vmatpush1.msra.mxu0 %v1407
        %1514 = vmatprep.subr.mxu0 %v1410
        %1515 = vmatpush1.msra.mxu0 %v1409
        %1516 = vmatprep.subr.mxu0 %v1412
        %1517 = vmatpush1.msra.mxu0 %v1411
        %1518 = vmatprep.subr.mxu0 %v1414
        %1519 = vmatpush1.msra.mxu0 %v1413
        %1520 = vmatprep.subr.mxu0 %v1416
        %1521 = vmatpush1.msra.mxu0 %v1415
        %1522 = vmatprep.subr.mxu0 %v1418
        %1523 = vmatpush1.msra.mxu0 %v1417
        %1524 = vmatprep.mubr.f32.mxu0 %v700
        %1525 = vmatmul.mubr.f32.gmra.mrb[0].mxu0 %v699
        %v1526 = vpop.f32.mrb[0].mxu0
        %v1527 = vadd.f32 %v1430, %v1526
        %v1528 = vpop.f32.mrb[0].mxu0
        %v1529 = vadd.f32 %v1430, %v1528
        %1530 = vmatprep.mubr.f32.mxu0 %v703
        %1531 = vmatmul.mubr.f32.gmra.mrb[0].mxu0 %v702
        %v1532 = vpop.f32.mrb[0].mxu0
        %v1533 = vadd.f32 %v1435, %v1532
        %v1534 = vpop.f32.mrb[0].mxu0
        %v1535 = vadd.f32 %v1435, %v1534
        %1536 = vmatprep.mubr.f32.mxu0 %v706
        %1537 = vmatmul.mubr.f32.gmra.mrb[0].mxu0 %v705
        %v1538 = vpop.f32.mrb[0].mxu0
        %v1539 = vadd.f32 %v1440, %v1538
        %v1540 = vpop.f32.mrb[0].mxu0
        %v1541 = vadd.f32 %v1440, %v1540
        %1542 = vmatprep.mubr.f32.mxu0 %v709
        %1543 = vmatmul.mubr.f32.gmra.mrb[0].mxu0 %v708
        %v1544 = vpop.f32.mrb[0].mxu0
        %v1545 = vadd.f32 %v1445, %v1544
        %v1546 = vpop.f32.mrb[0].mxu0
        %v1547 = vadd.f32 %v1445, %v1546
        %1548 = vdwg.mxu0
        %1549 = vmatprep.subr.mxu0 %v1420
        %1550 = vmatpush1.msra.mxu0 %v1419
        %1551 = vmatprep.subr.mxu0 %v1422
        %1552 = vmatpush1.msra.mxu0 %v1421
        %1553 = vmatprep.subr.mxu0 %v1424
        %1554 = vmatpush1.msra.mxu0 %v1423
        %1555 = vmatprep.subr.mxu0 %v1426
        %1556 = vmatpush1.msra.mxu0 %v1425
        %1557 = vmatprep.subr.mxu0 0.0
        %1558 = vmatpush1.msra.mxu0 0.0
        %1559 = vmatprep.subr.mxu0 0.0
        %1560 = vmatpush1.msra.mxu0 0.0
        %1561 = vmatprep.subr.mxu0 0.0
        %1562 = vmatpush1.msra.mxu0 0.0
        %1563 = vmatprep.subr.mxu0 0.0
        %1564 = vmatpush1.msra.mxu0 0.0
        %1565 = vmatprep.subr.mxu0 0.0
        %1566 = vmatpush1.msra.mxu0 0.0
        %1567 = vmatprep.subr.mxu0 0.0
        %1568 = vmatpush1.msra.mxu0 0.0
        %1569 = vmatprep.subr.mxu0 0.0
        %1570 = vmatpush1.msra.mxu0 0.0
        %1571 = vmatprep.subr.mxu0 0.0
        %1572 = vmatpush1.msra.mxu0 0.0
        %1573 = vmatprep.subr.mxu0 0.0
        %1574 = vmatpush1.msra.mxu0 0.0
        %1575 = vmatprep.subr.mxu0 0.0
        %1576 = vmatpush1.msra.mxu0 0.0
        %1577 = vmatprep.subr.mxu0 0.0
        %1578 = vmatpush1.msra.mxu0 0.0
        %1579 = vmatprep.subr.mxu0 0.0
        %1580 = vmatpush1.msra.mxu0 0.0
        %1581 = vmatprep.subr.mxu0 0.0
        %1582 = vmatpush1.msra.mxu0 0.0
        %1583 = vmatprep.subr.mxu0 0.0
        %1584 = vmatpush1.msra.mxu0 0.0
        %1585 = vmatprep.subr.mxu0 0.0
        %1586 = vmatpush1.msra.mxu0 0.0
        %1587 = vmatprep.subr.mxu0 0.0
        %1588 = vmatpush1.msra.mxu0 0.0
        %1589 = vmatprep.subr.mxu0 0.0
        %1590 = vmatpush1.msra.mxu0 0.0
        %1591 = vmatprep.subr.mxu0 0.0
        %1592 = vmatpush1.msra.mxu0 0.0
        %1593 = vmatprep.subr.mxu0 0.0
        %1594 = vmatpush1.msra.mxu0 0.0
        %1595 = vmatprep.subr.mxu0 0.0
        %1596 = vmatpush1.msra.mxu0 0.0
        %1597 = vmatprep.subr.mxu0 0.0
        %1598 = vmatpush1.msra.mxu0 0.0
        %1599 = vmatprep.subr.mxu0 0.0
        %1600 = vmatpush1.msra.mxu0 0.0
        %1601 = vmatprep.subr.mxu0 0.0
        %1602 = vmatpush1.msra.mxu0 0.0
        %1603 = vmatprep.subr.mxu0 0.0
        %1604 = vmatpush1.msra.mxu0 0.0
        %1605 = vmatprep.subr.mxu0 0.0
        %1606 = vmatpush1.msra.mxu0 0.0
        %1607 = vmatprep.subr.mxu0 0.0
        %1608 = vmatpush1.msra.mxu0 0.0
        %1609 = vmatprep.subr.mxu0 0.0
        %1610 = vmatpush1.msra.mxu0 0.0
        %1611 = vmatprep.subr.mxu0 0.0
        %1612 = vmatpush1.msra.mxu0 0.0
        %1613 = vmatprep.mubr.f32.mxu0 0.0
        %1614 = vmatmul.mubr.f32.gmra.mrb[0].mxu0 %v1449
        %v1615 = vpop.f32.mrb[0].mxu0
        %v1616 = vadd.f32 %v1527, %v1615
        %v1617 = vpop.f32.mrb[0].mxu0
        %v1618 = vadd.f32 %v1529, %v1617
        %1619 = vmatprep.mubr.f32.mxu0 0.0
        %1620 = vmatmul.mubr.f32.gmra.mrb[0].mxu0 %v1452
        %v1621 = vpop.f32.mrb[0].mxu0
        %v1622 = vadd.f32 %v1533, %v1621
        %v1623 = vpop.f32.mrb[0].mxu0
        %v1624 = vadd.f32 %v1535, %v1623
        %1625 = vmatprep.mubr.f32.mxu0 0.0
        %1626 = vmatmul.mubr.f32.gmra.mrb[0].mxu0 %v1455
        %v1627 = vpop.f32.mrb[0].mxu0
        %v1628 = vadd.f32 %v1539, %v1627
        %v1629 = vpop.f32.mrb[0].mxu0
        %v1630 = vadd.f32 %v1541, %v1629
        %1631 = vmatprep.mubr.f32.mxu0 0.0
        %1632 = vmatmul.mubr.f32.gmra.mrb[0].mxu0 %v1458
        %v1633 = vpop.f32.mrb[0].mxu0
        %v1634 = vadd.f32 %v1545, %v1633
        %v1635 = vpop.f32.mrb[0].mxu0
        %v1636 = vadd.f32 %v1547, %v1635
        %1637 = vdwg.mxu0
        %v1638 = vmax.f32 %v1616, 0.0
        %v1639 = vmax.f32 %v1618, 0.0
        %v1640 = vmax.f32 %v1622, 0.0
        %v1641 = vmax.f32 %v1624, 0.0
        %v1642 = vmax.f32 %v1628, 0.0
        %v1643 = vmax.f32 %v1630, 0.0
        %v1644 = vmax.f32 %v1634, 0.0
        %v1645 = vmax.f32 %v1636, 0.0
        %1654 = vrot.lane.b32.xlu0 %v1638, 17
        %v1655 = vpop.permute.xlu0 %1654
        %1656 = vrot.lane.b32.xlu0 %v1639, 17
        %v1657 = vpop.permute.xlu0 %1656
        %1658 = vrot.lane.b32.xlu0 %v1640, 17
        %v1659 = vpop.permute.xlu0 %1658
        %1660 = vrot.lane.b32.xlu0 %v1641, 17
        %v1661 = vpop.permute.xlu0 %1660
        %1662 = vrot.lane.b32.xlu0 %v1642, 17
        %v1663 = vpop.permute.xlu0 %1662
        %1664 = vrot.lane.b32.xlu0 %v1643, 17
        %v1665 = vpop.permute.xlu0 %1664
        %1666 = vrot.lane.b32.xlu0 %v1644, 17
        %v1667 = vpop.permute.xlu0 %1666
        %1668 = vrot.lane.b32.xlu0 %v1645, 17
        %v1669 = vpop.permute.xlu0 %1668
        %v1670 = vsel %vm290, %v1655, %v1657
        %v1671 = vsel %vm290, %v1659, %v1661
        %v1672 = vsel %vm290, %v1663, %v1665
        %v1673 = vsel %vm290, %v1667, %v1669
        %1686 = vst.msk [vmem:[#allocation2] sm:$0xff] %vm295, %v1655
        %1687 = vst [vmem:[#allocation2 + $0x8] sm:$0xff] %v1670
        %1688 = vst.msk [vmem:[#allocation2 + $0x10] sm:$0xff] %vm290, %v1657
        %1689 = vst.msk [vmem:[#allocation2 + $0x18] sm:$0xff] %vm295, %v1659
        %1690 = vst [vmem:[#allocation2 + $0x20] sm:$0xff] %v1671
        %1691 = vst.msk [vmem:[#allocation2 + $0x28] sm:$0xff] %vm290, %v1661
        %1692 = vst.msk [vmem:[#allocation2 + $0x30] sm:$0xff] %vm295, %v1663
        %1693 = vst [vmem:[#allocation2 + $0x38] sm:$0xff] %v1672
        %1694 = vst.msk [vmem:[#allocation2 + $0x40] sm:$0xff] %vm290, %v1665
        %1695 = vst.msk [vmem:[#allocation2 + $0x48] sm:$0xff] %vm295, %v1667
        %1696 = vst [vmem:[#allocation2 + $0x50] sm:$0xff] %v1673
        %1697 = vst.msk [vmem:[#allocation2 + $0x58] sm:$0xff] %vm290, %v1669
        %s1698 = scalar_lea.vmem [#allocation4], 96
        %v1699 = vld [vmem:[%s1698] sm:$0xff]
        %v1700 = vld [vmem:[%s1698 + $0x8] sm:$0xff]
        %v1701 = vld [vmem:[%s1698 + $0x10] sm:$0xff]
        %v1702 = vld [vmem:[%s1698 + $0x18] sm:$0xff]
        %v1703 = vld [vmem:[%s1698 + $0x20] sm:$0xff]
        %v1704 = vld [vmem:[%s1698 + $0x28] sm:$0xff]
        %v1705 = vld [vmem:[%s1698 + $0x30] sm:$0xff]
        %v1706 = vld [vmem:[%s1698 + $0x38] sm:$0xff]
        %v1707 = vld [vmem:[%s1698 + $0x40] sm:$0xff]
        %v1708 = vld [vmem:[%s1698 + $0x48] sm:$0xff]
        %v1709 = vld [vmem:[%s1698 + $0x50] sm:$0xff]
        %v1710 = vld [vmem:[%s1698 + $0x58] sm:$0xff]
        %s1711 = scalar_lea.vmem %s4, 32
        %v1712 = vld [vmem:[%s1711] sm:$0xff]
        %v1713 = vld [vmem:[%s1711 + $0x8] sm:$0xff]
        %v1714 = vld [vmem:[%s1711 + $0x10] sm:$0xff]
        %v1715 = vld [vmem:[%s1711 + $0x18] sm:$0xff]
        %v1716 = vld [vmem:[#allocation2] sm:$0xff]
        %v1717 = vld [vmem:[#allocation2 + $0x8] sm:$0xff]
        %v1718 = vld [vmem:[#allocation2 + $0x18] sm:$0xff]
        %v1719 = vld [vmem:[#allocation2 + $0x20] sm:$0xff]
        %v1720 = vld [vmem:[#allocation2 + $0x30] sm:$0xff]
        %v1721 = vld [vmem:[#allocation2 + $0x38] sm:$0xff]
        %v1722 = vld [vmem:[#allocation2 + $0x48] sm:$0xff]
        %v1723 = vld [vmem:[#allocation2 + $0x50] sm:$0xff]
        %v1724 = vsel %vm311, %v1716, 0.0
        %v1725 = vsel %vm312, %v1717, 0.0
        %v1726 = vsel %vm311, %v1718, 0.0
        %v1727 = vsel %vm312, %v1719, 0.0
        %v1728 = vsel %vm311, %v1720, 0.0
        %v1729 = vsel %vm312, %v1721, 0.0
        %v1730 = vsel %vm311, %v1722, 0.0
        %v1731 = vsel %vm312, %v1723, 0.0
        %1732 = vst [vmem:[#allocation3] sm:$0xff] %v1724
        %1733 = vst [vmem:[#allocation3 + $0x8] sm:$0xff] %v1725
        %1734 = vst [vmem:[#allocation3 + $0x10] sm:$0xff] %v1726
        %1735 = vst [vmem:[#allocation3 + $0x18] sm:$0xff] %v1727
        %1736 = vst [vmem:[#allocation3 + $0x20] sm:$0xff] %v1728
        %1737 = vst [vmem:[#allocation3 + $0x28] sm:$0xff] %v1729
        %1738 = vst [vmem:[#allocation3 + $0x30] sm:$0xff] %v1730
        %1739 = vst [vmem:[#allocation3 + $0x38] sm:$0xff] %v1731
        %v1740 = vld [vmem:[#allocation2] sm:$0xff]
        %v1741 = vld [vmem:[#allocation2 + $0x8] sm:$0xff]
        %v1742 = vld [vmem:[#allocation2 + $0x10] sm:$0xff]
        %v1743 = vld [vmem:[#allocation2 + $0x18] sm:$0xff]
        %v1744 = vld [vmem:[#allocation2 + $0x20] sm:$0xff]
        %v1745 = vld [vmem:[#allocation2 + $0x28] sm:$0xff]
        %v1746 = vld [vmem:[#allocation2 + $0x30] sm:$0xff]
        %v1747 = vld [vmem:[#allocation2 + $0x38] sm:$0xff]
        %v1748 = vld [vmem:[#allocation2 + $0x40] sm:$0xff]
        %v1749 = vld [vmem:[#allocation2 + $0x48] sm:$0xff]
        %v1750 = vld [vmem:[#allocation2 + $0x50] sm:$0xff]
        %v1751 = vld [vmem:[#allocation2 + $0x58] sm:$0xff]
        %1764 = vrot.lane.b32.xlu0 %v1740, 127
        %v1765 = vpop.permute.xlu0 %1764
        %1766 = vrot.lane.b32.xlu0 %v1741, 127
        %v1767 = vpop.permute.xlu0 %1766
        %1768 = vrot.lane.b32.xlu0 %v1742, 127
        %v1769 = vpop.permute.xlu0 %1768
        %1770 = vrot.lane.b32.xlu0 %v1743, 127
        %v1771 = vpop.permute.xlu0 %1770
        %1772 = vrot.lane.b32.xlu0 %v1744, 127
        %v1773 = vpop.permute.xlu0 %1772
        %1774 = vrot.lane.b32.xlu0 %v1745, 127
        %v1775 = vpop.permute.xlu0 %1774
        %1776 = vrot.lane.b32.xlu0 %v1746, 127
        %v1777 = vpop.permute.xlu0 %1776
        %1778 = vrot.lane.b32.xlu0 %v1747, 127
        %v1779 = vpop.permute.xlu0 %1778
        %1780 = vrot.lane.b32.xlu0 %v1748, 127
        %v1781 = vpop.permute.xlu0 %1780
        %1782 = vrot.lane.b32.xlu0 %v1749, 127
        %v1783 = vpop.permute.xlu0 %1782
        %1784 = vrot.lane.b32.xlu0 %v1750, 127
        %v1785 = vpop.permute.xlu0 %1784
        %1786 = vrot.lane.b32.xlu0 %v1751, 127
        %v1787 = vpop.permute.xlu0 %1786
        %v1788 = vsel %vm329, %v1765, %v1767
        %v1789 = vsel %vm329, %v1767, %v1769
        %v1790 = vsel %vm329, %v1771, %v1773
        %v1791 = vsel %vm329, %v1773, %v1775
        %v1792 = vsel %vm329, %v1777, %v1779
        %v1793 = vsel %vm329, %v1779, %v1781
        %v1794 = vsel %vm329, %v1783, %v1785
        %v1795 = vsel %vm329, %v1785, %v1787
        %1804 = vst [vmem:[#allocation3 + $0x40] sm:$0xff] %v1788
        %1805 = vst [vmem:[#allocation3 + $0x48] sm:$0xff] %v1789
        %1806 = vst [vmem:[#allocation3 + $0x50] sm:$0xff] %v1790
        %1807 = vst [vmem:[#allocation3 + $0x58] sm:$0xff] %v1791
        %1808 = vst [vmem:[#allocation3 + $0x60] sm:$0xff] %v1792
        %1809 = vst [vmem:[#allocation3 + $0x68] sm:$0xff] %v1793
        %1810 = vst [vmem:[#allocation3 + $0x70] sm:$0xff] %v1794
        %1811 = vst [vmem:[#allocation3 + $0x78] sm:$0xff] %v1795
        %v1812 = vld [vmem:[#allocation2] sm:$0xff]
        %v1813 = vld [vmem:[#allocation2 + $0x8] sm:$0xff]
        %v1814 = vld [vmem:[#allocation2 + $0x10] sm:$0xff]
        %v1815 = vld [vmem:[#allocation2 + $0x18] sm:$0xff]
        %v1816 = vld [vmem:[#allocation2 + $0x20] sm:$0xff]
        %v1817 = vld [vmem:[#allocation2 + $0x28] sm:$0xff]
        %v1818 = vld [vmem:[#allocation2 + $0x30] sm:$0xff]
        %v1819 = vld [vmem:[#allocation2 + $0x38] sm:$0xff]
        %v1820 = vld [vmem:[#allocation2 + $0x40] sm:$0xff]
        %v1821 = vld [vmem:[#allocation2 + $0x48] sm:$0xff]
        %v1822 = vld [vmem:[#allocation2 + $0x50] sm:$0xff]
        %v1823 = vld [vmem:[#allocation2 + $0x58] sm:$0xff]
        %1836 = vrot.lane.b32.xlu0 %v1812, 126
        %v1837 = vpop.permute.xlu0 %1836
        %1838 = vrot.lane.b32.xlu0 %v1813, 126
        %v1839 = vpop.permute.xlu0 %1838
        %1840 = vrot.lane.b32.xlu0 %v1814, 126
        %v1841 = vpop.permute.xlu0 %1840
        %1842 = vrot.lane.b32.xlu0 %v1815, 126
        %v1843 = vpop.permute.xlu0 %1842
        %1844 = vrot.lane.b32.xlu0 %v1816, 126
        %v1845 = vpop.permute.xlu0 %1844
        %1846 = vrot.lane.b32.xlu0 %v1817, 126
        %v1847 = vpop.permute.xlu0 %1846
        %1848 = vrot.lane.b32.xlu0 %v1818, 126
        %v1849 = vpop.permute.xlu0 %1848
        %1850 = vrot.lane.b32.xlu0 %v1819, 126
        %v1851 = vpop.permute.xlu0 %1850
        %1852 = vrot.lane.b32.xlu0 %v1820, 126
        %v1853 = vpop.permute.xlu0 %1852
        %1854 = vrot.lane.b32.xlu0 %v1821, 126
        %v1855 = vpop.permute.xlu0 %1854
        %1856 = vrot.lane.b32.xlu0 %v1822, 126
        %v1857 = vpop.permute.xlu0 %1856
        %1858 = vrot.lane.b32.xlu0 %v1823, 126
        %v1859 = vpop.permute.xlu0 %1858
        %v1860 = vsel %vm352, %v1837, %v1839
        %v1861 = vsel %vm352, %v1839, %v1841
        %v1862 = vsel %vm352, %v1843, %v1845
        %v1863 = vsel %vm352, %v1845, %v1847
        %v1864 = vsel %vm352, %v1849, %v1851
        %v1865 = vsel %vm352, %v1851, %v1853
        %v1866 = vsel %vm352, %v1855, %v1857
        %v1867 = vsel %vm352, %v1857, %v1859
        %v1876 = vsel %vm341, %v1860, 0.0
        %v1877 = vsel %vm342, %v1861, 0.0
        %v1878 = vsel %vm341, %v1862, 0.0
        %v1879 = vsel %vm342, %v1863, 0.0
        %v1880 = vsel %vm341, %v1864, 0.0
        %v1881 = vsel %vm342, %v1865, 0.0
        %v1882 = vsel %vm341, %v1866, 0.0
        %v1883 = vsel %vm342, %v1867, 0.0
        %1884 = vst [vmem:[#allocation3 + $0x80] sm:$0xff] %v1876
        %1885 = vst [vmem:[#allocation3 + $0x88] sm:$0xff] %v1877
        %1886 = vst [vmem:[#allocation3 + $0x90] sm:$0xff] %v1878
        %1887 = vst [vmem:[#allocation3 + $0x98] sm:$0xff] %v1879
        %1888 = vst [vmem:[#allocation3 + $0xa0] sm:$0xff] %v1880
        %1889 = vst [vmem:[#allocation3 + $0xa8] sm:$0xff] %v1881
        %1890 = vst [vmem:[#allocation3 + $0xb0] sm:$0xff] %v1882
        %1891 = vst [vmem:[#allocation3 + $0xb8] sm:$0xff] %v1883
        %v1892 = vld [vmem:[#allocation2] sm:$0xff]
        %v1893 = vld [vmem:[#allocation2 + $0x8] sm:$0xff]
        %v1894 = vld [vmem:[#allocation2 + $0x10] sm:$0xff]
        %v1895 = vld [vmem:[#allocation2 + $0x18] sm:$0xff]
        %v1896 = vld [vmem:[#allocation2 + $0x20] sm:$0xff]
        %v1897 = vld [vmem:[#allocation2 + $0x28] sm:$0xff]
        %v1898 = vld [vmem:[#allocation2 + $0x30] sm:$0xff]
        %v1899 = vld [vmem:[#allocation2 + $0x38] sm:$0xff]
        %v1900 = vld [vmem:[#allocation2 + $0x40] sm:$0xff]
        %v1901 = vld [vmem:[#allocation2 + $0x48] sm:$0xff]
        %v1902 = vld [vmem:[#allocation2 + $0x50] sm:$0xff]
        %v1903 = vld [vmem:[#allocation2 + $0x58] sm:$0xff]
        %1916 = vrot.lane.b32.xlu0 %v1892, 112
        %v1917 = vpop.permute.xlu0 %1916
        %1918 = vrot.lane.b32.xlu0 %v1893, 112
        %v1919 = vpop.permute.xlu0 %1918
        %1920 = vrot.lane.b32.xlu0 %v1894, 112
        %v1921 = vpop.permute.xlu0 %1920
        %1922 = vrot.lane.b32.xlu0 %v1895, 112
        %v1923 = vpop.permute.xlu0 %1922
        %1924 = vrot.lane.b32.xlu0 %v1896, 112
        %v1925 = vpop.permute.xlu0 %1924
        %1926 = vrot.lane.b32.xlu0 %v1897, 112
        %v1927 = vpop.permute.xlu0 %1926
        %1928 = vrot.lane.b32.xlu0 %v1898, 112
        %v1929 = vpop.permute.xlu0 %1928
        %1930 = vrot.lane.b32.xlu0 %v1899, 112
        %v1931 = vpop.permute.xlu0 %1930
        %1932 = vrot.lane.b32.xlu0 %v1900, 112
        %v1933 = vpop.permute.xlu0 %1932
        %1934 = vrot.lane.b32.xlu0 %v1901, 112
        %v1935 = vpop.permute.xlu0 %1934
        %1936 = vrot.lane.b32.xlu0 %v1902, 112
        %v1937 = vpop.permute.xlu0 %1936
        %1938 = vrot.lane.b32.xlu0 %v1903, 112
        %v1939 = vpop.permute.xlu0 %1938
        %v1940 = vsel %vm373, %v1917, %v1919
        %v1941 = vsel %vm373, %v1919, %v1921
        %v1942 = vsel %vm373, %v1923, %v1925
        %v1943 = vsel %vm373, %v1925, %v1927
        %v1944 = vsel %vm373, %v1929, %v1931
        %v1945 = vsel %vm373, %v1931, %v1933
        %v1946 = vsel %vm373, %v1935, %v1937
        %v1947 = vsel %vm373, %v1937, %v1939
        %v1956 = vsel %vm311, %v1940, 0.0
        %v1957 = vsel %vm312, %v1941, 0.0
        %v1958 = vsel %vm311, %v1942, 0.0
        %v1959 = vsel %vm312, %v1943, 0.0
        %v1960 = vsel %vm311, %v1944, 0.0
        %v1961 = vsel %vm312, %v1945, 0.0
        %v1962 = vsel %vm311, %v1946, 0.0
        %v1963 = vsel %vm312, %v1947, 0.0
        %1964 = vst [vmem:[#allocation3 + $0xc0] sm:$0xff] %v1956
        %1965 = vst [vmem:[#allocation3 + $0xc8] sm:$0xff] %v1957
        %1966 = vst [vmem:[#allocation3 + $0xd0] sm:$0xff] %v1958
        %1967 = vst [vmem:[#allocation3 + $0xd8] sm:$0xff] %v1959
        %1968 = vst [vmem:[#allocation3 + $0xe0] sm:$0xff] %v1960
        %1969 = vst [vmem:[#allocation3 + $0xe8] sm:$0xff] %v1961
        %1970 = vst [vmem:[#allocation3 + $0xf0] sm:$0xff] %v1962
        %1971 = vst [vmem:[#allocation3 + $0xf8] sm:$0xff] %v1963
        %v1972 = vld [vmem:[#allocation2] sm:$0xff]
        %v1973 = vld [vmem:[#allocation2 + $0x8] sm:$0xff]
        %v1974 = vld [vmem:[#allocation2 + $0x10] sm:$0xff]
        %v1975 = vld [vmem:[#allocation2 + $0x18] sm:$0xff]
        %v1976 = vld [vmem:[#allocation2 + $0x20] sm:$0xff]
        %v1977 = vld [vmem:[#allocation2 + $0x28] sm:$0xff]
        %v1978 = vld [vmem:[#allocation2 + $0x30] sm:$0xff]
        %v1979 = vld [vmem:[#allocation2 + $0x38] sm:$0xff]
        %v1980 = vld [vmem:[#allocation2 + $0x40] sm:$0xff]
        %v1981 = vld [vmem:[#allocation2 + $0x48] sm:$0xff]
        %v1982 = vld [vmem:[#allocation2 + $0x50] sm:$0xff]
        %v1983 = vld [vmem:[#allocation2 + $0x58] sm:$0xff]
        %1996 = vrot.lane.b32.xlu0 %v1972, 111
        %v1997 = vpop.permute.xlu0 %1996
        %1998 = vrot.lane.b32.xlu0 %v1973, 111
        %v1999 = vpop.permute.xlu0 %1998
        %2000 = vrot.lane.b32.xlu0 %v1974, 111
        %v2001 = vpop.permute.xlu0 %2000
        %2002 = vrot.lane.b32.xlu0 %v1975, 111
        %v2003 = vpop.permute.xlu0 %2002
        %2004 = vrot.lane.b32.xlu0 %v1976, 111
        %v2005 = vpop.permute.xlu0 %2004
        %2006 = vrot.lane.b32.xlu0 %v1977, 111
        %v2007 = vpop.permute.xlu0 %2006
        %2008 = vrot.lane.b32.xlu0 %v1978, 111
        %v2009 = vpop.permute.xlu0 %2008
        %2010 = vrot.lane.b32.xlu0 %v1979, 111
        %v2011 = vpop.permute.xlu0 %2010
        %2012 = vrot.lane.b32.xlu0 %v1980, 111
        %v2013 = vpop.permute.xlu0 %2012
        %2014 = vrot.lane.b32.xlu0 %v1981, 111
        %v2015 = vpop.permute.xlu0 %2014
        %2016 = vrot.lane.b32.xlu0 %v1982, 111
        %v2017 = vpop.permute.xlu0 %2016
        %2018 = vrot.lane.b32.xlu0 %v1983, 111
        %v2019 = vpop.permute.xlu0 %2018
        %v2020 = vsel %vm394, %v1997, %v1999
        %v2021 = vsel %vm394, %v1999, %v2001
        %v2022 = vsel %vm394, %v2003, %v2005
        %v2023 = vsel %vm394, %v2005, %v2007
        %v2024 = vsel %vm394, %v2009, %v2011
        %v2025 = vsel %vm394, %v2011, %v2013
        %v2026 = vsel %vm394, %v2015, %v2017
        %v2027 = vsel %vm394, %v2017, %v2019
        %2036 = vst [vmem:[#allocation3 + $0x100] sm:$0xff] %v2020
        %2037 = vst [vmem:[#allocation3 + $0x108] sm:$0xff] %v2021
        %2038 = vst [vmem:[#allocation3 + $0x110] sm:$0xff] %v2022
        %2039 = vst [vmem:[#allocation3 + $0x118] sm:$0xff] %v2023
        %2040 = vst [vmem:[#allocation3 + $0x120] sm:$0xff] %v2024
        %2041 = vst [vmem:[#allocation3 + $0x128] sm:$0xff] %v2025
        %2042 = vst [vmem:[#allocation3 + $0x130] sm:$0xff] %v2026
        %2043 = vst [vmem:[#allocation3 + $0x138] sm:$0xff] %v2027
        %v2044 = vld [vmem:[#allocation2] sm:$0xff]
        %v2045 = vld [vmem:[#allocation2 + $0x8] sm:$0xff]
        %v2046 = vld [vmem:[#allocation2 + $0x10] sm:$0xff]
        %v2047 = vld [vmem:[#allocation2 + $0x18] sm:$0xff]
        %v2048 = vld [vmem:[#allocation2 + $0x20] sm:$0xff]
        %v2049 = vld [vmem:[#allocation2 + $0x28] sm:$0xff]
        %v2050 = vld [vmem:[#allocation2 + $0x30] sm:$0xff]
        %v2051 = vld [vmem:[#allocation2 + $0x38] sm:$0xff]
        %v2052 = vld [vmem:[#allocation2 + $0x40] sm:$0xff]
        %v2053 = vld [vmem:[#allocation2 + $0x48] sm:$0xff]
        %v2054 = vld [vmem:[#allocation2 + $0x50] sm:$0xff]
        %v2055 = vld [vmem:[#allocation2 + $0x58] sm:$0xff]
        %2068 = vrot.lane.b32.xlu0 %v2044, 110
        %v2069 = vpop.permute.xlu0 %2068
        %2070 = vrot.lane.b32.xlu0 %v2045, 110
        %v2071 = vpop.permute.xlu0 %2070
        %2072 = vrot.lane.b32.xlu0 %v2046, 110
        %v2073 = vpop.permute.xlu0 %2072
        %2074 = vrot.lane.b32.xlu0 %v2047, 110
        %v2075 = vpop.permute.xlu0 %2074
        %2076 = vrot.lane.b32.xlu0 %v2048, 110
        %v2077 = vpop.permute.xlu0 %2076
        %2078 = vrot.lane.b32.xlu0 %v2049, 110
        %v2079 = vpop.permute.xlu0 %2078
        %2080 = vrot.lane.b32.xlu0 %v2050, 110
        %v2081 = vpop.permute.xlu0 %2080
        %2082 = vrot.lane.b32.xlu0 %v2051, 110
        %v2083 = vpop.permute.xlu0 %2082
        %2084 = vrot.lane.b32.xlu0 %v2052, 110
        %v2085 = vpop.permute.xlu0 %2084
        %2086 = vrot.lane.b32.xlu0 %v2053, 110
        %v2087 = vpop.permute.xlu0 %2086
        %2088 = vrot.lane.b32.xlu0 %v2054, 110
        %v2089 = vpop.permute.xlu0 %2088
        %2090 = vrot.lane.b32.xlu0 %v2055, 110
        %v2091 = vpop.permute.xlu0 %2090
        %v2092 = vsel %vm413, %v2069, %v2071
        %v2093 = vsel %vm413, %v2071, %v2073
        %v2094 = vsel %vm413, %v2075, %v2077
        %v2095 = vsel %vm413, %v2077, %v2079
        %v2096 = vsel %vm413, %v2081, %v2083
        %v2097 = vsel %vm413, %v2083, %v2085
        %v2098 = vsel %vm413, %v2087, %v2089
        %v2099 = vsel %vm413, %v2089, %v2091
        %v2108 = vsel %vm341, %v2092, 0.0
        %v2109 = vsel %vm342, %v2093, 0.0
        %v2110 = vsel %vm341, %v2094, 0.0
        %v2111 = vsel %vm342, %v2095, 0.0
        %v2112 = vsel %vm341, %v2096, 0.0
        %v2113 = vsel %vm342, %v2097, 0.0
        %v2114 = vsel %vm341, %v2098, 0.0
        %v2115 = vsel %vm342, %v2099, 0.0
        %2116 = vst [vmem:[#allocation3 + $0x140] sm:$0xff] %v2108
        %2117 = vst [vmem:[#allocation3 + $0x148] sm:$0xff] %v2109
        %2118 = vst [vmem:[#allocation3 + $0x150] sm:$0xff] %v2110
        %2119 = vst [vmem:[#allocation3 + $0x158] sm:$0xff] %v2111
        %2120 = vst [vmem:[#allocation3 + $0x160] sm:$0xff] %v2112
        %2121 = vst [vmem:[#allocation3 + $0x168] sm:$0xff] %v2113
        %2122 = vst [vmem:[#allocation3 + $0x170] sm:$0xff] %v2114
        %2123 = vst [vmem:[#allocation3 + $0x178] sm:$0xff] %v2115
        %v2124 = vld [vmem:[#allocation2] sm:$0xff]
        %v2125 = vld [vmem:[#allocation2 + $0x8] sm:$0xff]
        %v2126 = vld [vmem:[#allocation2 + $0x10] sm:$0xff]
        %v2127 = vld [vmem:[#allocation2 + $0x18] sm:$0xff]
        %v2128 = vld [vmem:[#allocation2 + $0x20] sm:$0xff]
        %v2129 = vld [vmem:[#allocation2 + $0x28] sm:$0xff]
        %v2130 = vld [vmem:[#allocation2 + $0x30] sm:$0xff]
        %v2131 = vld [vmem:[#allocation2 + $0x38] sm:$0xff]
        %v2132 = vld [vmem:[#allocation2 + $0x40] sm:$0xff]
        %v2133 = vld [vmem:[#allocation2 + $0x48] sm:$0xff]
        %v2134 = vld [vmem:[#allocation2 + $0x50] sm:$0xff]
        %v2135 = vld [vmem:[#allocation2 + $0x58] sm:$0xff]
        %2148 = vrot.lane.b32.xlu0 %v2124, 96
        %v2149 = vpop.permute.xlu0 %2148
        %2150 = vrot.lane.b32.xlu0 %v2125, 96
        %v2151 = vpop.permute.xlu0 %2150
        %2152 = vrot.lane.b32.xlu0 %v2126, 96
        %v2153 = vpop.permute.xlu0 %2152
        %2154 = vrot.lane.b32.xlu0 %v2127, 96
        %v2155 = vpop.permute.xlu0 %2154
        %2156 = vrot.lane.b32.xlu0 %v2128, 96
        %v2157 = vpop.permute.xlu0 %2156
        %2158 = vrot.lane.b32.xlu0 %v2129, 96
        %v2159 = vpop.permute.xlu0 %2158
        %2160 = vrot.lane.b32.xlu0 %v2130, 96
        %v2161 = vpop.permute.xlu0 %2160
        %2162 = vrot.lane.b32.xlu0 %v2131, 96
        %v2163 = vpop.permute.xlu0 %2162
        %2164 = vrot.lane.b32.xlu0 %v2132, 96
        %v2165 = vpop.permute.xlu0 %2164
        %2166 = vrot.lane.b32.xlu0 %v2133, 96
        %v2167 = vpop.permute.xlu0 %2166
        %2168 = vrot.lane.b32.xlu0 %v2134, 96
        %v2169 = vpop.permute.xlu0 %2168
        %2170 = vrot.lane.b32.xlu0 %v2135, 96
        %v2171 = vpop.permute.xlu0 %2170
        %v2172 = vsel %vm434, %v2149, %v2151
        %v2173 = vsel %vm434, %v2151, %v2153
        %v2174 = vsel %vm434, %v2155, %v2157
        %v2175 = vsel %vm434, %v2157, %v2159
        %v2176 = vsel %vm434, %v2161, %v2163
        %v2177 = vsel %vm434, %v2163, %v2165
        %v2178 = vsel %vm434, %v2167, %v2169
        %v2179 = vsel %vm434, %v2169, %v2171
        %v2188 = vsel %vm311, %v2172, 0.0
        %v2189 = vsel %vm312, %v2173, 0.0
        %v2190 = vsel %vm311, %v2174, 0.0
        %v2191 = vsel %vm312, %v2175, 0.0
        %v2192 = vsel %vm311, %v2176, 0.0
        %v2193 = vsel %vm312, %v2177, 0.0
        %v2194 = vsel %vm311, %v2178, 0.0
        %v2195 = vsel %vm312, %v2179, 0.0
        %2196 = vst [vmem:[#allocation3 + $0x180] sm:$0xff] %v2188
        %2197 = vst [vmem:[#allocation3 + $0x188] sm:$0xff] %v2189
        %2198 = vst [vmem:[#allocation3 + $0x190] sm:$0xff] %v2190
        %2199 = vst [vmem:[#allocation3 + $0x198] sm:$0xff] %v2191
        %2200 = vst [vmem:[#allocation3 + $0x1a0] sm:$0xff] %v2192
        %2201 = vst [vmem:[#allocation3 + $0x1a8] sm:$0xff] %v2193
        %2202 = vst [vmem:[#allocation3 + $0x1b0] sm:$0xff] %v2194
        %2203 = vst [vmem:[#allocation3 + $0x1b8] sm:$0xff] %v2195
        %v2204 = vld [vmem:[#allocation2] sm:$0xff]
        %v2205 = vld [vmem:[#allocation2 + $0x8] sm:$0xff]
        %v2206 = vld [vmem:[#allocation2 + $0x10] sm:$0xff]
        %v2207 = vld [vmem:[#allocation2 + $0x18] sm:$0xff]
        %v2208 = vld [vmem:[#allocation2 + $0x20] sm:$0xff]
        %v2209 = vld [vmem:[#allocation2 + $0x28] sm:$0xff]
        %v2210 = vld [vmem:[#allocation2 + $0x30] sm:$0xff]
        %v2211 = vld [vmem:[#allocation2 + $0x38] sm:$0xff]
        %v2212 = vld [vmem:[#allocation2 + $0x40] sm:$0xff]
        %v2213 = vld [vmem:[#allocation2 + $0x48] sm:$0xff]
        %v2214 = vld [vmem:[#allocation2 + $0x50] sm:$0xff]
        %v2215 = vld [vmem:[#allocation2 + $0x58] sm:$0xff]
        %2228 = vrot.lane.b32.xlu0 %v2204, 95
        %v2229 = vpop.permute.xlu0 %2228
        %2230 = vrot.lane.b32.xlu0 %v2205, 95
        %v2231 = vpop.permute.xlu0 %2230
        %2232 = vrot.lane.b32.xlu0 %v2206, 95
        %v2233 = vpop.permute.xlu0 %2232
        %2234 = vrot.lane.b32.xlu0 %v2207, 95
        %v2235 = vpop.permute.xlu0 %2234
        %2236 = vrot.lane.b32.xlu0 %v2208, 95
        %v2237 = vpop.permute.xlu0 %2236
        %2238 = vrot.lane.b32.xlu0 %v2209, 95
        %v2239 = vpop.permute.xlu0 %2238
        %2240 = vrot.lane.b32.xlu0 %v2210, 95
        %v2241 = vpop.permute.xlu0 %2240
        %2242 = vrot.lane.b32.xlu0 %v2211, 95
        %v2243 = vpop.permute.xlu0 %2242
        %2244 = vrot.lane.b32.xlu0 %v2212, 95
        %v2245 = vpop.permute.xlu0 %2244
        %2246 = vrot.lane.b32.xlu0 %v2213, 95
        %v2247 = vpop.permute.xlu0 %2246
        %2248 = vrot.lane.b32.xlu0 %v2214, 95
        %v2249 = vpop.permute.xlu0 %2248
        %2250 = vrot.lane.b32.xlu0 %v2215, 95
        %v2251 = vpop.permute.xlu0 %2250
        %v2252 = vsel %vm455, %v2229, %v2231
        %v2253 = vsel %vm455, %v2231, %v2233
        %v2254 = vsel %vm455, %v2235, %v2237
        %v2255 = vsel %vm455, %v2237, %v2239
        %v2256 = vsel %vm455, %v2241, %v2243
        %v2257 = vsel %vm455, %v2243, %v2245
        %v2258 = vsel %vm455, %v2247, %v2249
        %v2259 = vsel %vm455, %v2249, %v2251
        %2268 = vst [vmem:[#allocation3 + $0x1c0] sm:$0xff] %v2252
        %2269 = vst [vmem:[#allocation3 + $0x1c8] sm:$0xff] %v2253
        %2270 = vst [vmem:[#allocation3 + $0x1d0] sm:$0xff] %v2254
        %2271 = vst [vmem:[#allocation3 + $0x1d8] sm:$0xff] %v2255
        %2272 = vst [vmem:[#allocation3 + $0x1e0] sm:$0xff] %v2256
        %2273 = vst [vmem:[#allocation3 + $0x1e8] sm:$0xff] %v2257
        %2274 = vst [vmem:[#allocation3 + $0x1f0] sm:$0xff] %v2258
        %2275 = vst [vmem:[#allocation3 + $0x1f8] sm:$0xff] %v2259
        %v2276 = vld [vmem:[#allocation2] sm:$0xff]
        %v2277 = vld [vmem:[#allocation2 + $0x8] sm:$0xff]
        %v2278 = vld [vmem:[#allocation2 + $0x10] sm:$0xff]
        %v2279 = vld [vmem:[#allocation2 + $0x18] sm:$0xff]
        %v2280 = vld [vmem:[#allocation2 + $0x20] sm:$0xff]
        %v2281 = vld [vmem:[#allocation2 + $0x28] sm:$0xff]
        %v2282 = vld [vmem:[#allocation2 + $0x30] sm:$0xff]
        %v2283 = vld [vmem:[#allocation2 + $0x38] sm:$0xff]
        %v2284 = vld [vmem:[#allocation2 + $0x40] sm:$0xff]
        %v2285 = vld [vmem:[#allocation2 + $0x48] sm:$0xff]
        %v2286 = vld [vmem:[#allocation2 + $0x50] sm:$0xff]
        %v2287 = vld [vmem:[#allocation2 + $0x58] sm:$0xff]
        %2300 = vrot.lane.b32.xlu0 %v2276, 94
        %v2301 = vpop.permute.xlu0 %2300
        %2302 = vrot.lane.b32.xlu0 %v2277, 94
        %v2303 = vpop.permute.xlu0 %2302
        %2304 = vrot.lane.b32.xlu0 %v2278, 94
        %v2305 = vpop.permute.xlu0 %2304
        %2306 = vrot.lane.b32.xlu0 %v2279, 94
        %v2307 = vpop.permute.xlu0 %2306
        %2308 = vrot.lane.b32.xlu0 %v2280, 94
        %v2309 = vpop.permute.xlu0 %2308
        %2310 = vrot.lane.b32.xlu0 %v2281, 94
        %v2311 = vpop.permute.xlu0 %2310
        %2312 = vrot.lane.b32.xlu0 %v2282, 94
        %v2313 = vpop.permute.xlu0 %2312
        %2314 = vrot.lane.b32.xlu0 %v2283, 94
        %v2315 = vpop.permute.xlu0 %2314
        %2316 = vrot.lane.b32.xlu0 %v2284, 94
        %v2317 = vpop.permute.xlu0 %2316
        %2318 = vrot.lane.b32.xlu0 %v2285, 94
        %v2319 = vpop.permute.xlu0 %2318
        %2320 = vrot.lane.b32.xlu0 %v2286, 94
        %v2321 = vpop.permute.xlu0 %2320
        %2322 = vrot.lane.b32.xlu0 %v2287, 94
        %v2323 = vpop.permute.xlu0 %2322
        %v2324 = vsel %vm474, %v2301, %v2303
        %v2325 = vsel %vm474, %v2303, %v2305
        %v2326 = vsel %vm474, %v2307, %v2309
        %v2327 = vsel %vm474, %v2309, %v2311
        %v2328 = vsel %vm474, %v2313, %v2315
        %v2329 = vsel %vm474, %v2315, %v2317
        %v2330 = vsel %vm474, %v2319, %v2321
        %v2331 = vsel %vm474, %v2321, %v2323
        %v2340 = vsel %vm341, %v2324, 0.0
        %v2341 = vsel %vm342, %v2325, 0.0
        %v2342 = vsel %vm341, %v2326, 0.0
        %v2343 = vsel %vm342, %v2327, 0.0
        %v2344 = vsel %vm341, %v2328, 0.0
        %v2345 = vsel %vm342, %v2329, 0.0
        %v2346 = vsel %vm341, %v2330, 0.0
        %v2347 = vsel %vm342, %v2331, 0.0
        %2348 = vst [vmem:[#allocation3 + $0x200] sm:$0xff] %v2340
        %2349 = vst [vmem:[#allocation3 + $0x208] sm:$0xff] %v2341
        %2350 = vst [vmem:[#allocation3 + $0x210] sm:$0xff] %v2342
        %2351 = vst [vmem:[#allocation3 + $0x218] sm:$0xff] %v2343
        %2352 = vst [vmem:[#allocation3 + $0x220] sm:$0xff] %v2344
        %2353 = vst [vmem:[#allocation3 + $0x228] sm:$0xff] %v2345
        %2354 = vst [vmem:[#allocation3 + $0x230] sm:$0xff] %v2346
        %2355 = vst [vmem:[#allocation3 + $0x238] sm:$0xff] %v2347
        %v2356 = vld [vmem:[#allocation3] sm:$0xff]
        %v2357 = vld [vmem:[#allocation3 + $0x8] sm:$0xff]
        %v2358 = vld [vmem:[#allocation3 + $0x10] sm:$0xff]
        %v2359 = vld [vmem:[#allocation3 + $0x18] sm:$0xff]
        %v2360 = vld [vmem:[#allocation3 + $0x20] sm:$0xff]
        %v2361 = vld [vmem:[#allocation3 + $0x28] sm:$0xff]
        %v2362 = vld [vmem:[#allocation3 + $0x30] sm:$0xff]
        %v2363 = vld [vmem:[#allocation3 + $0x38] sm:$0xff]
        %v2364 = vld [vmem:[#allocation3 + $0x40] sm:$0xff]
        %v2365 = vld [vmem:[#allocation3 + $0x48] sm:$0xff]
        %v2366 = vld [vmem:[#allocation3 + $0x50] sm:$0xff]
        %v2367 = vld [vmem:[#allocation3 + $0x58] sm:$0xff]
        %v2368 = vld [vmem:[#allocation3 + $0x60] sm:$0xff]
        %v2369 = vld [vmem:[#allocation3 + $0x68] sm:$0xff]
        %v2370 = vld [vmem:[#allocation3 + $0x70] sm:$0xff]
        %v2371 = vld [vmem:[#allocation3 + $0x78] sm:$0xff]
        %v2372 = vld [vmem:[#allocation3 + $0x80] sm:$0xff]
        %v2373 = vld [vmem:[#allocation3 + $0x88] sm:$0xff]
        %v2374 = vld [vmem:[#allocation3 + $0x90] sm:$0xff]
        %v2375 = vld [vmem:[#allocation3 + $0x98] sm:$0xff]
        %v2376 = vld [vmem:[#allocation3 + $0xa0] sm:$0xff]
        %v2377 = vld [vmem:[#allocation3 + $0xa8] sm:$0xff]
        %v2378 = vld [vmem:[#allocation3 + $0xb0] sm:$0xff]
        %v2379 = vld [vmem:[#allocation3 + $0xb8] sm:$0xff]
        %v2380 = vld [vmem:[#allocation3 + $0xc0] sm:$0xff]
        %v2381 = vld [vmem:[#allocation3 + $0xc8] sm:$0xff]
        %v2382 = vld [vmem:[#allocation3 + $0xd0] sm:$0xff]
        %v2383 = vld [vmem:[#allocation3 + $0xd8] sm:$0xff]
        %v2384 = vld [vmem:[#allocation3 + $0xe0] sm:$0xff]
        %v2385 = vld [vmem:[#allocation3 + $0xe8] sm:$0xff]
        %v2386 = vld [vmem:[#allocation3 + $0xf0] sm:$0xff]
        %v2387 = vld [vmem:[#allocation3 + $0xf8] sm:$0xff]
        %v2388 = vld [vmem:[#allocation3 + $0x100] sm:$0xff]
        %v2389 = vld [vmem:[#allocation3 + $0x108] sm:$0xff]
        %v2390 = vld [vmem:[#allocation3 + $0x110] sm:$0xff]
        %v2391 = vld [vmem:[#allocation3 + $0x118] sm:$0xff]
        %v2392 = vld [vmem:[#allocation3 + $0x120] sm:$0xff]
        %v2393 = vld [vmem:[#allocation3 + $0x128] sm:$0xff]
        %v2394 = vld [vmem:[#allocation3 + $0x130] sm:$0xff]
        %v2395 = vld [vmem:[#allocation3 + $0x138] sm:$0xff]
        %v2396 = vld [vmem:[#allocation3 + $0x140] sm:$0xff]
        %v2397 = vld [vmem:[#allocation3 + $0x148] sm:$0xff]
        %v2398 = vld [vmem:[#allocation3 + $0x150] sm:$0xff]
        %v2399 = vld [vmem:[#allocation3 + $0x158] sm:$0xff]
        %v2400 = vld [vmem:[#allocation3 + $0x160] sm:$0xff]
        %v2401 = vld [vmem:[#allocation3 + $0x168] sm:$0xff]
        %v2402 = vld [vmem:[#allocation3 + $0x170] sm:$0xff]
        %v2403 = vld [vmem:[#allocation3 + $0x178] sm:$0xff]
        %v2404 = vld [vmem:[#allocation3 + $0x180] sm:$0xff]
        %v2405 = vld [vmem:[#allocation3 + $0x188] sm:$0xff]
        %v2406 = vld [vmem:[#allocation3 + $0x190] sm:$0xff]
        %v2407 = vld [vmem:[#allocation3 + $0x198] sm:$0xff]
        %v2408 = vld [vmem:[#allocation3 + $0x1a0] sm:$0xff]
        %v2409 = vld [vmem:[#allocation3 + $0x1a8] sm:$0xff]
        %v2410 = vld [vmem:[#allocation3 + $0x1b0] sm:$0xff]
        %v2411 = vld [vmem:[#allocation3 + $0x1b8] sm:$0xff]
        %v2412 = vld [vmem:[#allocation3 + $0x1c0] sm:$0xff]
        %v2413 = vld [vmem:[#allocation3 + $0x1c8] sm:$0xff]
        %v2414 = vld [vmem:[#allocation3 + $0x1d0] sm:$0xff]
        %v2415 = vld [vmem:[#allocation3 + $0x1d8] sm:$0xff]
        %v2416 = vld [vmem:[#allocation3 + $0x1e0] sm:$0xff]
        %v2417 = vld [vmem:[#allocation3 + $0x1e8] sm:$0xff]
        %v2418 = vld [vmem:[#allocation3 + $0x1f0] sm:$0xff]
        %v2419 = vld [vmem:[#allocation3 + $0x1f8] sm:$0xff]
        %v2420 = vld [vmem:[#allocation3 + $0x200] sm:$0xff]
        %v2421 = vld [vmem:[#allocation3 + $0x208] sm:$0xff]
        %v2422 = vld [vmem:[#allocation3 + $0x210] sm:$0xff]
        %v2423 = vld [vmem:[#allocation3 + $0x218] sm:$0xff]
        %v2424 = vld [vmem:[#allocation3 + $0x220] sm:$0xff]
        %v2425 = vld [vmem:[#allocation3 + $0x228] sm:$0xff]
        %v2426 = vld [vmem:[#allocation3 + $0x230] sm:$0xff]
        %v2427 = vld [vmem:[#allocation3 + $0x238] sm:$0xff]
        %2429 = vset.pattern.permute.xlu0 0
        %2430 = vperm.xlu0 %2429, %v1712
        %v2431 = vpop.permute.xlu0 %2430
        %2434 = vset.pattern.permute.xlu0 0
        %2435 = vperm.xlu0 %2434, %v1713
        %v2436 = vpop.permute.xlu0 %2435
        %2439 = vset.pattern.permute.xlu0 0
        %2440 = vperm.xlu0 %2439, %v1714
        %v2441 = vpop.permute.xlu0 %2440
        %2444 = vset.pattern.permute.xlu0 0
        %2445 = vperm.xlu0 %2444, %v1715
        %v2446 = vpop.permute.xlu0 %2445
        %v2449 = vsel %vm1447, %v1701, 0
        %v2452 = vsel %vm1447, %v1704, 0
        %v2455 = vsel %vm1447, %v1707, 0
        %v2458 = vsel %vm1447, %v1710, 0
        %2460 = vmatprep.subr.mxu0 %v2357
        %2461 = vmatpush1.msra.mxu0 %v2356
        %2462 = vmatprep.subr.mxu0 %v2359
        %2463 = vmatpush1.msra.mxu0 %v2358
        %2464 = vmatprep.subr.mxu0 %v2361
        %2465 = vmatpush1.msra.mxu0 %v2360
        %2466 = vmatprep.subr.mxu0 %v2363
        %2467 = vmatpush1.msra.mxu0 %v2362
        %2468 = vmatprep.subr.mxu0 %v2365
        %2469 = vmatpush1.msra.mxu0 %v2364
        %2470 = vmatprep.subr.mxu0 %v2367
        %2471 = vmatpush1.msra.mxu0 %v2366
        %2472 = vmatprep.subr.mxu0 %v2369
        %2473 = vmatpush1.msra.mxu0 %v2368
        %2474 = vmatprep.subr.mxu0 %v2371
        %2475 = vmatpush1.msra.mxu0 %v2370
        %2476 = vmatprep.subr.mxu0 %v2373
        %2477 = vmatpush1.msra.mxu0 %v2372
        %2478 = vmatprep.subr.mxu0 %v2375
        %2479 = vmatpush1.msra.mxu0 %v2374
        %2480 = vmatprep.subr.mxu0 %v2377
        %2481 = vmatpush1.msra.mxu0 %v2376
        %2482 = vmatprep.subr.mxu0 %v2379
        %2483 = vmatpush1.msra.mxu0 %v2378
        %2484 = vmatprep.subr.mxu0 %v2381
        %2485 = vmatpush1.msra.mxu0 %v2380
        %2486 = vmatprep.subr.mxu0 %v2383
        %2487 = vmatpush1.msra.mxu0 %v2382
        %2488 = vmatprep.subr.mxu0 %v2385
        %2489 = vmatpush1.msra.mxu0 %v2384
        %2490 = vmatprep.subr.mxu0 %v2387
        %2491 = vmatpush1.msra.mxu0 %v2386
        %2492 = vmatprep.subr.mxu0 %v2389
        %2493 = vmatpush1.msra.mxu0 %v2388
        %2494 = vmatprep.subr.mxu0 %v2391
        %2495 = vmatpush1.msra.mxu0 %v2390
        %2496 = vmatprep.subr.mxu0 %v2393
        %2497 = vmatpush1.msra.mxu0 %v2392
        %2498 = vmatprep.subr.mxu0 %v2395
        %2499 = vmatpush1.msra.mxu0 %v2394
        %2500 = vmatprep.subr.mxu0 %v2397
        %2501 = vmatpush1.msra.mxu0 %v2396
        %2502 = vmatprep.subr.mxu0 %v2399
        %2503 = vmatpush1.msra.mxu0 %v2398
        %2504 = vmatprep.subr.mxu0 %v2401
        %2505 = vmatpush1.msra.mxu0 %v2400
        %2506 = vmatprep.subr.mxu0 %v2403
        %2507 = vmatpush1.msra.mxu0 %v2402
        %2508 = vmatprep.subr.mxu0 %v2405
        %2509 = vmatpush1.msra.mxu0 %v2404
        %2510 = vmatprep.subr.mxu0 %v2407
        %2511 = vmatpush1.msra.mxu0 %v2406
        %2512 = vmatprep.subr.mxu0 %v2409
        %2513 = vmatpush1.msra.mxu0 %v2408
        %2514 = vmatprep.subr.mxu0 %v2411
        %2515 = vmatpush1.msra.mxu0 %v2410
        %2516 = vmatprep.subr.mxu0 %v2413
        %2517 = vmatpush1.msra.mxu0 %v2412
        %2518 = vmatprep.subr.mxu0 %v2415
        %2519 = vmatpush1.msra.mxu0 %v2414
        %2520 = vmatprep.subr.mxu0 %v2417
        %2521 = vmatpush1.msra.mxu0 %v2416
        %2522 = vmatprep.subr.mxu0 %v2419
        %2523 = vmatpush1.msra.mxu0 %v2418
        %2524 = vmatprep.mubr.f32.mxu0 %v1700
        %2525 = vmatmul.mubr.f32.gmra.mrb[0].mxu0 %v1699
        %v2526 = vpop.f32.mrb[0].mxu0
        %v2527 = vadd.f32 %v2431, %v2526
        %v2528 = vpop.f32.mrb[0].mxu0
        %v2529 = vadd.f32 %v2431, %v2528
        %2530 = vmatprep.mubr.f32.mxu0 %v1703
        %2531 = vmatmul.mubr.f32.gmra.mrb[0].mxu0 %v1702
        %v2532 = vpop.f32.mrb[0].mxu0
        %v2533 = vadd.f32 %v2436, %v2532
        %v2534 = vpop.f32.mrb[0].mxu0
        %v2535 = vadd.f32 %v2436, %v2534
        %2536 = vmatprep.mubr.f32.mxu0 %v1706
        %2537 = vmatmul.mubr.f32.gmra.mrb[0].mxu0 %v1705
        %v2538 = vpop.f32.mrb[0].mxu0
        %v2539 = vadd.f32 %v2441, %v2538
        %v2540 = vpop.f32.mrb[0].mxu0
        %v2541 = vadd.f32 %v2441, %v2540
        %2542 = vmatprep.mubr.f32.mxu0 %v1709
        %2543 = vmatmul.mubr.f32.gmra.mrb[0].mxu0 %v1708
        %v2544 = vpop.f32.mrb[0].mxu0
        %v2545 = vadd.f32 %v2446, %v2544
        %v2546 = vpop.f32.mrb[0].mxu0
        %v2547 = vadd.f32 %v2446, %v2546
        %2548 = vdwg.mxu0
        %2549 = vmatprep.subr.mxu0 %v2421
        %2550 = vmatpush1.msra.mxu0 %v2420
        %2551 = vmatprep.subr.mxu0 %v2423
        %2552 = vmatpush1.msra.mxu0 %v2422
        %2553 = vmatprep.subr.mxu0 %v2425
        %2554 = vmatpush1.msra.mxu0 %v2424
        %2555 = vmatprep.subr.mxu0 %v2427
        %2556 = vmatpush1.msra.mxu0 %v2426
        %2557 = vmatprep.subr.mxu0 0.0
        %2558 = vmatpush1.msra.mxu0 0.0
        %2559 = vmatprep.subr.mxu0 0.0
        %2560 = vmatpush1.msra.mxu0 0.0
        %2561 = vmatprep.subr.mxu0 0.0
        %2562 = vmatpush1.msra.mxu0 0.0
        %2563 = vmatprep.subr.mxu0 0.0
        %2564 = vmatpush1.msra.mxu0 0.0
        %2565 = vmatprep.subr.mxu0 0.0
        %2566 = vmatpush1.msra.mxu0 0.0
        %2567 = vmatprep.subr.mxu0 0.0
        %2568 = vmatpush1.msra.mxu0 0.0
        %2569 = vmatprep.subr.mxu0 0.0
        %2570 = vmatpush1.msra.mxu0 0.0
        %2571 = vmatprep.subr.mxu0 0.0
        %2572 = vmatpush1.msra.mxu0 0.0
        %2573 = vmatprep.subr.mxu0 0.0
        %2574 = vmatpush1.msra.mxu0 0.0
        %2575 = vmatprep.subr.mxu0 0.0
        %2576 = vmatpush1.msra.mxu0 0.0
        %2577 = vmatprep.subr.mxu0 0.0
        %2578 = vmatpush1.msra.mxu0 0.0
        %2579 = vmatprep.subr.mxu0 0.0
        %2580 = vmatpush1.msra.mxu0 0.0
        %2581 = vmatprep.subr.mxu0 0.0
        %2582 = vmatpush1.msra.mxu0 0.0
        %2583 = vmatprep.subr.mxu0 0.0
        %2584 = vmatpush1.msra.mxu0 0.0
        %2585 = vmatprep.subr.mxu0 0.0
        %2586 = vmatpush1.msra.mxu0 0.0
        %2587 = vmatprep.subr.mxu0 0.0
        %2588 = vmatpush1.msra.mxu0 0.0
        %2589 = vmatprep.subr.mxu0 0.0
        %2590 = vmatpush1.msra.mxu0 0.0
        %2591 = vmatprep.subr.mxu0 0.0
        %2592 = vmatpush1.msra.mxu0 0.0
        %2593 = vmatprep.subr.mxu0 0.0
        %2594 = vmatpush1.msra.mxu0 0.0
        %2595 = vmatprep.subr.mxu0 0.0
        %2596 = vmatpush1.msra.mxu0 0.0
        %2597 = vmatprep.subr.mxu0 0.0
        %2598 = vmatpush1.msra.mxu0 0.0
        %2599 = vmatprep.subr.mxu0 0.0
        %2600 = vmatpush1.msra.mxu0 0.0
        %2601 = vmatprep.subr.mxu0 0.0
        %2602 = vmatpush1.msra.mxu0 0.0
        %2603 = vmatprep.subr.mxu0 0.0
        %2604 = vmatpush1.msra.mxu0 0.0
        %2605 = vmatprep.subr.mxu0 0.0
        %2606 = vmatpush1.msra.mxu0 0.0
        %2607 = vmatprep.subr.mxu0 0.0
        %2608 = vmatpush1.msra.mxu0 0.0
        %2609 = vmatprep.subr.mxu0 0.0
        %2610 = vmatpush1.msra.mxu0 0.0
        %2611 = vmatprep.subr.mxu0 0.0
        %2612 = vmatpush1.msra.mxu0 0.0
        %2613 = vmatprep.mubr.f32.mxu0 0.0
        %2614 = vmatmul.mubr.f32.gmra.mrb[0].mxu0 %v2449
        %v2615 = vpop.f32.mrb[0].mxu0
        %v2616 = vadd.f32 %v2527, %v2615
        %v2617 = vpop.f32.mrb[0].mxu0
        %v2618 = vadd.f32 %v2529, %v2617
        %2619 = vmatprep.mubr.f32.mxu0 0.0
        %2620 = vmatmul.mubr.f32.gmra.mrb[0].mxu0 %v2452
        %v2621 = vpop.f32.mrb[0].mxu0
        %v2622 = vadd.f32 %v2533, %v2621
        %v2623 = vpop.f32.mrb[0].mxu0
        %v2624 = vadd.f32 %v2535, %v2623
        %2625 = vmatprep.mubr.f32.mxu0 0.0
        %2626 = vmatmul.mubr.f32.gmra.mrb[0].mxu0 %v2455
        %v2627 = vpop.f32.mrb[0].mxu0
        %v2628 = vadd.f32 %v2539, %v2627
        %v2629 = vpop.f32.mrb[0].mxu0
        %v2630 = vadd.f32 %v2541, %v2629
        %2631 = vmatprep.mubr.f32.mxu0 0.0
        %2632 = vmatmul.mubr.f32.gmra.mrb[0].mxu0 %v2458
        %v2633 = vpop.f32.mrb[0].mxu0
        %v2634 = vadd.f32 %v2545, %v2633
        %v2635 = vpop.f32.mrb[0].mxu0
        %v2636 = vadd.f32 %v2547, %v2635
        %2637 = vdwg.mxu0
        %v2638 = vadd.f32 %v639, %v2616
        %v2639 = vadd.f32 %v640, %v2618
        %v2640 = vadd.f32 %v641, %v2622
        %v2641 = vadd.f32 %v642, %v2624
        %v2642 = vadd.f32 %v643, %v2628
        %v2643 = vadd.f32 %v644, %v2630
        %v2644 = vadd.f32 %v645, %v2634
        %v2645 = vadd.f32 %v646, %v2636
        %2654 = vrot.lane.b32.xlu0 %v2638, 17
        %v2655 = vpop.permute.xlu0 %2654
        %2656 = vrot.lane.b32.xlu0 %v2639, 17
        %v2657 = vpop.permute.xlu0 %2656
        %2658 = vrot.lane.b32.xlu0 %v2640, 17
        %v2659 = vpop.permute.xlu0 %2658
        %2660 = vrot.lane.b32.xlu0 %v2641, 17
        %v2661 = vpop.permute.xlu0 %2660
        %2662 = vrot.lane.b32.xlu0 %v2642, 17
        %v2663 = vpop.permute.xlu0 %2662
        %2664 = vrot.lane.b32.xlu0 %v2643, 17
        %v2665 = vpop.permute.xlu0 %2664
        %2666 = vrot.lane.b32.xlu0 %v2644, 17
        %v2667 = vpop.permute.xlu0 %2666
        %2668 = vrot.lane.b32.xlu0 %v2645, 17
        %v2669 = vpop.permute.xlu0 %2668
        %v2670 = vsel %vm290, %v2655, %v2657
        %v2671 = vsel %vm290, %v2659, %v2661
        %v2672 = vsel %vm290, %v2663, %v2665
        %v2673 = vsel %vm290, %v2667, %v2669
        %2686 = vst.msk [vmem:[#allocation2] sm:$0xff] %vm295, %v2655
        %2687 = vst [vmem:[#allocation2 + $0x8] sm:$0xff] %v2670
        %2688 = vst.msk [vmem:[#allocation2 + $0x10] sm:$0xff] %vm290, %v2657
        %2689 = vst.msk [vmem:[#allocation2 + $0x18] sm:$0xff] %vm295, %v2659
        %2690 = vst [vmem:[#allocation2 + $0x20] sm:$0xff] %v2671
        %2691 = vst.msk [vmem:[#allocation2 + $0x28] sm:$0xff] %vm290, %v2661
        %2692 = vst.msk [vmem:[#allocation2 + $0x30] sm:$0xff] %vm295, %v2663
        %2693 = vst [vmem:[#allocation2 + $0x38] sm:$0xff] %v2672
        %2694 = vst.msk [vmem:[#allocation2 + $0x40] sm:$0xff] %vm290, %v2665
        %2695 = vst.msk [vmem:[#allocation2 + $0x48] sm:$0xff] %vm295, %v2667
        %2696 = vst [vmem:[#allocation2 + $0x50] sm:$0xff] %v2673
        %2697 = vst.msk [vmem:[#allocation2 + $0x58] sm:$0xff] %vm290, %v2669
        %s2698 = scalar_lea.vmem [#allocation4], 192
        %v2699 = vld [vmem:[%s2698] sm:$0xff]
        %v2700 = vld [vmem:[%s2698 + $0x8] sm:$0xff]
        %v2701 = vld [vmem:[%s2698 + $0x10] sm:$0xff]
        %v2702 = vld [vmem:[%s2698 + $0x18] sm:$0xff]
        %v2703 = vld [vmem:[%s2698 + $0x20] sm:$0xff]
        %v2704 = vld [vmem:[%s2698 + $0x28] sm:$0xff]
        %v2705 = vld [vmem:[%s2698 + $0x30] sm:$0xff]
        %v2706 = vld [vmem:[%s2698 + $0x38] sm:$0xff]
        %v2707 = vld [vmem:[%s2698 + $0x40] sm:$0xff]
        %v2708 = vld [vmem:[%s2698 + $0x48] sm:$0xff]
        %v2709 = vld [vmem:[%s2698 + $0x50] sm:$0xff]
        %v2710 = vld [vmem:[%s2698 + $0x58] sm:$0xff]
        %s2711 = scalar_lea.vmem %s4, 64
        %v2712 = vld [vmem:[%s2711] sm:$0xff]
        %v2713 = vld [vmem:[%s2711 + $0x8] sm:$0xff]
        %v2714 = vld [vmem:[%s2711 + $0x10] sm:$0xff]
        %v2715 = vld [vmem:[%s2711 + $0x18] sm:$0xff]
        %v2716 = vld [vmem:[#allocation2] sm:$0xff]
        %v2717 = vld [vmem:[#allocation2 + $0x8] sm:$0xff]
        %v2718 = vld [vmem:[#allocation2 + $0x18] sm:$0xff]
        %v2719 = vld [vmem:[#allocation2 + $0x20] sm:$0xff]
        %v2720 = vld [vmem:[#allocation2 + $0x30] sm:$0xff]
        %v2721 = vld [vmem:[#allocation2 + $0x38] sm:$0xff]
        %v2722 = vld [vmem:[#allocation2 + $0x48] sm:$0xff]
        %v2723 = vld [vmem:[#allocation2 + $0x50] sm:$0xff]
        %v2724 = vsel %vm311, %v2716, 0.0
        %v2725 = vsel %vm312, %v2717, 0.0
        %v2726 = vsel %vm311, %v2718, 0.0
        %v2727 = vsel %vm312, %v2719, 0.0
        %v2728 = vsel %vm311, %v2720, 0.0
        %v2729 = vsel %vm312, %v2721, 0.0
        %v2730 = vsel %vm311, %v2722, 0.0
        %v2731 = vsel %vm312, %v2723, 0.0
        %2732 = vst [vmem:[#allocation3] sm:$0xff] %v2724
        %2733 = vst [vmem:[#allocation3 + $0x8] sm:$0xff] %v2725
        %2734 = vst [vmem:[#allocation3 + $0x10] sm:$0xff] %v2726
        %2735 = vst [vmem:[#allocation3 + $0x18] sm:$0xff] %v2727
        %2736 = vst [vmem:[#allocation3 + $0x20] sm:$0xff] %v2728
        %2737 = vst [vmem:[#allocation3 + $0x28] sm:$0xff] %v2729
        %2738 = vst [vmem:[#allocation3 + $0x30] sm:$0xff] %v2730
        %2739 = vst [vmem:[#allocation3 + $0x38] sm:$0xff] %v2731
        %v2740 = vld [vmem:[#allocation2] sm:$0xff]
        %v2741 = vld [vmem:[#allocation2 + $0x8] sm:$0xff]
        %v2742 = vld [vmem:[#allocation2 + $0x10] sm:$0xff]
        %v2743 = vld [vmem:[#allocation2 + $0x18] sm:$0xff]
        %v2744 = vld [vmem:[#allocation2 + $0x20] sm:$0xff]
        %v2745 = vld [vmem:[#allocation2 + $0x28] sm:$0xff]
        %v2746 = vld [vmem:[#allocation2 + $0x30] sm:$0xff]
        %v2747 = vld [vmem:[#allocation2 + $0x38] sm:$0xff]
        %v2748 = vld [vmem:[#allocation2 + $0x40] sm:$0xff]
        %v2749 = vld [vmem:[#allocation2 + $0x48] sm:$0xff]
        %v2750 = vld [vmem:[#allocation2 + $0x50] sm:$0xff]
        %v2751 = vld [vmem:[#allocation2 + $0x58] sm:$0xff]
        %2764 = vrot.lane.b32.xlu0 %v2740, 127
        %v2765 = vpop.permute.xlu0 %2764
        %2766 = vrot.lane.b32.xlu0 %v2741, 127
        %v2767 = vpop.permute.xlu0 %2766
        %2768 = vrot.lane.b32.xlu0 %v2742, 127
        %v2769 = vpop.permute.xlu0 %2768
        %2770 = vrot.lane.b32.xlu0 %v2743, 127
        %v2771 = vpop.permute.xlu0 %2770
        %2772 = vrot.lane.b32.xlu0 %v2744, 127
        %v2773 = vpop.permute.xlu0 %2772
        %2774 = vrot.lane.b32.xlu0 %v2745, 127
        %v2775 = vpop.permute.xlu0 %2774
        %2776 = vrot.lane.b32.xlu0 %v2746, 127
        %v2777 = vpop.permute.xlu0 %2776
        %2778 = vrot.lane.b32.xlu0 %v2747, 127
        %v2779 = vpop.permute.xlu0 %2778
        %2780 = vrot.lane.b32.xlu0 %v2748, 127
        %v2781 = vpop.permute.xlu0 %2780
        %2782 = vrot.lane.b32.xlu0 %v2749, 127
        %v2783 = vpop.permute.xlu0 %2782
        %2784 = vrot.lane.b32.xlu0 %v2750, 127
        %v2785 = vpop.permute.xlu0 %2784
        %2786 = vrot.lane.b32.xlu0 %v2751, 127
        %v2787 = vpop.permute.xlu0 %2786
        %v2788 = vsel %vm329, %v2765, %v2767
        %v2789 = vsel %vm329, %v2767, %v2769
        %v2790 = vsel %vm329, %v2771, %v2773
        %v2791 = vsel %vm329, %v2773, %v2775
        %v2792 = vsel %vm329, %v2777, %v2779
        %v2793 = vsel %vm329, %v2779, %v2781
        %v2794 = vsel %vm329, %v2783, %v2785
        %v2795 = vsel %vm329, %v2785, %v2787
        %2804 = vst [vmem:[#allocation3 + $0x40] sm:$0xff] %v2788
        %2805 = vst [vmem:[#allocation3 + $0x48] sm:$0xff] %v2789
        %2806 = vst [vmem:[#allocation3 + $0x50] sm:$0xff] %v2790
        %2807 = vst [vmem:[#allocation3 + $0x58] sm:$0xff] %v2791
        %2808 = vst [vmem:[#allocation3 + $0x60] sm:$0xff] %v2792
        %2809 = vst [vmem:[#allocation3 + $0x68] sm:$0xff] %v2793
        %2810 = vst [vmem:[#allocation3 + $0x70] sm:$0xff] %v2794
        %2811 = vst [vmem:[#allocation3 + $0x78] sm:$0xff] %v2795
        %v2812 = vld [vmem:[#allocation2] sm:$0xff]
        %v2813 = vld [vmem:[#allocation2 + $0x8] sm:$0xff]
        %v2814 = vld [vmem:[#allocation2 + $0x10] sm:$0xff]
        %v2815 = vld [vmem:[#allocation2 + $0x18] sm:$0xff]
        %v2816 = vld [vmem:[#allocation2 + $0x20] sm:$0xff]
        %v2817 = vld [vmem:[#allocation2 + $0x28] sm:$0xff]
        %v2818 = vld [vmem:[#allocation2 + $0x30] sm:$0xff]
        %v2819 = vld [vmem:[#allocation2 + $0x38] sm:$0xff]
        %v2820 = vld [vmem:[#allocation2 + $0x40] sm:$0xff]
        %v2821 = vld [vmem:[#allocation2 + $0x48] sm:$0xff]
        %v2822 = vld [vmem:[#allocation2 + $0x50] sm:$0xff]
        %v2823 = vld [vmem:[#allocation2 + $0x58] sm:$0xff]
        %2836 = vrot.lane.b32.xlu0 %v2812, 126
        %v2837 = vpop.permute.xlu0 %2836
        %2838 = vrot.lane.b32.xlu0 %v2813, 126
        %v2839 = vpop.permute.xlu0 %2838
        %2840 = vrot.lane.b32.xlu0 %v2814, 126
        %v2841 = vpop.permute.xlu0 %2840
        %2842 = vrot.lane.b32.xlu0 %v2815, 126
        %v2843 = vpop.permute.xlu0 %2842
        %2844 = vrot.lane.b32.xlu0 %v2816, 126
        %v2845 = vpop.permute.xlu0 %2844
        %2846 = vrot.lane.b32.xlu0 %v2817, 126
        %v2847 = vpop.permute.xlu0 %2846
        %2848 = vrot.lane.b32.xlu0 %v2818, 126
        %v2849 = vpop.permute.xlu0 %2848
        %2850 = vrot.lane.b32.xlu0 %v2819, 126
        %v2851 = vpop.permute.xlu0 %2850
        %2852 = vrot.lane.b32.xlu0 %v2820, 126
        %v2853 = vpop.permute.xlu0 %2852
        %2854 = vrot.lane.b32.xlu0 %v2821, 126
        %v2855 = vpop.permute.xlu0 %2854
        %2856 = vrot.lane.b32.xlu0 %v2822, 126
        %v2857 = vpop.permute.xlu0 %2856
        %2858 = vrot.lane.b32.xlu0 %v2823, 126
        %v2859 = vpop.permute.xlu0 %2858
        %v2860 = vsel %vm352, %v2837, %v2839
        %v2861 = vsel %vm352, %v2839, %v2841
        %v2862 = vsel %vm352, %v2843, %v2845
        %v2863 = vsel %vm352, %v2845, %v2847
        %v2864 = vsel %vm352, %v2849, %v2851
        %v2865 = vsel %vm352, %v2851, %v2853
        %v2866 = vsel %vm352, %v2855, %v2857
        %v2867 = vsel %vm352, %v2857, %v2859
        %v2876 = vsel %vm341, %v2860, 0.0
        %v2877 = vsel %vm342, %v2861, 0.0
        %v2878 = vsel %vm341, %v2862, 0.0
        %v2879 = vsel %vm342, %v2863, 0.0
        %v2880 = vsel %vm341, %v2864, 0.0
        %v2881 = vsel %vm342, %v2865, 0.0
        %v2882 = vsel %vm341, %v2866, 0.0
        %v2883 = vsel %vm342, %v2867, 0.0
        %2884 = vst [vmem:[#allocation3 + $0x80] sm:$0xff] %v2876
        %2885 = vst [vmem:[#allocation3 + $0x88] sm:$0xff] %v2877
        %2886 = vst [vmem:[#allocation3 + $0x90] sm:$0xff] %v2878
        %2887 = vst [vmem:[#allocation3 + $0x98] sm:$0xff] %v2879
        %2888 = vst [vmem:[#allocation3 + $0xa0] sm:$0xff] %v2880
        %2889 = vst [vmem:[#allocation3 + $0xa8] sm:$0xff] %v2881
        %2890 = vst [vmem:[#allocation3 + $0xb0] sm:$0xff] %v2882
        %2891 = vst [vmem:[#allocation3 + $0xb8] sm:$0xff] %v2883
        %v2892 = vld [vmem:[#allocation2] sm:$0xff]
        %v2893 = vld [vmem:[#allocation2 + $0x8] sm:$0xff]
        %v2894 = vld [vmem:[#allocation2 + $0x10] sm:$0xff]
        %v2895 = vld [vmem:[#allocation2 + $0x18] sm:$0xff]
        %v2896 = vld [vmem:[#allocation2 + $0x20] sm:$0xff]
        %v2897 = vld [vmem:[#allocation2 + $0x28] sm:$0xff]
        %v2898 = vld [vmem:[#allocation2 + $0x30] sm:$0xff]
        %v2899 = vld [vmem:[#allocation2 + $0x38] sm:$0xff]
        %v2900 = vld [vmem:[#allocation2 + $0x40] sm:$0xff]
        %v2901 = vld [vmem:[#allocation2 + $0x48] sm:$0xff]
        %v2902 = vld [vmem:[#allocation2 + $0x50] sm:$0xff]
        %v2903 = vld [vmem:[#allocation2 + $0x58] sm:$0xff]
        %2916 = vrot.lane.b32.xlu0 %v2892, 112
        %v2917 = vpop.permute.xlu0 %2916
        %2918 = vrot.lane.b32.xlu0 %v2893, 112
        %v2919 = vpop.permute.xlu0 %2918
        %2920 = vrot.lane.b32.xlu0 %v2894, 112
        %v2921 = vpop.permute.xlu0 %2920
        %2922 = vrot.lane.b32.xlu0 %v2895, 112
        %v2923 = vpop.permute.xlu0 %2922
        %2924 = vrot.lane.b32.xlu0 %v2896, 112
        %v2925 = vpop.permute.xlu0 %2924
        %2926 = vrot.lane.b32.xlu0 %v2897, 112
        %v2927 = vpop.permute.xlu0 %2926
        %2928 = vrot.lane.b32.xlu0 %v2898, 112
        %v2929 = vpop.permute.xlu0 %2928
        %2930 = vrot.lane.b32.xlu0 %v2899, 112
        %v2931 = vpop.permute.xlu0 %2930
        %2932 = vrot.lane.b32.xlu0 %v2900, 112
        %v2933 = vpop.permute.xlu0 %2932
        %2934 = vrot.lane.b32.xlu0 %v2901, 112
        %v2935 = vpop.permute.xlu0 %2934
        %2936 = vrot.lane.b32.xlu0 %v2902, 112
        %v2937 = vpop.permute.xlu0 %2936
        %2938 = vrot.lane.b32.xlu0 %v2903, 112
        %v2939 = vpop.permute.xlu0 %2938
        %v2940 = vsel %vm373, %v2917, %v2919
        %v2941 = vsel %vm373, %v2919, %v2921
        %v2942 = vsel %vm373, %v2923, %v2925
        %v2943 = vsel %vm373, %v2925, %v2927
        %v2944 = vsel %vm373, %v2929, %v2931
        %v2945 = vsel %vm373, %v2931, %v2933
        %v2946 = vsel %vm373, %v2935, %v2937
        %v2947 = vsel %vm373, %v2937, %v2939
        %v2956 = vsel %vm311, %v2940, 0.0
        %v2957 = vsel %vm312, %v2941, 0.0
        %v2958 = vsel %vm311, %v2942, 0.0
        %v2959 = vsel %vm312, %v2943, 0.0
        %v2960 = vsel %vm311, %v2944, 0.0
        %v2961 = vsel %vm312, %v2945, 0.0
        %v2962 = vsel %vm311, %v2946, 0.0
        %v2963 = vsel %vm312, %v2947, 0.0
        %2964 = vst [vmem:[#allocation3 + $0xc0] sm:$0xff] %v2956
        %2965 = vst [vmem:[#allocation3 + $0xc8] sm:$0xff] %v2957
        %2966 = vst [vmem:[#allocation3 + $0xd0] sm:$0xff] %v2958
        %2967 = vst [vmem:[#allocation3 + $0xd8] sm:$0xff] %v2959
        %2968 = vst [vmem:[#allocation3 + $0xe0] sm:$0xff] %v2960
        %2969 = vst [vmem:[#allocation3 + $0xe8] sm:$0xff] %v2961
        %2970 = vst [vmem:[#allocation3 + $0xf0] sm:$0xff] %v2962
        %2971 = vst [vmem:[#allocation3 + $0xf8] sm:$0xff] %v2963
        %v2972 = vld [vmem:[#allocation2] sm:$0xff]
        %v2973 = vld [vmem:[#allocation2 + $0x8] sm:$0xff]
        %v2974 = vld [vmem:[#allocation2 + $0x10] sm:$0xff]
        %v2975 = vld [vmem:[#allocation2 + $0x18] sm:$0xff]
        %v2976 = vld [vmem:[#allocation2 + $0x20] sm:$0xff]
        %v2977 = vld [vmem:[#allocation2 + $0x28] sm:$0xff]
        %v2978 = vld [vmem:[#allocation2 + $0x30] sm:$0xff]
        %v2979 = vld [vmem:[#allocation2 + $0x38] sm:$0xff]
        %v2980 = vld [vmem:[#allocation2 + $0x40] sm:$0xff]
        %v2981 = vld [vmem:[#allocation2 + $0x48] sm:$0xff]
        %v2982 = vld [vmem:[#allocation2 + $0x50] sm:$0xff]
        %v2983 = vld [vmem:[#allocation2 + $0x58] sm:$0xff]
        %2996 = vrot.lane.b32.xlu0 %v2972, 111
        %v2997 = vpop.permute.xlu0 %2996
        %2998 = vrot.lane.b32.xlu0 %v2973, 111
        %v2999 = vpop.permute.xlu0 %2998
        %3000 = vrot.lane.b32.xlu0 %v2974, 111
        %v3001 = vpop.permute.xlu0 %3000
        %3002 = vrot.lane.b32.xlu0 %v2975, 111
        %v3003 = vpop.permute.xlu0 %3002
        %3004 = vrot.lane.b32.xlu0 %v2976, 111
        %v3005 = vpop.permute.xlu0 %3004
        %3006 = vrot.lane.b32.xlu0 %v2977, 111
        %v3007 = vpop.permute.xlu0 %3006
        %3008 = vrot.lane.b32.xlu0 %v2978, 111
        %v3009 = vpop.permute.xlu0 %3008
        %3010 = vrot.lane.b32.xlu0 %v2979, 111
        %v3011 = vpop.permute.xlu0 %3010
        %3012 = vrot.lane.b32.xlu0 %v2980, 111
        %v3013 = vpop.permute.xlu0 %3012
        %3014 = vrot.lane.b32.xlu0 %v2981, 111
        %v3015 = vpop.permute.xlu0 %3014
        %3016 = vrot.lane.b32.xlu0 %v2982, 111
        %v3017 = vpop.permute.xlu0 %3016
        %3018 = vrot.lane.b32.xlu0 %v2983, 111
        %v3019 = vpop.permute.xlu0 %3018
        %v3020 = vsel %vm394, %v2997, %v2999
        %v3021 = vsel %vm394, %v2999, %v3001
        %v3022 = vsel %vm394, %v3003, %v3005
        %v3023 = vsel %vm394, %v3005, %v3007
        %v3024 = vsel %vm394, %v3009, %v3011
        %v3025 = vsel %vm394, %v3011, %v3013
        %v3026 = vsel %vm394, %v3015, %v3017
        %v3027 = vsel %vm394, %v3017, %v3019
        %3036 = vst [vmem:[#allocation3 + $0x100] sm:$0xff] %v3020
        %3037 = vst [vmem:[#allocation3 + $0x108] sm:$0xff] %v3021
        %3038 = vst [vmem:[#allocation3 + $0x110] sm:$0xff] %v3022
        %3039 = vst [vmem:[#allocation3 + $0x118] sm:$0xff] %v3023
        %3040 = vst [vmem:[#allocation3 + $0x120] sm:$0xff] %v3024
        %3041 = vst [vmem:[#allocation3 + $0x128] sm:$0xff] %v3025
        %3042 = vst [vmem:[#allocation3 + $0x130] sm:$0xff] %v3026
        %3043 = vst [vmem:[#allocation3 + $0x138] sm:$0xff] %v3027
        %v3044 = vld [vmem:[#allocation2] sm:$0xff]
        %v3045 = vld [vmem:[#allocation2 + $0x8] sm:$0xff]
        %v3046 = vld [vmem:[#allocation2 + $0x10] sm:$0xff]
        %v3047 = vld [vmem:[#allocation2 + $0x18] sm:$0xff]
        %v3048 = vld [vmem:[#allocation2 + $0x20] sm:$0xff]
        %v3049 = vld [vmem:[#allocation2 + $0x28] sm:$0xff]
        %v3050 = vld [vmem:[#allocation2 + $0x30] sm:$0xff]
        %v3051 = vld [vmem:[#allocation2 + $0x38] sm:$0xff]
        %v3052 = vld [vmem:[#allocation2 + $0x40] sm:$0xff]
        %v3053 = vld [vmem:[#allocation2 + $0x48] sm:$0xff]
        %v3054 = vld [vmem:[#allocation2 + $0x50] sm:$0xff]
        %v3055 = vld [vmem:[#allocation2 + $0x58] sm:$0xff]
        %3068 = vrot.lane.b32.xlu0 %v3044, 110
        %v3069 = vpop.permute.xlu0 %3068
        %3070 = vrot.lane.b32.xlu0 %v3045, 110
        %v3071 = vpop.permute.xlu0 %3070
        %3072 = vrot.lane.b32.xlu0 %v3046, 110
        %v3073 = vpop.permute.xlu0 %3072
        %3074 = vrot.lane.b32.xlu0 %v3047, 110
        %v3075 = vpop.permute.xlu0 %3074
        %3076 = vrot.lane.b32.xlu0 %v3048, 110
        %v3077 = vpop.permute.xlu0 %3076
        %3078 = vrot.lane.b32.xlu0 %v3049, 110
        %v3079 = vpop.permute.xlu0 %3078
        %3080 = vrot.lane.b32.xlu0 %v3050, 110
        %v3081 = vpop.permute.xlu0 %3080
        %3082 = vrot.lane.b32.xlu0 %v3051, 110
        %v3083 = vpop.permute.xlu0 %3082
        %3084 = vrot.lane.b32.xlu0 %v3052, 110
        %v3085 = vpop.permute.xlu0 %3084
        %3086 = vrot.lane.b32.xlu0 %v3053, 110
        %v3087 = vpop.permute.xlu0 %3086
        %3088 = vrot.lane.b32.xlu0 %v3054, 110
        %v3089 = vpop.permute.xlu0 %3088
        %3090 = vrot.lane.b32.xlu0 %v3055, 110
        %v3091 = vpop.permute.xlu0 %3090
        %v3092 = vsel %vm413, %v3069, %v3071
        %v3093 = vsel %vm413, %v3071, %v3073
        %v3094 = vsel %vm413, %v3075, %v3077
        %v3095 = vsel %vm413, %v3077, %v3079
        %v3096 = vsel %vm413, %v3081, %v3083
        %v3097 = vsel %vm413, %v3083, %v3085
        %v3098 = vsel %vm413, %v3087, %v3089
        %v3099 = vsel %vm413, %v3089, %v3091
        %v3108 = vsel %vm341, %v3092, 0.0
        %v3109 = vsel %vm342, %v3093, 0.0
        %v3110 = vsel %vm341, %v3094, 0.0
        %v3111 = vsel %vm342, %v3095, 0.0
        %v3112 = vsel %vm341, %v3096, 0.0
        %v3113 = vsel %vm342, %v3097, 0.0
        %v3114 = vsel %vm341, %v3098, 0.0
        %v3115 = vsel %vm342, %v3099, 0.0
        %3116 = vst [vmem:[#allocation3 + $0x140] sm:$0xff] %v3108
        %3117 = vst [vmem:[#allocation3 + $0x148] sm:$0xff] %v3109
        %3118 = vst [vmem:[#allocation3 + $0x150] sm:$0xff] %v3110
        %3119 = vst [vmem:[#allocation3 + $0x158] sm:$0xff] %v3111
        %3120 = vst [vmem:[#allocation3 + $0x160] sm:$0xff] %v3112
        %3121 = vst [vmem:[#allocation3 + $0x168] sm:$0xff] %v3113
        %3122 = vst [vmem:[#allocation3 + $0x170] sm:$0xff] %v3114
        %3123 = vst [vmem:[#allocation3 + $0x178] sm:$0xff] %v3115
        %v3124 = vld [vmem:[#allocation2] sm:$0xff]
        %v3125 = vld [vmem:[#allocation2 + $0x8] sm:$0xff]
        %v3126 = vld [vmem:[#allocation2 + $0x10] sm:$0xff]
        %v3127 = vld [vmem:[#allocation2 + $0x18] sm:$0xff]
        %v3128 = vld [vmem:[#allocation2 + $0x20] sm:$0xff]
        %v3129 = vld [vmem:[#allocation2 + $0x28] sm:$0xff]
        %v3130 = vld [vmem:[#allocation2 + $0x30] sm:$0xff]
        %v3131 = vld [vmem:[#allocation2 + $0x38] sm:$0xff]
        %v3132 = vld [vmem:[#allocation2 + $0x40] sm:$0xff]
        %v3133 = vld [vmem:[#allocation2 + $0x48] sm:$0xff]
        %v3134 = vld [vmem:[#allocation2 + $0x50] sm:$0xff]
        %v3135 = vld [vmem:[#allocation2 + $0x58] sm:$0xff]
        %3148 = vrot.lane.b32.xlu0 %v3124, 96
        %v3149 = vpop.permute.xlu0 %3148
        %3150 = vrot.lane.b32.xlu0 %v3125, 96
        %v3151 = vpop.permute.xlu0 %3150
        %3152 = vrot.lane.b32.xlu0 %v3126, 96
        %v3153 = vpop.permute.xlu0 %3152
        %3154 = vrot.lane.b32.xlu0 %v3127, 96
        %v3155 = vpop.permute.xlu0 %3154
        %3156 = vrot.lane.b32.xlu0 %v3128, 96
        %v3157 = vpop.permute.xlu0 %3156
        %3158 = vrot.lane.b32.xlu0 %v3129, 96
        %v3159 = vpop.permute.xlu0 %3158
        %3160 = vrot.lane.b32.xlu0 %v3130, 96
        %v3161 = vpop.permute.xlu0 %3160
        %3162 = vrot.lane.b32.xlu0 %v3131, 96
        %v3163 = vpop.permute.xlu0 %3162
        %3164 = vrot.lane.b32.xlu0 %v3132, 96
        %v3165 = vpop.permute.xlu0 %3164
        %3166 = vrot.lane.b32.xlu0 %v3133, 96
        %v3167 = vpop.permute.xlu0 %3166
        %3168 = vrot.lane.b32.xlu0 %v3134, 96
        %v3169 = vpop.permute.xlu0 %3168
        %3170 = vrot.lane.b32.xlu0 %v3135, 96
        %v3171 = vpop.permute.xlu0 %3170
        %v3172 = vsel %vm434, %v3149, %v3151
        %v3173 = vsel %vm434, %v3151, %v3153
        %v3174 = vsel %vm434, %v3155, %v3157
        %v3175 = vsel %vm434, %v3157, %v3159
        %v3176 = vsel %vm434, %v3161, %v3163
        %v3177 = vsel %vm434, %v3163, %v3165
        %v3178 = vsel %vm434, %v3167, %v3169
        %v3179 = vsel %vm434, %v3169, %v3171
        %v3188 = vsel %vm311, %v3172, 0.0
        %v3189 = vsel %vm312, %v3173, 0.0
        %v3190 = vsel %vm311, %v3174, 0.0
        %v3191 = vsel %vm312, %v3175, 0.0
        %v3192 = vsel %vm311, %v3176, 0.0
        %v3193 = vsel %vm312, %v3177, 0.0
        %v3194 = vsel %vm311, %v3178, 0.0
        %v3195 = vsel %vm312, %v3179, 0.0
        %3196 = vst [vmem:[#allocation3 + $0x180] sm:$0xff] %v3188
        %3197 = vst [vmem:[#allocation3 + $0x188] sm:$0xff] %v3189
        %3198 = vst [vmem:[#allocation3 + $0x190] sm:$0xff] %v3190
        %3199 = vst [vmem:[#allocation3 + $0x198] sm:$0xff] %v3191
        %3200 = vst [vmem:[#allocation3 + $0x1a0] sm:$0xff] %v3192
        %3201 = vst [vmem:[#allocation3 + $0x1a8] sm:$0xff] %v3193
        %3202 = vst [vmem:[#allocation3 + $0x1b0] sm:$0xff] %v3194
        %3203 = vst [vmem:[#allocation3 + $0x1b8] sm:$0xff] %v3195
        %v3204 = vld [vmem:[#allocation2] sm:$0xff]
        %v3205 = vld [vmem:[#allocation2 + $0x8] sm:$0xff]
        %v3206 = vld [vmem:[#allocation2 + $0x10] sm:$0xff]
        %v3207 = vld [vmem:[#allocation2 + $0x18] sm:$0xff]
        %v3208 = vld [vmem:[#allocation2 + $0x20] sm:$0xff]
        %v3209 = vld [vmem:[#allocation2 + $0x28] sm:$0xff]
        %v3210 = vld [vmem:[#allocation2 + $0x30] sm:$0xff]
        %v3211 = vld [vmem:[#allocation2 + $0x38] sm:$0xff]
        %v3212 = vld [vmem:[#allocation2 + $0x40] sm:$0xff]
        %v3213 = vld [vmem:[#allocation2 + $0x48] sm:$0xff]
        %v3214 = vld [vmem:[#allocation2 + $0x50] sm:$0xff]
        %v3215 = vld [vmem:[#allocation2 + $0x58] sm:$0xff]
        %3228 = vrot.lane.b32.xlu0 %v3204, 95
        %v3229 = vpop.permute.xlu0 %3228
        %3230 = vrot.lane.b32.xlu0 %v3205, 95
        %v3231 = vpop.permute.xlu0 %3230
        %3232 = vrot.lane.b32.xlu0 %v3206, 95
        %v3233 = vpop.permute.xlu0 %3232
        %3234 = vrot.lane.b32.xlu0 %v3207, 95
        %v3235 = vpop.permute.xlu0 %3234
        %3236 = vrot.lane.b32.xlu0 %v3208, 95
        %v3237 = vpop.permute.xlu0 %3236
        %3238 = vrot.lane.b32.xlu0 %v3209, 95
        %v3239 = vpop.permute.xlu0 %3238
        %3240 = vrot.lane.b32.xlu0 %v3210, 95
        %v3241 = vpop.permute.xlu0 %3240
        %3242 = vrot.lane.b32.xlu0 %v3211, 95
        %v3243 = vpop.permute.xlu0 %3242
        %3244 = vrot.lane.b32.xlu0 %v3212, 95
        %v3245 = vpop.permute.xlu0 %3244
        %3246 = vrot.lane.b32.xlu0 %v3213, 95
        %v3247 = vpop.permute.xlu0 %3246
        %3248 = vrot.lane.b32.xlu0 %v3214, 95
        %v3249 = vpop.permute.xlu0 %3248
        %3250 = vrot.lane.b32.xlu0 %v3215, 95
        %v3251 = vpop.permute.xlu0 %3250
        %v3252 = vsel %vm455, %v3229, %v3231
        %v3253 = vsel %vm455, %v3231, %v3233
        %v3254 = vsel %vm455, %v3235, %v3237
        %v3255 = vsel %vm455, %v3237, %v3239
        %v3256 = vsel %vm455, %v3241, %v3243
        %v3257 = vsel %vm455, %v3243, %v3245
        %v3258 = vsel %vm455, %v3247, %v3249
        %v3259 = vsel %vm455, %v3249, %v3251
        %3268 = vst [vmem:[#allocation3 + $0x1c0] sm:$0xff] %v3252
        %3269 = vst [vmem:[#allocation3 + $0x1c8] sm:$0xff] %v3253
        %3270 = vst [vmem:[#allocation3 + $0x1d0] sm:$0xff] %v3254
        %3271 = vst [vmem:[#allocation3 + $0x1d8] sm:$0xff] %v3255
        %3272 = vst [vmem:[#allocation3 + $0x1e0] sm:$0xff] %v3256
        %3273 = vst [vmem:[#allocation3 + $0x1e8] sm:$0xff] %v3257
        %3274 = vst [vmem:[#allocation3 + $0x1f0] sm:$0xff] %v3258
        %3275 = vst [vmem:[#allocation3 + $0x1f8] sm:$0xff] %v3259
        %v3276 = vld [vmem:[#allocation2] sm:$0xff]
        %v3277 = vld [vmem:[#allocation2 + $0x8] sm:$0xff]
        %v3278 = vld [vmem:[#allocation2 + $0x10] sm:$0xff]
        %v3279 = vld [vmem:[#allocation2 + $0x18] sm:$0xff]
        %v3280 = vld [vmem:[#allocation2 + $0x20] sm:$0xff]
        %v3281 = vld [vmem:[#allocation2 + $0x28] sm:$0xff]
        %v3282 = vld [vmem:[#allocation2 + $0x30] sm:$0xff]
        %v3283 = vld [vmem:[#allocation2 + $0x38] sm:$0xff]
        %v3284 = vld [vmem:[#allocation2 + $0x40] sm:$0xff]
        %v3285 = vld [vmem:[#allocation2 + $0x48] sm:$0xff]
        %v3286 = vld [vmem:[#allocation2 + $0x50] sm:$0xff]
        %v3287 = vld [vmem:[#allocation2 + $0x58] sm:$0xff]
        %3300 = vrot.lane.b32.xlu0 %v3276, 94
        %v3301 = vpop.permute.xlu0 %3300
        %3302 = vrot.lane.b32.xlu0 %v3277, 94
        %v3303 = vpop.permute.xlu0 %3302
        %3304 = vrot.lane.b32.xlu0 %v3278, 94
        %v3305 = vpop.permute.xlu0 %3304
        %3306 = vrot.lane.b32.xlu0 %v3279, 94
        %v3307 = vpop.permute.xlu0 %3306
        %3308 = vrot.lane.b32.xlu0 %v3280, 94
        %v3309 = vpop.permute.xlu0 %3308
        %3310 = vrot.lane.b32.xlu0 %v3281, 94
        %v3311 = vpop.permute.xlu0 %3310
        %3312 = vrot.lane.b32.xlu0 %v3282, 94
        %v3313 = vpop.permute.xlu0 %3312
        %3314 = vrot.lane.b32.xlu0 %v3283, 94
        %v3315 = vpop.permute.xlu0 %3314
        %3316 = vrot.lane.b32.xlu0 %v3284, 94
        %v3317 = vpop.permute.xlu0 %3316
        %3318 = vrot.lane.b32.xlu0 %v3285, 94
        %v3319 = vpop.permute.xlu0 %3318
        %3320 = vrot.lane.b32.xlu0 %v3286, 94
        %v3321 = vpop.permute.xlu0 %3320
        %3322 = vrot.lane.b32.xlu0 %v3287, 94
        %v3323 = vpop.permute.xlu0 %3322
        %v3324 = vsel %vm474, %v3301, %v3303
        %v3325 = vsel %vm474, %v3303, %v3305
        %v3326 = vsel %vm474, %v3307, %v3309
        %v3327 = vsel %vm474, %v3309, %v3311
        %v3328 = vsel %vm474, %v3313, %v3315
        %v3329 = vsel %vm474, %v3315, %v3317
        %v3330 = vsel %vm474, %v3319, %v3321
        %v3331 = vsel %vm474, %v3321, %v3323
        %v3340 = vsel %vm341, %v3324, 0.0
        %v3341 = vsel %vm342, %v3325, 0.0
        %v3342 = vsel %vm341, %v3326, 0.0
        %v3343 = vsel %vm342, %v3327, 0.0
        %v3344 = vsel %vm341, %v3328, 0.0
        %v3345 = vsel %vm342, %v3329, 0.0
        %v3346 = vsel %vm341, %v3330, 0.0
        %v3347 = vsel %vm342, %v3331, 0.0
        %3348 = vst [vmem:[#allocation3 + $0x200] sm:$0xff] %v3340
        %3349 = vst [vmem:[#allocation3 + $0x208] sm:$0xff] %v3341
        %3350 = vst [vmem:[#allocation3 + $0x210] sm:$0xff] %v3342
        %3351 = vst [vmem:[#allocation3 + $0x218] sm:$0xff] %v3343
        %3352 = vst [vmem:[#allocation3 + $0x220] sm:$0xff] %v3344
        %3353 = vst [vmem:[#allocation3 + $0x228] sm:$0xff] %v3345
        %3354 = vst [vmem:[#allocation3 + $0x230] sm:$0xff] %v3346
        %3355 = vst [vmem:[#allocation3 + $0x238] sm:$0xff] %v3347
        %v3356 = vld [vmem:[#allocation3] sm:$0xff]
        %v3357 = vld [vmem:[#allocation3 + $0x8] sm:$0xff]
        %v3358 = vld [vmem:[#allocation3 + $0x10] sm:$0xff]
        %v3359 = vld [vmem:[#allocation3 + $0x18] sm:$0xff]
        %v3360 = vld [vmem:[#allocation3 + $0x20] sm:$0xff]
        %v3361 = vld [vmem:[#allocation3 + $0x28] sm:$0xff]
        %v3362 = vld [vmem:[#allocation3 + $0x30] sm:$0xff]
        %v3363 = vld [vmem:[#allocation3 + $0x38] sm:$0xff]
        %v3364 = vld [vmem:[#allocation3 + $0x40] sm:$0xff]
        %v3365 = vld [vmem:[#allocation3 + $0x48] sm:$0xff]
        %v3366 = vld [vmem:[#allocation3 + $0x50] sm:$0xff]
        %v3367 = vld [vmem:[#allocation3 + $0x58] sm:$0xff]
        %v3368 = vld [vmem:[#allocation3 + $0x60] sm:$0xff]
        %v3369 = vld [vmem:[#allocation3 + $0x68] sm:$0xff]
        %v3370 = vld [vmem:[#allocation3 + $0x70] sm:$0xff]
        %v3371 = vld [vmem:[#allocation3 + $0x78] sm:$0xff]
        %v3372 = vld [vmem:[#allocation3 + $0x80] sm:$0xff]
        %v3373 = vld [vmem:[#allocation3 + $0x88] sm:$0xff]
        %v3374 = vld [vmem:[#allocation3 + $0x90] sm:$0xff]
        %v3375 = vld [vmem:[#allocation3 + $0x98] sm:$0xff]
        %v3376 = vld [vmem:[#allocation3 + $0xa0] sm:$0xff]
        %v3377 = vld [vmem:[#allocation3 + $0xa8] sm:$0xff]
        %v3378 = vld [vmem:[#allocation3 + $0xb0] sm:$0xff]
        %v3379 = vld [vmem:[#allocation3 + $0xb8] sm:$0xff]
        %v3380 = vld [vmem:[#allocation3 + $0xc0] sm:$0xff]
        %v3381 = vld [vmem:[#allocation3 + $0xc8] sm:$0xff]
        %v3382 = vld [vmem:[#allocation3 + $0xd0] sm:$0xff]
        %v3383 = vld [vmem:[#allocation3 + $0xd8] sm:$0xff]
        %v3384 = vld [vmem:[#allocation3 + $0xe0] sm:$0xff]
        %v3385 = vld [vmem:[#allocation3 + $0xe8] sm:$0xff]
        %v3386 = vld [vmem:[#allocation3 + $0xf0] sm:$0xff]
        %v3387 = vld [vmem:[#allocation3 + $0xf8] sm:$0xff]
        %v3388 = vld [vmem:[#allocation3 + $0x100] sm:$0xff]
        %v3389 = vld [vmem:[#allocation3 + $0x108] sm:$0xff]
        %v3390 = vld [vmem:[#allocation3 + $0x110] sm:$0xff]
        %v3391 = vld [vmem:[#allocation3 + $0x118] sm:$0xff]
        %v3392 = vld [vmem:[#allocation3 + $0x120] sm:$0xff]
        %v3393 = vld [vmem:[#allocation3 + $0x128] sm:$0xff]
        %v3394 = vld [vmem:[#allocation3 + $0x130] sm:$0xff]
        %v3395 = vld [vmem:[#allocation3 + $0x138] sm:$0xff]
        %v3396 = vld [vmem:[#allocation3 + $0x140] sm:$0xff]
        %v3397 = vld [vmem:[#allocation3 + $0x148] sm:$0xff]
        %v3398 = vld [vmem:[#allocation3 + $0x150] sm:$0xff]
        %v3399 = vld [vmem:[#allocation3 + $0x158] sm:$0xff]
        %v3400 = vld [vmem:[#allocation3 + $0x160] sm:$0xff]
        %v3401 = vld [vmem:[#allocation3 + $0x168] sm:$0xff]
        %v3402 = vld [vmem:[#allocation3 + $0x170] sm:$0xff]
        %v3403 = vld [vmem:[#allocation3 + $0x178] sm:$0xff]
        %v3404 = vld [vmem:[#allocation3 + $0x180] sm:$0xff]
        %v3405 = vld [vmem:[#allocation3 + $0x188] sm:$0xff]
        %v3406 = vld [vmem:[#allocation3 + $0x190] sm:$0xff]
        %v3407 = vld [vmem:[#allocation3 + $0x198] sm:$0xff]
        %v3408 = vld [vmem:[#allocation3 + $0x1a0] sm:$0xff]
        %v3409 = vld [vmem:[#allocation3 + $0x1a8] sm:$0xff]
        %v3410 = vld [vmem:[#allocation3 + $0x1b0] sm:$0xff]
        %v3411 = vld [vmem:[#allocation3 + $0x1b8] sm:$0xff]
        %v3412 = vld [vmem:[#allocation3 + $0x1c0] sm:$0xff]
        %v3413 = vld [vmem:[#allocation3 + $0x1c8] sm:$0xff]
        %v3414 = vld [vmem:[#allocation3 + $0x1d0] sm:$0xff]
        %v3415 = vld [vmem:[#allocation3 + $0x1d8] sm:$0xff]
        %v3416 = vld [vmem:[#allocation3 + $0x1e0] sm:$0xff]
        %v3417 = vld [vmem:[#allocation3 + $0x1e8] sm:$0xff]
        %v3418 = vld [vmem:[#allocation3 + $0x1f0] sm:$0xff]
        %v3419 = vld [vmem:[#allocation3 + $0x1f8] sm:$0xff]
        %v3420 = vld [vmem:[#allocation3 + $0x200] sm:$0xff]
        %v3421 = vld [vmem:[#allocation3 + $0x208] sm:$0xff]
        %v3422 = vld [vmem:[#allocation3 + $0x210] sm:$0xff]
        %v3423 = vld [vmem:[#allocation3 + $0x218] sm:$0xff]
        %v3424 = vld [vmem:[#allocation3 + $0x220] sm:$0xff]
        %v3425 = vld [vmem:[#allocation3 + $0x228] sm:$0xff]
        %v3426 = vld [vmem:[#allocation3 + $0x230] sm:$0xff]
        %v3427 = vld [vmem:[#allocation3 + $0x238] sm:$0xff]
        %3429 = vset.pattern.permute.xlu0 0
        %3430 = vperm.xlu0 %3429, %v2712
        %v3431 = vpop.permute.xlu0 %3430
        %3434 = vset.pattern.permute.xlu0 0
        %3435 = vperm.xlu0 %3434, %v2713
        %v3436 = vpop.permute.xlu0 %3435
        %3439 = vset.pattern.permute.xlu0 0
        %3440 = vperm.xlu0 %3439, %v2714
        %v3441 = vpop.permute.xlu0 %3440
        %3444 = vset.pattern.permute.xlu0 0
        %3445 = vperm.xlu0 %3444, %v2715
        %v3446 = vpop.permute.xlu0 %3445
        %v3449 = vsel %vm1447, %v2701, 0
        %v3452 = vsel %vm1447, %v2704, 0
        %v3455 = vsel %vm1447, %v2707, 0
        %v3458 = vsel %vm1447, %v2710, 0
        %3460 = vmatprep.subr.mxu0 %v3357
        %3461 = vmatpush1.msra.mxu0 %v3356
        %3462 = vmatprep.subr.mxu0 %v3359
        %3463 = vmatpush1.msra.mxu0 %v3358
        %3464 = vmatprep.subr.mxu0 %v3361
        %3465 = vmatpush1.msra.mxu0 %v3360
        %3466 = vmatprep.subr.mxu0 %v3363
        %3467 = vmatpush1.msra.mxu0 %v3362
        %3468 = vmatprep.subr.mxu0 %v3365
        %3469 = vmatpush1.msra.mxu0 %v3364
        %3470 = vmatprep.subr.mxu0 %v3367
        %3471 = vmatpush1.msra.mxu0 %v3366
        %3472 = vmatprep.subr.mxu0 %v3369
        %3473 = vmatpush1.msra.mxu0 %v3368
        %3474 = vmatprep.subr.mxu0 %v3371
        %3475 = vmatpush1.msra.mxu0 %v3370
        %3476 = vmatprep.subr.mxu0 %v3373
        %3477 = vmatpush1.msra.mxu0 %v3372
        %3478 = vmatprep.subr.mxu0 %v3375
        %3479 = vmatpush1.msra.mxu0 %v3374
        %3480 = vmatprep.subr.mxu0 %v3377
        %3481 = vmatpush1.msra.mxu0 %v3376
        %3482 = vmatprep.subr.mxu0 %v3379
        %3483 = vmatpush1.msra.mxu0 %v3378
        %3484 = vmatprep.subr.mxu0 %v3381
        %3485 = vmatpush1.msra.mxu0 %v3380
        %3486 = vmatprep.subr.mxu0 %v3383
        %3487 = vmatpush1.msra.mxu0 %v3382
        %3488 = vmatprep.subr.mxu0 %v3385
        %3489 = vmatpush1.msra.mxu0 %v3384
        %3490 = vmatprep.subr.mxu0 %v3387
        %3491 = vmatpush1.msra.mxu0 %v3386
        %3492 = vmatprep.subr.mxu0 %v3389
        %3493 = vmatpush1.msra.mxu0 %v3388
        %3494 = vmatprep.subr.mxu0 %v3391
        %3495 = vmatpush1.msra.mxu0 %v3390
        %3496 = vmatprep.subr.mxu0 %v3393
        %3497 = vmatpush1.msra.mxu0 %v3392
        %3498 = vmatprep.subr.mxu0 %v3395
        %3499 = vmatpush1.msra.mxu0 %v3394
        %3500 = vmatprep.subr.mxu0 %v3397
        %3501 = vmatpush1.msra.mxu0 %v3396
        %3502 = vmatprep.subr.mxu0 %v3399
        %3503 = vmatpush1.msra.mxu0 %v3398
        %3504 = vmatprep.subr.mxu0 %v3401
        %3505 = vmatpush1.msra.mxu0 %v3400
        %3506 = vmatprep.subr.mxu0 %v3403
        %3507 = vmatpush1.msra.mxu0 %v3402
        %3508 = vmatprep.subr.mxu0 %v3405
        %3509 = vmatpush1.msra.mxu0 %v3404
        %3510 = vmatprep.subr.mxu0 %v3407
        %3511 = vmatpush1.msra.mxu0 %v3406
        %3512 = vmatprep.subr.mxu0 %v3409
        %3513 = vmatpush1.msra.mxu0 %v3408
        %3514 = vmatprep.subr.mxu0 %v3411
        %3515 = vmatpush1.msra.mxu0 %v3410
        %3516 = vmatprep.subr.mxu0 %v3413
        %3517 = vmatpush1.msra.mxu0 %v3412
        %3518 = vmatprep.subr.mxu0 %v3415
        %3519 = vmatpush1.msra.mxu0 %v3414
        %3520 = vmatprep.subr.mxu0 %v3417
        %3521 = vmatpush1.msra.mxu0 %v3416
        %3522 = vmatprep.subr.mxu0 %v3419
        %3523 = vmatpush1.msra.mxu0 %v3418
        %3524 = vmatprep.mubr.f32.mxu0 %v2700
        %3525 = vmatmul.mubr.f32.gmra.mrb[0].mxu0 %v2699
        %v3526 = vpop.f32.mrb[0].mxu0
        %v3527 = vadd.f32 %v3431, %v3526
        %v3528 = vpop.f32.mrb[0].mxu0
        %v3529 = vadd.f32 %v3431, %v3528
        %3530 = vmatprep.mubr.f32.mxu0 %v2703
        %3531 = vmatmul.mubr.f32.gmra.mrb[0].mxu0 %v2702
        %v3532 = vpop.f32.mrb[0].mxu0
        %v3533 = vadd.f32 %v3436, %v3532
        %v3534 = vpop.f32.mrb[0].mxu0
        %v3535 = vadd.f32 %v3436, %v3534
        %3536 = vmatprep.mubr.f32.mxu0 %v2706
        %3537 = vmatmul.mubr.f32.gmra.mrb[0].mxu0 %v2705
        %v3538 = vpop.f32.mrb[0].mxu0
        %v3539 = vadd.f32 %v3441, %v3538
        %v3540 = vpop.f32.mrb[0].mxu0
        %v3541 = vadd.f32 %v3441, %v3540
        %3542 = vmatprep.mubr.f32.mxu0 %v2709
        %3543 = vmatmul.mubr.f32.gmra.mrb[0].mxu0 %v2708
        %v3544 = vpop.f32.mrb[0].mxu0
        %v3545 = vadd.f32 %v3446, %v3544
        %v3546 = vpop.f32.mrb[0].mxu0
        %v3547 = vadd.f32 %v3446, %v3546
        %3548 = vdwg.mxu0
        %3549 = vmatprep.subr.mxu0 %v3421
        %3550 = vmatpush1.msra.mxu0 %v3420
        %3551 = vmatprep.subr.mxu0 %v3423
        %3552 = vmatpush1.msra.mxu0 %v3422
        %3553 = vmatprep.subr.mxu0 %v3425
        %3554 = vmatpush1.msra.mxu0 %v3424
        %3555 = vmatprep.subr.mxu0 %v3427
        %3556 = vmatpush1.msra.mxu0 %v3426
        %3557 = vmatprep.subr.mxu0 0.0
        %3558 = vmatpush1.msra.mxu0 0.0
        %3559 = vmatprep.subr.mxu0 0.0
        %3560 = vmatpush1.msra.mxu0 0.0
        %3561 = vmatprep.subr.mxu0 0.0
        %3562 = vmatpush1.msra.mxu0 0.0
        %3563 = vmatprep.subr.mxu0 0.0
        %3564 = vmatpush1.msra.mxu0 0.0
        %3565 = vmatprep.subr.mxu0 0.0
        %3566 = vmatpush1.msra.mxu0 0.0
        %3567 = vmatprep.subr.mxu0 0.0
        %3568 = vmatpush1.msra.mxu0 0.0
        %3569 = vmatprep.subr.mxu0 0.0
        %3570 = vmatpush1.msra.mxu0 0.0
        %3571 = vmatprep.subr.mxu0 0.0
        %3572 = vmatpush1.msra.mxu0 0.0
        %3573 = vmatprep.subr.mxu0 0.0
        %3574 = vmatpush1.msra.mxu0 0.0
        %3575 = vmatprep.subr.mxu0 0.0
        %3576 = vmatpush1.msra.mxu0 0.0
        %3577 = vmatprep.subr.mxu0 0.0
        %3578 = vmatpush1.msra.mxu0 0.0
        %3579 = vmatprep.subr.mxu0 0.0
        %3580 = vmatpush1.msra.mxu0 0.0
        %3581 = vmatprep.subr.mxu0 0.0
        %3582 = vmatpush1.msra.mxu0 0.0
        %3583 = vmatprep.subr.mxu0 0.0
        %3584 = vmatpush1.msra.mxu0 0.0
        %3585 = vmatprep.subr.mxu0 0.0
        %3586 = vmatpush1.msra.mxu0 0.0
        %3587 = vmatprep.subr.mxu0 0.0
        %3588 = vmatpush1.msra.mxu0 0.0
        %3589 = vmatprep.subr.mxu0 0.0
        %3590 = vmatpush1.msra.mxu0 0.0
        %3591 = vmatprep.subr.mxu0 0.0
        %3592 = vmatpush1.msra.mxu0 0.0
        %3593 = vmatprep.subr.mxu0 0.0
        %3594 = vmatpush1.msra.mxu0 0.0
        %3595 = vmatprep.subr.mxu0 0.0
        %3596 = vmatpush1.msra.mxu0 0.0
        %3597 = vmatprep.subr.mxu0 0.0
        %3598 = vmatpush1.msra.mxu0 0.0
        %3599 = vmatprep.subr.mxu0 0.0
        %3600 = vmatpush1.msra.mxu0 0.0
        %3601 = vmatprep.subr.mxu0 0.0
        %3602 = vmatpush1.msra.mxu0 0.0
        %3603 = vmatprep.subr.mxu0 0.0
        %3604 = vmatpush1.msra.mxu0 0.0
        %3605 = vmatprep.subr.mxu0 0.0
        %3606 = vmatpush1.msra.mxu0 0.0
        %3607 = vmatprep.subr.mxu0 0.0
        %3608 = vmatpush1.msra.mxu0 0.0
        %3609 = vmatprep.subr.mxu0 0.0
        %3610 = vmatpush1.msra.mxu0 0.0
        %3611 = vmatprep.subr.mxu0 0.0
        %3612 = vmatpush1.msra.mxu0 0.0
        %3613 = vmatprep.mubr.f32.mxu0 0.0
        %3614 = vmatmul.mubr.f32.gmra.mrb[0].mxu0 %v3449
        %v3615 = vpop.f32.mrb[0].mxu0
        %v3616 = vadd.f32 %v3527, %v3615
        %v3617 = vpop.f32.mrb[0].mxu0
        %v3618 = vadd.f32 %v3529, %v3617
        %3619 = vmatprep.mubr.f32.mxu0 0.0
        %3620 = vmatmul.mubr.f32.gmra.mrb[0].mxu0 %v3452
        %v3621 = vpop.f32.mrb[0].mxu0
        %v3622 = vadd.f32 %v3533, %v3621
        %v3623 = vpop.f32.mrb[0].mxu0
        %v3624 = vadd.f32 %v3535, %v3623
        %3625 = vmatprep.mubr.f32.mxu0 0.0
        %3626 = vmatmul.mubr.f32.gmra.mrb[0].mxu0 %v3455
        %v3627 = vpop.f32.mrb[0].mxu0
        %v3628 = vadd.f32 %v3539, %v3627
        %v3629 = vpop.f32.mrb[0].mxu0
        %v3630 = vadd.f32 %v3541, %v3629
        %3631 = vmatprep.mubr.f32.mxu0 0.0
        %3632 = vmatmul.mubr.f32.gmra.mrb[0].mxu0 %v3458
        %v3633 = vpop.f32.mrb[0].mxu0
        %v3634 = vadd.f32 %v3545, %v3633
        %v3635 = vpop.f32.mrb[0].mxu0
        %v3636 = vadd.f32 %v3547, %v3635
        %3637 = vdwg.mxu0
        %v3638 = vmax.f32 %v3616, 0.0
        %v3639 = vmax.f32 %v3618, 0.0
        %v3640 = vmax.f32 %v3622, 0.0
        %v3641 = vmax.f32 %v3624, 0.0
        %v3642 = vmax.f32 %v3628, 0.0
        %v3643 = vmax.f32 %v3630, 0.0
        %v3644 = vmax.f32 %v3634, 0.0
        %v3645 = vmax.f32 %v3636, 0.0
        %3654 = vrot.lane.b32.xlu0 %v3638, 17
        %v3655 = vpop.permute.xlu0 %3654
        %3656 = vrot.lane.b32.xlu0 %v3639, 17
        %v3657 = vpop.permute.xlu0 %3656
        %3658 = vrot.lane.b32.xlu0 %v3640, 17
        %v3659 = vpop.permute.xlu0 %3658
        %3660 = vrot.lane.b32.xlu0 %v3641, 17
        %v3661 = vpop.permute.xlu0 %3660
        %3662 = vrot.lane.b32.xlu0 %v3642, 17
        %v3663 = vpop.permute.xlu0 %3662
        %3664 = vrot.lane.b32.xlu0 %v3643, 17
        %v3665 = vpop.permute.xlu0 %3664
        %3666 = vrot.lane.b32.xlu0 %v3644, 17
        %v3667 = vpop.permute.xlu0 %3666
        %3668 = vrot.lane.b32.xlu0 %v3645, 17
        %v3669 = vpop.permute.xlu0 %3668
        %v3670 = vsel %vm290, %v3655, %v3657
        %v3671 = vsel %vm290, %v3659, %v3661
        %v3672 = vsel %vm290, %v3663, %v3665
        %v3673 = vsel %vm290, %v3667, %v3669
        %3686 = vst.msk [vmem:[#allocation2] sm:$0xff] %vm295, %v3655
        %3687 = vst [vmem:[#allocation2 + $0x8] sm:$0xff] %v3670
        %3688 = vst.msk [vmem:[#allocation2 + $0x10] sm:$0xff] %vm290, %v3657
        %3689 = vst.msk [vmem:[#allocation2 + $0x18] sm:$0xff] %vm295, %v3659
        %3690 = vst [vmem:[#allocation2 + $0x20] sm:$0xff] %v3671
        %3691 = vst.msk [vmem:[#allocation2 + $0x28] sm:$0xff] %vm290, %v3661
        %3692 = vst.msk [vmem:[#allocation2 + $0x30] sm:$0xff] %vm295, %v3663
        %3693 = vst [vmem:[#allocation2 + $0x38] sm:$0xff] %v3672
        %3694 = vst.msk [vmem:[#allocation2 + $0x40] sm:$0xff] %vm290, %v3665
        %3695 = vst.msk [vmem:[#allocation2 + $0x48] sm:$0xff] %vm295, %v3667
        %3696 = vst [vmem:[#allocation2 + $0x50] sm:$0xff] %v3673
        %3697 = vst.msk [vmem:[#allocation2 + $0x58] sm:$0xff] %vm290, %v3669
        %s3698 = scalar_lea.vmem [#allocation4], 288
        %v3699 = vld [vmem:[%s3698] sm:$0xff]
        %v3700 = vld [vmem:[%s3698 + $0x8] sm:$0xff]
        %v3701 = vld [vmem:[%s3698 + $0x10] sm:$0xff]
        %v3702 = vld [vmem:[%s3698 + $0x18] sm:$0xff]
        %v3703 = vld [vmem:[%s3698 + $0x20] sm:$0xff]
        %v3704 = vld [vmem:[%s3698 + $0x28] sm:$0xff]
        %v3705 = vld [vmem:[%s3698 + $0x30] sm:$0xff]
        %v3706 = vld [vmem:[%s3698 + $0x38] sm:$0xff]
        %v3707 = vld [vmem:[%s3698 + $0x40] sm:$0xff]
        %v3708 = vld [vmem:[%s3698 + $0x48] sm:$0xff]
        %v3709 = vld [vmem:[%s3698 + $0x50] sm:$0xff]
        %v3710 = vld [vmem:[%s3698 + $0x58] sm:$0xff]
        %s3711 = scalar_lea.vmem %s4, 96
        %v3712 = vld [vmem:[%s3711] sm:$0xff]
        %v3713 = vld [vmem:[%s3711 + $0x8] sm:$0xff]
        %v3714 = vld [vmem:[%s3711 + $0x10] sm:$0xff]
        %v3715 = vld [vmem:[%s3711 + $0x18] sm:$0xff]
        %v3716 = vld [vmem:[#allocation2] sm:$0xff]
        %v3717 = vld [vmem:[#allocation2 + $0x8] sm:$0xff]
        %v3718 = vld [vmem:[#allocation2 + $0x18] sm:$0xff]
        %v3719 = vld [vmem:[#allocation2 + $0x20] sm:$0xff]
        %v3720 = vld [vmem:[#allocation2 + $0x30] sm:$0xff]
        %v3721 = vld [vmem:[#allocation2 + $0x38] sm:$0xff]
        %v3722 = vld [vmem:[#allocation2 + $0x48] sm:$0xff]
        %v3723 = vld [vmem:[#allocation2 + $0x50] sm:$0xff]
        %v3724 = vsel %vm311, %v3716, 0.0
        %v3725 = vsel %vm312, %v3717, 0.0
        %v3726 = vsel %vm311, %v3718, 0.0
        %v3727 = vsel %vm312, %v3719, 0.0
        %v3728 = vsel %vm311, %v3720, 0.0
        %v3729 = vsel %vm312, %v3721, 0.0
        %v3730 = vsel %vm311, %v3722, 0.0
        %v3731 = vsel %vm312, %v3723, 0.0
        %3732 = vst [vmem:[#allocation3] sm:$0xff] %v3724
        %3733 = vst [vmem:[#allocation3 + $0x8] sm:$0xff] %v3725
        %3734 = vst [vmem:[#allocation3 + $0x10] sm:$0xff] %v3726
        %3735 = vst [vmem:[#allocation3 + $0x18] sm:$0xff] %v3727
        %3736 = vst [vmem:[#allocation3 + $0x20] sm:$0xff] %v3728
        %3737 = vst [vmem:[#allocation3 + $0x28] sm:$0xff] %v3729
        %3738 = vst [vmem:[#allocation3 + $0x30] sm:$0xff] %v3730
        %3739 = vst [vmem:[#allocation3 + $0x38] sm:$0xff] %v3731
        %v3740 = vld [vmem:[#allocation2] sm:$0xff]
        %v3741 = vld [vmem:[#allocation2 + $0x8] sm:$0xff]
        %v3742 = vld [vmem:[#allocation2 + $0x10] sm:$0xff]
        %v3743 = vld [vmem:[#allocation2 + $0x18] sm:$0xff]
        %v3744 = vld [vmem:[#allocation2 + $0x20] sm:$0xff]
        %v3745 = vld [vmem:[#allocation2 + $0x28] sm:$0xff]
        %v3746 = vld [vmem:[#allocation2 + $0x30] sm:$0xff]
        %v3747 = vld [vmem:[#allocation2 + $0x38] sm:$0xff]
        %v3748 = vld [vmem:[#allocation2 + $0x40] sm:$0xff]
        %v3749 = vld [vmem:[#allocation2 + $0x48] sm:$0xff]
        %v3750 = vld [vmem:[#allocation2 + $0x50] sm:$0xff]
        %v3751 = vld [vmem:[#allocation2 + $0x58] sm:$0xff]
        %3764 = vrot.lane.b32.xlu0 %v3740, 127
        %v3765 = vpop.permute.xlu0 %3764
        %3766 = vrot.lane.b32.xlu0 %v3741, 127
        %v3767 = vpop.permute.xlu0 %3766
        %3768 = vrot.lane.b32.xlu0 %v3742, 127
        %v3769 = vpop.permute.xlu0 %3768
        %3770 = vrot.lane.b32.xlu0 %v3743, 127
        %v3771 = vpop.permute.xlu0 %3770
        %3772 = vrot.lane.b32.xlu0 %v3744, 127
        %v3773 = vpop.permute.xlu0 %3772
        %3774 = vrot.lane.b32.xlu0 %v3745, 127
        %v3775 = vpop.permute.xlu0 %3774
        %3776 = vrot.lane.b32.xlu0 %v3746, 127
        %v3777 = vpop.permute.xlu0 %3776
        %3778 = vrot.lane.b32.xlu0 %v3747, 127
        %v3779 = vpop.permute.xlu0 %3778
        %3780 = vrot.lane.b32.xlu0 %v3748, 127
        %v3781 = vpop.permute.xlu0 %3780
        %3782 = vrot.lane.b32.xlu0 %v3749, 127
        %v3783 = vpop.permute.xlu0 %3782
        %3784 = vrot.lane.b32.xlu0 %v3750, 127
        %v3785 = vpop.permute.xlu0 %3784
        %3786 = vrot.lane.b32.xlu0 %v3751, 127
        %v3787 = vpop.permute.xlu0 %3786
        %v3788 = vsel %vm329, %v3765, %v3767
        %v3789 = vsel %vm329, %v3767, %v3769
        %v3790 = vsel %vm329, %v3771, %v3773
        %v3791 = vsel %vm329, %v3773, %v3775
        %v3792 = vsel %vm329, %v3777, %v3779
        %v3793 = vsel %vm329, %v3779, %v3781
        %v3794 = vsel %vm329, %v3783, %v3785
        %v3795 = vsel %vm329, %v3785, %v3787
        %3804 = vst [vmem:[#allocation3 + $0x40] sm:$0xff] %v3788
        %3805 = vst [vmem:[#allocation3 + $0x48] sm:$0xff] %v3789
        %3806 = vst [vmem:[#allocation3 + $0x50] sm:$0xff] %v3790
        %3807 = vst [vmem:[#allocation3 + $0x58] sm:$0xff] %v3791
        %3808 = vst [vmem:[#allocation3 + $0x60] sm:$0xff] %v3792
        %3809 = vst [vmem:[#allocation3 + $0x68] sm:$0xff] %v3793
        %3810 = vst [vmem:[#allocation3 + $0x70] sm:$0xff] %v3794
        %3811 = vst [vmem:[#allocation3 + $0x78] sm:$0xff] %v3795
        %v3812 = vld [vmem:[#allocation2] sm:$0xff]
        %v3813 = vld [vmem:[#allocation2 + $0x8] sm:$0xff]
        %v3814 = vld [vmem:[#allocation2 + $0x10] sm:$0xff]
        %v3815 = vld [vmem:[#allocation2 + $0x18] sm:$0xff]
        %v3816 = vld [vmem:[#allocation2 + $0x20] sm:$0xff]
        %v3817 = vld [vmem:[#allocation2 + $0x28] sm:$0xff]
        %v3818 = vld [vmem:[#allocation2 + $0x30] sm:$0xff]
        %v3819 = vld [vmem:[#allocation2 + $0x38] sm:$0xff]
        %v3820 = vld [vmem:[#allocation2 + $0x40] sm:$0xff]
        %v3821 = vld [vmem:[#allocation2 + $0x48] sm:$0xff]
        %v3822 = vld [vmem:[#allocation2 + $0x50] sm:$0xff]
        %v3823 = vld [vmem:[#allocation2 + $0x58] sm:$0xff]
        %3836 = vrot.lane.b32.xlu0 %v3812, 126
        %v3837 = vpop.permute.xlu0 %3836
        %3838 = vrot.lane.b32.xlu0 %v3813, 126
        %v3839 = vpop.permute.xlu0 %3838
        %3840 = vrot.lane.b32.xlu0 %v3814, 126
        %v3841 = vpop.permute.xlu0 %3840
        %3842 = vrot.lane.b32.xlu0 %v3815, 126
        %v3843 = vpop.permute.xlu0 %3842
        %3844 = vrot.lane.b32.xlu0 %v3816, 126
        %v3845 = vpop.permute.xlu0 %3844
        %3846 = vrot.lane.b32.xlu0 %v3817, 126
        %v3847 = vpop.permute.xlu0 %3846
        %3848 = vrot.lane.b32.xlu0 %v3818, 126
        %v3849 = vpop.permute.xlu0 %3848
        %3850 = vrot.lane.b32.xlu0 %v3819, 126
        %v3851 = vpop.permute.xlu0 %3850
        %3852 = vrot.lane.b32.xlu0 %v3820, 126
        %v3853 = vpop.permute.xlu0 %3852
        %3854 = vrot.lane.b32.xlu0 %v3821, 126
        %v3855 = vpop.permute.xlu0 %3854
        %3856 = vrot.lane.b32.xlu0 %v3822, 126
        %v3857 = vpop.permute.xlu0 %3856
        %3858 = vrot.lane.b32.xlu0 %v3823, 126
        %v3859 = vpop.permute.xlu0 %3858
        %v3860 = vsel %vm352, %v3837, %v3839
        %v3861 = vsel %vm352, %v3839, %v3841
        %v3862 = vsel %vm352, %v3843, %v3845
        %v3863 = vsel %vm352, %v3845, %v3847
        %v3864 = vsel %vm352, %v3849, %v3851
        %v3865 = vsel %vm352, %v3851, %v3853
        %v3866 = vsel %vm352, %v3855, %v3857
        %v3867 = vsel %vm352, %v3857, %v3859
        %v3876 = vsel %vm341, %v3860, 0.0
        %v3877 = vsel %vm342, %v3861, 0.0
        %v3878 = vsel %vm341, %v3862, 0.0
        %v3879 = vsel %vm342, %v3863, 0.0
        %v3880 = vsel %vm341, %v3864, 0.0
        %v3881 = vsel %vm342, %v3865, 0.0
        %v3882 = vsel %vm341, %v3866, 0.0
        %v3883 = vsel %vm342, %v3867, 0.0
        %3884 = vst [vmem:[#allocation3 + $0x80] sm:$0xff] %v3876
        %3885 = vst [vmem:[#allocation3 + $0x88] sm:$0xff] %v3877
        %3886 = vst [vmem:[#allocation3 + $0x90] sm:$0xff] %v3878
        %3887 = vst [vmem:[#allocation3 + $0x98] sm:$0xff] %v3879
        %3888 = vst [vmem:[#allocation3 + $0xa0] sm:$0xff] %v3880
        %3889 = vst [vmem:[#allocation3 + $0xa8] sm:$0xff] %v3881
        %3890 = vst [vmem:[#allocation3 + $0xb0] sm:$0xff] %v3882
        %3891 = vst [vmem:[#allocation3 + $0xb8] sm:$0xff] %v3883
        %v3892 = vld [vmem:[#allocation2] sm:$0xff]
        %v3893 = vld [vmem:[#allocation2 + $0x8] sm:$0xff]
        %v3894 = vld [vmem:[#allocation2 + $0x10] sm:$0xff]
        %v3895 = vld [vmem:[#allocation2 + $0x18] sm:$0xff]
        %v3896 = vld [vmem:[#allocation2 + $0x20] sm:$0xff]
        %v3897 = vld [vmem:[#allocation2 + $0x28] sm:$0xff]
        %v3898 = vld [vmem:[#allocation2 + $0x30] sm:$0xff]
        %v3899 = vld [vmem:[#allocation2 + $0x38] sm:$0xff]
        %v3900 = vld [vmem:[#allocation2 + $0x40] sm:$0xff]
        %v3901 = vld [vmem:[#allocation2 + $0x48] sm:$0xff]
        %v3902 = vld [vmem:[#allocation2 + $0x50] sm:$0xff]
        %v3903 = vld [vmem:[#allocation2 + $0x58] sm:$0xff]
        %3916 = vrot.lane.b32.xlu0 %v3892, 112
        %v3917 = vpop.permute.xlu0 %3916
        %3918 = vrot.lane.b32.xlu0 %v3893, 112
        %v3919 = vpop.permute.xlu0 %3918
        %3920 = vrot.lane.b32.xlu0 %v3894, 112
        %v3921 = vpop.permute.xlu0 %3920
        %3922 = vrot.lane.b32.xlu0 %v3895, 112
        %v3923 = vpop.permute.xlu0 %3922
        %3924 = vrot.lane.b32.xlu0 %v3896, 112
        %v3925 = vpop.permute.xlu0 %3924
        %3926 = vrot.lane.b32.xlu0 %v3897, 112
        %v3927 = vpop.permute.xlu0 %3926
        %3928 = vrot.lane.b32.xlu0 %v3898, 112
        %v3929 = vpop.permute.xlu0 %3928
        %3930 = vrot.lane.b32.xlu0 %v3899, 112
        %v3931 = vpop.permute.xlu0 %3930
        %3932 = vrot.lane.b32.xlu0 %v3900, 112
        %v3933 = vpop.permute.xlu0 %3932
        %3934 = vrot.lane.b32.xlu0 %v3901, 112
        %v3935 = vpop.permute.xlu0 %3934
        %3936 = vrot.lane.b32.xlu0 %v3902, 112
        %v3937 = vpop.permute.xlu0 %3936
        %3938 = vrot.lane.b32.xlu0 %v3903, 112
        %v3939 = vpop.permute.xlu0 %3938
        %v3940 = vsel %vm373, %v3917, %v3919
        %v3941 = vsel %vm373, %v3919, %v3921
        %v3942 = vsel %vm373, %v3923, %v3925
        %v3943 = vsel %vm373, %v3925, %v3927
        %v3944 = vsel %vm373, %v3929, %v3931
        %v3945 = vsel %vm373, %v3931, %v3933
        %v3946 = vsel %vm373, %v3935, %v3937
        %v3947 = vsel %vm373, %v3937, %v3939
        %v3956 = vsel %vm311, %v3940, 0.0
        %v3957 = vsel %vm312, %v3941, 0.0
        %v3958 = vsel %vm311, %v3942, 0.0
        %v3959 = vsel %vm312, %v3943, 0.0
        %v3960 = vsel %vm311, %v3944, 0.0
        %v3961 = vsel %vm312, %v3945, 0.0
        %v3962 = vsel %vm311, %v3946, 0.0
        %v3963 = vsel %vm312, %v3947, 0.0
        %3964 = vst [vmem:[#allocation3 + $0xc0] sm:$0xff] %v3956
        %3965 = vst [vmem:[#allocation3 + $0xc8] sm:$0xff] %v3957
        %3966 = vst [vmem:[#allocation3 + $0xd0] sm:$0xff] %v3958
        %3967 = vst [vmem:[#allocation3 + $0xd8] sm:$0xff] %v3959
        %3968 = vst [vmem:[#allocation3 + $0xe0] sm:$0xff] %v3960
        %3969 = vst [vmem:[#allocation3 + $0xe8] sm:$0xff] %v3961
        %3970 = vst [vmem:[#allocation3 + $0xf0] sm:$0xff] %v3962
        %3971 = vst [vmem:[#allocation3 + $0xf8] sm:$0xff] %v3963
        %v3972 = vld [vmem:[#allocation2] sm:$0xff]
        %v3973 = vld [vmem:[#allocation2 + $0x8] sm:$0xff]
        %v3974 = vld [vmem:[#allocation2 + $0x10] sm:$0xff]
        %v3975 = vld [vmem:[#allocation2 + $0x18] sm:$0xff]
        %v3976 = vld [vmem:[#allocation2 + $0x20] sm:$0xff]
        %v3977 = vld [vmem:[#allocation2 + $0x28] sm:$0xff]
        %v3978 = vld [vmem:[#allocation2 + $0x30] sm:$0xff]
        %v3979 = vld [vmem:[#allocation2 + $0x38] sm:$0xff]
        %v3980 = vld [vmem:[#allocation2 + $0x40] sm:$0xff]
        %v3981 = vld [vmem:[#allocation2 + $0x48] sm:$0xff]
        %v3982 = vld [vmem:[#allocation2 + $0x50] sm:$0xff]
        %v3983 = vld [vmem:[#allocation2 + $0x58] sm:$0xff]
        %3996 = vrot.lane.b32.xlu0 %v3972, 111
        %v3997 = vpop.permute.xlu0 %3996
        %3998 = vrot.lane.b32.xlu0 %v3973, 111
        %v3999 = vpop.permute.xlu0 %3998
        %4000 = vrot.lane.b32.xlu0 %v3974, 111
        %v4001 = vpop.permute.xlu0 %4000
        %4002 = vrot.lane.b32.xlu0 %v3975, 111
        %v4003 = vpop.permute.xlu0 %4002
        %4004 = vrot.lane.b32.xlu0 %v3976, 111
        %v4005 = vpop.permute.xlu0 %4004
        %4006 = vrot.lane.b32.xlu0 %v3977, 111
        %v4007 = vpop.permute.xlu0 %4006
        %4008 = vrot.lane.b32.xlu0 %v3978, 111
        %v4009 = vpop.permute.xlu0 %4008
        %4010 = vrot.lane.b32.xlu0 %v3979, 111
        %v4011 = vpop.permute.xlu0 %4010
        %4012 = vrot.lane.b32.xlu0 %v3980, 111
        %v4013 = vpop.permute.xlu0 %4012
        %4014 = vrot.lane.b32.xlu0 %v3981, 111
        %v4015 = vpop.permute.xlu0 %4014
        %4016 = vrot.lane.b32.xlu0 %v3982, 111
        %v4017 = vpop.permute.xlu0 %4016
        %4018 = vrot.lane.b32.xlu0 %v3983, 111
        %v4019 = vpop.permute.xlu0 %4018
        %v4020 = vsel %vm394, %v3997, %v3999
        %v4021 = vsel %vm394, %v3999, %v4001
        %v4022 = vsel %vm394, %v4003, %v4005
        %v4023 = vsel %vm394, %v4005, %v4007
        %v4024 = vsel %vm394, %v4009, %v4011
        %v4025 = vsel %vm394, %v4011, %v4013
        %v4026 = vsel %vm394, %v4015, %v4017
        %v4027 = vsel %vm394, %v4017, %v4019
        %4036 = vst [vmem:[#allocation3 + $0x100] sm:$0xff] %v4020
        %4037 = vst [vmem:[#allocation3 + $0x108] sm:$0xff] %v4021
        %4038 = vst [vmem:[#allocation3 + $0x110] sm:$0xff] %v4022
        %4039 = vst [vmem:[#allocation3 + $0x118] sm:$0xff] %v4023
        %4040 = vst [vmem:[#allocation3 + $0x120] sm:$0xff] %v4024
        %4041 = vst [vmem:[#allocation3 + $0x128] sm:$0xff] %v4025
        %4042 = vst [vmem:[#allocation3 + $0x130] sm:$0xff] %v4026
        %4043 = vst [vmem:[#allocation3 + $0x138] sm:$0xff] %v4027
        %v4044 = vld [vmem:[#allocation2] sm:$0xff]
        %v4045 = vld [vmem:[#allocation2 + $0x8] sm:$0xff]
        %v4046 = vld [vmem:[#allocation2 + $0x10] sm:$0xff]
        %v4047 = vld [vmem:[#allocation2 + $0x18] sm:$0xff]
        %v4048 = vld [vmem:[#allocation2 + $0x20] sm:$0xff]
        %v4049 = vld [vmem:[#allocation2 + $0x28] sm:$0xff]
        %v4050 = vld [vmem:[#allocation2 + $0x30] sm:$0xff]
        %v4051 = vld [vmem:[#allocation2 + $0x38] sm:$0xff]
        %v4052 = vld [vmem:[#allocation2 + $0x40] sm:$0xff]
        %v4053 = vld [vmem:[#allocation2 + $0x48] sm:$0xff]
        %v4054 = vld [vmem:[#allocation2 + $0x50] sm:$0xff]
        %v4055 = vld [vmem:[#allocation2 + $0x58] sm:$0xff]
        %4068 = vrot.lane.b32.xlu0 %v4044, 110
        %v4069 = vpop.permute.xlu0 %4068
        %4070 = vrot.lane.b32.xlu0 %v4045, 110
        %v4071 = vpop.permute.xlu0 %4070
        %4072 = vrot.lane.b32.xlu0 %v4046, 110
        %v4073 = vpop.permute.xlu0 %4072
        %4074 = vrot.lane.b32.xlu0 %v4047, 110
        %v4075 = vpop.permute.xlu0 %4074
        %4076 = vrot.lane.b32.xlu0 %v4048, 110
        %v4077 = vpop.permute.xlu0 %4076
        %4078 = vrot.lane.b32.xlu0 %v4049, 110
        %v4079 = vpop.permute.xlu0 %4078
        %4080 = vrot.lane.b32.xlu0 %v4050, 110
        %v4081 = vpop.permute.xlu0 %4080
        %4082 = vrot.lane.b32.xlu0 %v4051, 110
        %v4083 = vpop.permute.xlu0 %4082
        %4084 = vrot.lane.b32.xlu0 %v4052, 110
        %v4085 = vpop.permute.xlu0 %4084
        %4086 = vrot.lane.b32.xlu0 %v4053, 110
        %v4087 = vpop.permute.xlu0 %4086
        %4088 = vrot.lane.b32.xlu0 %v4054, 110
        %v4089 = vpop.permute.xlu0 %4088
        %4090 = vrot.lane.b32.xlu0 %v4055, 110
        %v4091 = vpop.permute.xlu0 %4090
        %v4092 = vsel %vm413, %v4069, %v4071
        %v4093 = vsel %vm413, %v4071, %v4073
        %v4094 = vsel %vm413, %v4075, %v4077
        %v4095 = vsel %vm413, %v4077, %v4079
        %v4096 = vsel %vm413, %v4081, %v4083
        %v4097 = vsel %vm413, %v4083, %v4085
        %v4098 = vsel %vm413, %v4087, %v4089
        %v4099 = vsel %vm413, %v4089, %v4091
        %v4108 = vsel %vm341, %v4092, 0.0
        %v4109 = vsel %vm342, %v4093, 0.0
        %v4110 = vsel %vm341, %v4094, 0.0
        %v4111 = vsel %vm342, %v4095, 0.0
        %v4112 = vsel %vm341, %v4096, 0.0
        %v4113 = vsel %vm342, %v4097, 0.0
        %v4114 = vsel %vm341, %v4098, 0.0
        %v4115 = vsel %vm342, %v4099, 0.0
        %4116 = vst [vmem:[#allocation3 + $0x140] sm:$0xff] %v4108
        %4117 = vst [vmem:[#allocation3 + $0x148] sm:$0xff] %v4109
        %4118 = vst [vmem:[#allocation3 + $0x150] sm:$0xff] %v4110
        %4119 = vst [vmem:[#allocation3 + $0x158] sm:$0xff] %v4111
        %4120 = vst [vmem:[#allocation3 + $0x160] sm:$0xff] %v4112
        %4121 = vst [vmem:[#allocation3 + $0x168] sm:$0xff] %v4113
        %4122 = vst [vmem:[#allocation3 + $0x170] sm:$0xff] %v4114
        %4123 = vst [vmem:[#allocation3 + $0x178] sm:$0xff] %v4115
        %v4124 = vld [vmem:[#allocation2] sm:$0xff]
        %v4125 = vld [vmem:[#allocation2 + $0x8] sm:$0xff]
        %v4126 = vld [vmem:[#allocation2 + $0x10] sm:$0xff]
        %v4127 = vld [vmem:[#allocation2 + $0x18] sm:$0xff]
        %v4128 = vld [vmem:[#allocation2 + $0x20] sm:$0xff]
        %v4129 = vld [vmem:[#allocation2 + $0x28] sm:$0xff]
        %v4130 = vld [vmem:[#allocation2 + $0x30] sm:$0xff]
        %v4131 = vld [vmem:[#allocation2 + $0x38] sm:$0xff]
        %v4132 = vld [vmem:[#allocation2 + $0x40] sm:$0xff]
        %v4133 = vld [vmem:[#allocation2 + $0x48] sm:$0xff]
        %v4134 = vld [vmem:[#allocation2 + $0x50] sm:$0xff]
        %v4135 = vld [vmem:[#allocation2 + $0x58] sm:$0xff]
        %4148 = vrot.lane.b32.xlu0 %v4124, 96
        %v4149 = vpop.permute.xlu0 %4148
        %4150 = vrot.lane.b32.xlu0 %v4125, 96
        %v4151 = vpop.permute.xlu0 %4150
        %4152 = vrot.lane.b32.xlu0 %v4126, 96
        %v4153 = vpop.permute.xlu0 %4152
        %4154 = vrot.lane.b32.xlu0 %v4127, 96
        %v4155 = vpop.permute.xlu0 %4154
        %4156 = vrot.lane.b32.xlu0 %v4128, 96
        %v4157 = vpop.permute.xlu0 %4156
        %4158 = vrot.lane.b32.xlu0 %v4129, 96
        %v4159 = vpop.permute.xlu0 %4158
        %4160 = vrot.lane.b32.xlu0 %v4130, 96
        %v4161 = vpop.permute.xlu0 %4160
        %4162 = vrot.lane.b32.xlu0 %v4131, 96
        %v4163 = vpop.permute.xlu0 %4162
        %4164 = vrot.lane.b32.xlu0 %v4132, 96
        %v4165 = vpop.permute.xlu0 %4164
        %4166 = vrot.lane.b32.xlu0 %v4133, 96
        %v4167 = vpop.permute.xlu0 %4166
        %4168 = vrot.lane.b32.xlu0 %v4134, 96
        %v4169 = vpop.permute.xlu0 %4168
        %4170 = vrot.lane.b32.xlu0 %v4135, 96
        %v4171 = vpop.permute.xlu0 %4170
        %v4172 = vsel %vm434, %v4149, %v4151
        %v4173 = vsel %vm434, %v4151, %v4153
        %v4174 = vsel %vm434, %v4155, %v4157
        %v4175 = vsel %vm434, %v4157, %v4159
        %v4176 = vsel %vm434, %v4161, %v4163
        %v4177 = vsel %vm434, %v4163, %v4165
        %v4178 = vsel %vm434, %v4167, %v4169
        %v4179 = vsel %vm434, %v4169, %v4171
        %v4188 = vsel %vm311, %v4172, 0.0
        %v4189 = vsel %vm312, %v4173, 0.0
        %v4190 = vsel %vm311, %v4174, 0.0
        %v4191 = vsel %vm312, %v4175, 0.0
        %v4192 = vsel %vm311, %v4176, 0.0
        %v4193 = vsel %vm312, %v4177, 0.0
        %v4194 = vsel %vm311, %v4178, 0.0
        %v4195 = vsel %vm312, %v4179, 0.0
        %4196 = vst [vmem:[#allocation3 + $0x180] sm:$0xff] %v4188
        %4197 = vst [vmem:[#allocation3 + $0x188] sm:$0xff] %v4189
        %4198 = vst [vmem:[#allocation3 + $0x190] sm:$0xff] %v4190
        %4199 = vst [vmem:[#allocation3 + $0x198] sm:$0xff] %v4191
        %4200 = vst [vmem:[#allocation3 + $0x1a0] sm:$0xff] %v4192
        %4201 = vst [vmem:[#allocation3 + $0x1a8] sm:$0xff] %v4193
        %4202 = vst [vmem:[#allocation3 + $0x1b0] sm:$0xff] %v4194
        %4203 = vst [vmem:[#allocation3 + $0x1b8] sm:$0xff] %v4195
        %v4204 = vld [vmem:[#allocation2] sm:$0xff]
        %v4205 = vld [vmem:[#allocation2 + $0x8] sm:$0xff]
        %v4206 = vld [vmem:[#allocation2 + $0x10] sm:$0xff]
        %v4207 = vld [vmem:[#allocation2 + $0x18] sm:$0xff]
        %v4208 = vld [vmem:[#allocation2 + $0x20] sm:$0xff]
        %v4209 = vld [vmem:[#allocation2 + $0x28] sm:$0xff]
        %v4210 = vld [vmem:[#allocation2 + $0x30] sm:$0xff]
        %v4211 = vld [vmem:[#allocation2 + $0x38] sm:$0xff]
        %v4212 = vld [vmem:[#allocation2 + $0x40] sm:$0xff]
        %v4213 = vld [vmem:[#allocation2 + $0x48] sm:$0xff]
        %v4214 = vld [vmem:[#allocation2 + $0x50] sm:$0xff]
        %v4215 = vld [vmem:[#allocation2 + $0x58] sm:$0xff]
        %4228 = vrot.lane.b32.xlu0 %v4204, 95
        %v4229 = vpop.permute.xlu0 %4228
        %4230 = vrot.lane.b32.xlu0 %v4205, 95
        %v4231 = vpop.permute.xlu0 %4230
        %4232 = vrot.lane.b32.xlu0 %v4206, 95
        %v4233 = vpop.permute.xlu0 %4232
        %4234 = vrot.lane.b32.xlu0 %v4207, 95
        %v4235 = vpop.permute.xlu0 %4234
        %4236 = vrot.lane.b32.xlu0 %v4208, 95
        %v4237 = vpop.permute.xlu0 %4236
        %4238 = vrot.lane.b32.xlu0 %v4209, 95
        %v4239 = vpop.permute.xlu0 %4238
        %4240 = vrot.lane.b32.xlu0 %v4210, 95
        %v4241 = vpop.permute.xlu0 %4240
        %4242 = vrot.lane.b32.xlu0 %v4211, 95
        %v4243 = vpop.permute.xlu0 %4242
        %4244 = vrot.lane.b32.xlu0 %v4212, 95
        %v4245 = vpop.permute.xlu0 %4244
        %4246 = vrot.lane.b32.xlu0 %v4213, 95
        %v4247 = vpop.permute.xlu0 %4246
        %4248 = vrot.lane.b32.xlu0 %v4214, 95
        %v4249 = vpop.permute.xlu0 %4248
        %4250 = vrot.lane.b32.xlu0 %v4215, 95
        %v4251 = vpop.permute.xlu0 %4250
        %v4252 = vsel %vm455, %v4229, %v4231
        %v4253 = vsel %vm455, %v4231, %v4233
        %v4254 = vsel %vm455, %v4235, %v4237
        %v4255 = vsel %vm455, %v4237, %v4239
        %v4256 = vsel %vm455, %v4241, %v4243
        %v4257 = vsel %vm455, %v4243, %v4245
        %v4258 = vsel %vm455, %v4247, %v4249
        %v4259 = vsel %vm455, %v4249, %v4251
        %4268 = vst [vmem:[#allocation3 + $0x1c0] sm:$0xff] %v4252
        %4269 = vst [vmem:[#allocation3 + $0x1c8] sm:$0xff] %v4253
        %4270 = vst [vmem:[#allocation3 + $0x1d0] sm:$0xff] %v4254
        %4271 = vst [vmem:[#allocation3 + $0x1d8] sm:$0xff] %v4255
        %4272 = vst [vmem:[#allocation3 + $0x1e0] sm:$0xff] %v4256
        %4273 = vst [vmem:[#allocation3 + $0x1e8] sm:$0xff] %v4257
        %4274 = vst [vmem:[#allocation3 + $0x1f0] sm:$0xff] %v4258
        %4275 = vst [vmem:[#allocation3 + $0x1f8] sm:$0xff] %v4259
        %v4276 = vld [vmem:[#allocation2] sm:$0xff]
        %v4277 = vld [vmem:[#allocation2 + $0x8] sm:$0xff]
        %v4278 = vld [vmem:[#allocation2 + $0x10] sm:$0xff]
        %v4279 = vld [vmem:[#allocation2 + $0x18] sm:$0xff]
        %v4280 = vld [vmem:[#allocation2 + $0x20] sm:$0xff]
        %v4281 = vld [vmem:[#allocation2 + $0x28] sm:$0xff]
        %v4282 = vld [vmem:[#allocation2 + $0x30] sm:$0xff]
        %v4283 = vld [vmem:[#allocation2 + $0x38] sm:$0xff]
        %v4284 = vld [vmem:[#allocation2 + $0x40] sm:$0xff]
        %v4285 = vld [vmem:[#allocation2 + $0x48] sm:$0xff]
        %v4286 = vld [vmem:[#allocation2 + $0x50] sm:$0xff]
        %v4287 = vld [vmem:[#allocation2 + $0x58] sm:$0xff]
        %4300 = vrot.lane.b32.xlu0 %v4276, 94
        %v4301 = vpop.permute.xlu0 %4300
        %4302 = vrot.lane.b32.xlu0 %v4277, 94
        %v4303 = vpop.permute.xlu0 %4302
        %4304 = vrot.lane.b32.xlu0 %v4278, 94
        %v4305 = vpop.permute.xlu0 %4304
        %4306 = vrot.lane.b32.xlu0 %v4279, 94
        %v4307 = vpop.permute.xlu0 %4306
        %4308 = vrot.lane.b32.xlu0 %v4280, 94
        %v4309 = vpop.permute.xlu0 %4308
        %4310 = vrot.lane.b32.xlu0 %v4281, 94
        %v4311 = vpop.permute.xlu0 %4310
        %4312 = vrot.lane.b32.xlu0 %v4282, 94
        %v4313 = vpop.permute.xlu0 %4312
        %4314 = vrot.lane.b32.xlu0 %v4283, 94
        %v4315 = vpop.permute.xlu0 %4314
        %4316 = vrot.lane.b32.xlu0 %v4284, 94
        %v4317 = vpop.permute.xlu0 %4316
        %4318 = vrot.lane.b32.xlu0 %v4285, 94
        %v4319 = vpop.permute.xlu0 %4318
        %4320 = vrot.lane.b32.xlu0 %v4286, 94
        %v4321 = vpop.permute.xlu0 %4320
        %4322 = vrot.lane.b32.xlu0 %v4287, 94
        %v4323 = vpop.permute.xlu0 %4322
        %v4324 = vsel %vm474, %v4301, %v4303
        %v4325 = vsel %vm474, %v4303, %v4305
        %v4326 = vsel %vm474, %v4307, %v4309
        %v4327 = vsel %vm474, %v4309, %v4311
        %v4328 = vsel %vm474, %v4313, %v4315
        %v4329 = vsel %vm474, %v4315, %v4317
        %v4330 = vsel %vm474, %v4319, %v4321
        %v4331 = vsel %vm474, %v4321, %v4323
        %v4340 = vsel %vm341, %v4324, 0.0
        %v4341 = vsel %vm342, %v4325, 0.0
        %v4342 = vsel %vm341, %v4326, 0.0
        %v4343 = vsel %vm342, %v4327, 0.0
        %v4344 = vsel %vm341, %v4328, 0.0
        %v4345 = vsel %vm342, %v4329, 0.0
        %v4346 = vsel %vm341, %v4330, 0.0
        %v4347 = vsel %vm342, %v4331, 0.0
        %4348 = vst [vmem:[#allocation3 + $0x200] sm:$0xff] %v4340
        %4349 = vst [vmem:[#allocation3 + $0x208] sm:$0xff] %v4341
        %4350 = vst [vmem:[#allocation3 + $0x210] sm:$0xff] %v4342
        %4351 = vst [vmem:[#allocation3 + $0x218] sm:$0xff] %v4343
        %4352 = vst [vmem:[#allocation3 + $0x220] sm:$0xff] %v4344
        %4353 = vst [vmem:[#allocation3 + $0x228] sm:$0xff] %v4345
        %4354 = vst [vmem:[#allocation3 + $0x230] sm:$0xff] %v4346
        %4355 = vst [vmem:[#allocation3 + $0x238] sm:$0xff] %v4347
        %v4356 = vld [vmem:[#allocation3] sm:$0xff]
        %v4357 = vld [vmem:[#allocation3 + $0x8] sm:$0xff]
        %v4358 = vld [vmem:[#allocation3 + $0x10] sm:$0xff]
        %v4359 = vld [vmem:[#allocation3 + $0x18] sm:$0xff]
        %v4360 = vld [vmem:[#allocation3 + $0x20] sm:$0xff]
        %v4361 = vld [vmem:[#allocation3 + $0x28] sm:$0xff]
        %v4362 = vld [vmem:[#allocation3 + $0x30] sm:$0xff]
        %v4363 = vld [vmem:[#allocation3 + $0x38] sm:$0xff]
        %v4364 = vld [vmem:[#allocation3 + $0x40] sm:$0xff]
        %v4365 = vld [vmem:[#allocation3 + $0x48] sm:$0xff]
        %v4366 = vld [vmem:[#allocation3 + $0x50] sm:$0xff]
        %v4367 = vld [vmem:[#allocation3 + $0x58] sm:$0xff]
        %v4368 = vld [vmem:[#allocation3 + $0x60] sm:$0xff]
        %v4369 = vld [vmem:[#allocation3 + $0x68] sm:$0xff]
        %v4370 = vld [vmem:[#allocation3 + $0x70] sm:$0xff]
        %v4371 = vld [vmem:[#allocation3 + $0x78] sm:$0xff]
        %v4372 = vld [vmem:[#allocation3 + $0x80] sm:$0xff]
        %v4373 = vld [vmem:[#allocation3 + $0x88] sm:$0xff]
        %v4374 = vld [vmem:[#allocation3 + $0x90] sm:$0xff]
        %v4375 = vld [vmem:[#allocation3 + $0x98] sm:$0xff]
        %v4376 = vld [vmem:[#allocation3 + $0xa0] sm:$0xff]
        %v4377 = vld [vmem:[#allocation3 + $0xa8] sm:$0xff]
        %v4378 = vld [vmem:[#allocation3 + $0xb0] sm:$0xff]
        %v4379 = vld [vmem:[#allocation3 + $0xb8] sm:$0xff]
        %v4380 = vld [vmem:[#allocation3 + $0xc0] sm:$0xff]
        %v4381 = vld [vmem:[#allocation3 + $0xc8] sm:$0xff]
        %v4382 = vld [vmem:[#allocation3 + $0xd0] sm:$0xff]
        %v4383 = vld [vmem:[#allocation3 + $0xd8] sm:$0xff]
        %v4384 = vld [vmem:[#allocation3 + $0xe0] sm:$0xff]
        %v4385 = vld [vmem:[#allocation3 + $0xe8] sm:$0xff]
        %v4386 = vld [vmem:[#allocation3 + $0xf0] sm:$0xff]
        %v4387 = vld [vmem:[#allocation3 + $0xf8] sm:$0xff]
        %v4388 = vld [vmem:[#allocation3 + $0x100] sm:$0xff]
        %v4389 = vld [vmem:[#allocation3 + $0x108] sm:$0xff]
        %v4390 = vld [vmem:[#allocation3 + $0x110] sm:$0xff]
        %v4391 = vld [vmem:[#allocation3 + $0x118] sm:$0xff]
        %v4392 = vld [vmem:[#allocation3 + $0x120] sm:$0xff]
        %v4393 = vld [vmem:[#allocation3 + $0x128] sm:$0xff]
        %v4394 = vld [vmem:[#allocation3 + $0x130] sm:$0xff]
        %v4395 = vld [vmem:[#allocation3 + $0x138] sm:$0xff]
        %v4396 = vld [vmem:[#allocation3 + $0x140] sm:$0xff]
        %v4397 = vld [vmem:[#allocation3 + $0x148] sm:$0xff]
        %v4398 = vld [vmem:[#allocation3 + $0x150] sm:$0xff]
        %v4399 = vld [vmem:[#allocation3 + $0x158] sm:$0xff]
        %v4400 = vld [vmem:[#allocation3 + $0x160] sm:$0xff]
        %v4401 = vld [vmem:[#allocation3 + $0x168] sm:$0xff]
        %v4402 = vld [vmem:[#allocation3 + $0x170] sm:$0xff]
        %v4403 = vld [vmem:[#allocation3 + $0x178] sm:$0xff]
        %v4404 = vld [vmem:[#allocation3 + $0x180] sm:$0xff]
        %v4405 = vld [vmem:[#allocation3 + $0x188] sm:$0xff]
        %v4406 = vld [vmem:[#allocation3 + $0x190] sm:$0xff]
        %v4407 = vld [vmem:[#allocation3 + $0x198] sm:$0xff]
        %v4408 = vld [vmem:[#allocation3 + $0x1a0] sm:$0xff]
        %v4409 = vld [vmem:[#allocation3 + $0x1a8] sm:$0xff]
        %v4410 = vld [vmem:[#allocation3 + $0x1b0] sm:$0xff]
        %v4411 = vld [vmem:[#allocation3 + $0x1b8] sm:$0xff]
        %v4412 = vld [vmem:[#allocation3 + $0x1c0] sm:$0xff]
        %v4413 = vld [vmem:[#allocation3 + $0x1c8] sm:$0xff]
        %v4414 = vld [vmem:[#allocation3 + $0x1d0] sm:$0xff]
        %v4415 = vld [vmem:[#allocation3 + $0x1d8] sm:$0xff]
        %v4416 = vld [vmem:[#allocation3 + $0x1e0] sm:$0xff]
        %v4417 = vld [vmem:[#allocation3 + $0x1e8] sm:$0xff]
        %v4418 = vld [vmem:[#allocation3 + $0x1f0] sm:$0xff]
        %v4419 = vld [vmem:[#allocation3 + $0x1f8] sm:$0xff]
        %v4420 = vld [vmem:[#allocation3 + $0x200] sm:$0xff]
        %v4421 = vld [vmem:[#allocation3 + $0x208] sm:$0xff]
        %v4422 = vld [vmem:[#allocation3 + $0x210] sm:$0xff]
        %v4423 = vld [vmem:[#allocation3 + $0x218] sm:$0xff]
        %v4424 = vld [vmem:[#allocation3 + $0x220] sm:$0xff]
        %v4425 = vld [vmem:[#allocation3 + $0x228] sm:$0xff]
        %v4426 = vld [vmem:[#allocation3 + $0x230] sm:$0xff]
        %v4427 = vld [vmem:[#allocation3 + $0x238] sm:$0xff]
        %4429 = vset.pattern.permute.xlu0 0
        %4430 = vperm.xlu0 %4429, %v3712
        %v4431 = vpop.permute.xlu0 %4430
        %4434 = vset.pattern.permute.xlu0 0
        %4435 = vperm.xlu0 %4434, %v3713
        %v4436 = vpop.permute.xlu0 %4435
        %4439 = vset.pattern.permute.xlu0 0
        %4440 = vperm.xlu0 %4439, %v3714
        %v4441 = vpop.permute.xlu0 %4440
        %4444 = vset.pattern.permute.xlu0 0
        %4445 = vperm.xlu0 %4444, %v3715
        %v4446 = vpop.permute.xlu0 %4445
        %v4449 = vsel %vm1447, %v3701, 0
        %v4452 = vsel %vm1447, %v3704, 0
        %v4455 = vsel %vm1447, %v3707, 0
        %v4458 = vsel %vm1447, %v3710, 0
        %4460 = vmatprep.subr.mxu0 %v4357
        %4461 = vmatpush1.msra.mxu0 %v4356
        %4462 = vmatprep.subr.mxu0 %v4359
        %4463 = vmatpush1.msra.mxu0 %v4358
        %4464 = vmatprep.subr.mxu0 %v4361
        %4465 = vmatpush1.msra.mxu0 %v4360
        %4466 = vmatprep.subr.mxu0 %v4363
        %4467 = vmatpush1.msra.mxu0 %v4362
        %4468 = vmatprep.subr.mxu0 %v4365
        %4469 = vmatpush1.msra.mxu0 %v4364
        %4470 = vmatprep.subr.mxu0 %v4367
        %4471 = vmatpush1.msra.mxu0 %v4366
        %4472 = vmatprep.subr.mxu0 %v4369
        %4473 = vmatpush1.msra.mxu0 %v4368
        %4474 = vmatprep.subr.mxu0 %v4371
        %4475 = vmatpush1.msra.mxu0 %v4370
        %4476 = vmatprep.subr.mxu0 %v4373
        %4477 = vmatpush1.msra.mxu0 %v4372
        %4478 = vmatprep.subr.mxu0 %v4375
        %4479 = vmatpush1.msra.mxu0 %v4374
        %4480 = vmatprep.subr.mxu0 %v4377
        %4481 = vmatpush1.msra.mxu0 %v4376
        %4482 = vmatprep.subr.mxu0 %v4379
        %4483 = vmatpush1.msra.mxu0 %v4378
        %4484 = vmatprep.subr.mxu0 %v4381
        %4485 = vmatpush1.msra.mxu0 %v4380
        %4486 = vmatprep.subr.mxu0 %v4383
        %4487 = vmatpush1.msra.mxu0 %v4382
        %4488 = vmatprep.subr.mxu0 %v4385
        %4489 = vmatpush1.msra.mxu0 %v4384
        %4490 = vmatprep.subr.mxu0 %v4387
        %4491 = vmatpush1.msra.mxu0 %v4386
        %4492 = vmatprep.subr.mxu0 %v4389
        %4493 = vmatpush1.msra.mxu0 %v4388
        %4494 = vmatprep.subr.mxu0 %v4391
        %4495 = vmatpush1.msra.mxu0 %v4390
        %4496 = vmatprep.subr.mxu0 %v4393
        %4497 = vmatpush1.msra.mxu0 %v4392
        %4498 = vmatprep.subr.mxu0 %v4395
        %4499 = vmatpush1.msra.mxu0 %v4394
        %4500 = vmatprep.subr.mxu0 %v4397
        %4501 = vmatpush1.msra.mxu0 %v4396
        %4502 = vmatprep.subr.mxu0 %v4399
        %4503 = vmatpush1.msra.mxu0 %v4398
        %4504 = vmatprep.subr.mxu0 %v4401
        %4505 = vmatpush1.msra.mxu0 %v4400
        %4506 = vmatprep.subr.mxu0 %v4403
        %4507 = vmatpush1.msra.mxu0 %v4402
        %4508 = vmatprep.subr.mxu0 %v4405
        %4509 = vmatpush1.msra.mxu0 %v4404
        %4510 = vmatprep.subr.mxu0 %v4407
        %4511 = vmatpush1.msra.mxu0 %v4406
        %4512 = vmatprep.subr.mxu0 %v4409
        %4513 = vmatpush1.msra.mxu0 %v4408
        %4514 = vmatprep.subr.mxu0 %v4411
        %4515 = vmatpush1.msra.mxu0 %v4410
        %4516 = vmatprep.subr.mxu0 %v4413
        %4517 = vmatpush1.msra.mxu0 %v4412
        %4518 = vmatprep.subr.mxu0 %v4415
        %4519 = vmatpush1.msra.mxu0 %v4414
        %4520 = vmatprep.subr.mxu0 %v4417
        %4521 = vmatpush1.msra.mxu0 %v4416
        %4522 = vmatprep.subr.mxu0 %v4419
        %4523 = vmatpush1.msra.mxu0 %v4418
        %4524 = vmatprep.mubr.f32.mxu0 %v3700
        %4525 = vmatmul.mubr.f32.gmra.mrb[0].mxu0 %v3699
        %v4526 = vpop.f32.mrb[0].mxu0
        %v4527 = vadd.f32 %v4431, %v4526
        %v4528 = vpop.f32.mrb[0].mxu0
        %v4529 = vadd.f32 %v4431, %v4528
        %4530 = vmatprep.mubr.f32.mxu0 %v3703
        %4531 = vmatmul.mubr.f32.gmra.mrb[0].mxu0 %v3702
        %v4532 = vpop.f32.mrb[0].mxu0
        %v4533 = vadd.f32 %v4436, %v4532
        %v4534 = vpop.f32.mrb[0].mxu0
        %v4535 = vadd.f32 %v4436, %v4534
        %4536 = vmatprep.mubr.f32.mxu0 %v3706
        %4537 = vmatmul.mubr.f32.gmra.mrb[0].mxu0 %v3705
        %v4538 = vpop.f32.mrb[0].mxu0
        %v4539 = vadd.f32 %v4441, %v4538
        %v4540 = vpop.f32.mrb[0].mxu0
        %v4541 = vadd.f32 %v4441, %v4540
        %4542 = vmatprep.mubr.f32.mxu0 %v3709
        %4543 = vmatmul.mubr.f32.gmra.mrb[0].mxu0 %v3708
        %v4544 = vpop.f32.mrb[0].mxu0
        %v4545 = vadd.f32 %v4446, %v4544
        %v4546 = vpop.f32.mrb[0].mxu0
        %v4547 = vadd.f32 %v4446, %v4546
        %4548 = vdwg.mxu0
        %4549 = vmatprep.subr.mxu0 %v4421
        %4550 = vmatpush1.msra.mxu0 %v4420
        %4551 = vmatprep.subr.mxu0 %v4423
        %4552 = vmatpush1.msra.mxu0 %v4422
        %4553 = vmatprep.subr.mxu0 %v4425
        %4554 = vmatpush1.msra.mxu0 %v4424
        %4555 = vmatprep.subr.mxu0 %v4427
        %4556 = vmatpush1.msra.mxu0 %v4426
        %4557 = vmatprep.subr.mxu0 0.0
        %4558 = vmatpush1.msra.mxu0 0.0
        %4559 = vmatprep.subr.mxu0 0.0
        %4560 = vmatpush1.msra.mxu0 0.0
        %4561 = vmatprep.subr.mxu0 0.0
        %4562 = vmatpush1.msra.mxu0 0.0
        %4563 = vmatprep.subr.mxu0 0.0
        %4564 = vmatpush1.msra.mxu0 0.0
        %4565 = vmatprep.subr.mxu0 0.0
        %4566 = vmatpush1.msra.mxu0 0.0
        %4567 = vmatprep.subr.mxu0 0.0
        %4568 = vmatpush1.msra.mxu0 0.0
        %4569 = vmatprep.subr.mxu0 0.0
        %4570 = vmatpush1.msra.mxu0 0.0
        %4571 = vmatprep.subr.mxu0 0.0
        %4572 = vmatpush1.msra.mxu0 0.0
        %4573 = vmatprep.subr.mxu0 0.0
        %4574 = vmatpush1.msra.mxu0 0.0
        %4575 = vmatprep.subr.mxu0 0.0
        %4576 = vmatpush1.msra.mxu0 0.0
        %4577 = vmatprep.subr.mxu0 0.0
        %4578 = vmatpush1.msra.mxu0 0.0
        %4579 = vmatprep.subr.mxu0 0.0
        %4580 = vmatpush1.msra.mxu0 0.0
        %4581 = vmatprep.subr.mxu0 0.0
        %4582 = vmatpush1.msra.mxu0 0.0
        %4583 = vmatprep.subr.mxu0 0.0
        %4584 = vmatpush1.msra.mxu0 0.0
        %4585 = vmatprep.subr.mxu0 0.0
        %4586 = vmatpush1.msra.mxu0 0.0
        %4587 = vmatprep.subr.mxu0 0.0
        %4588 = vmatpush1.msra.mxu0 0.0
        %4589 = vmatprep.subr.mxu0 0.0
        %4590 = vmatpush1.msra.mxu0 0.0
        %4591 = vmatprep.subr.mxu0 0.0
        %4592 = vmatpush1.msra.mxu0 0.0
        %4593 = vmatprep.subr.mxu0 0.0
        %4594 = vmatpush1.msra.mxu0 0.0
        %4595 = vmatprep.subr.mxu0 0.0
        %4596 = vmatpush1.msra.mxu0 0.0
        %4597 = vmatprep.subr.mxu0 0.0
        %4598 = vmatpush1.msra.mxu0 0.0
        %4599 = vmatprep.subr.mxu0 0.0
        %4600 = vmatpush1.msra.mxu0 0.0
        %4601 = vmatprep.subr.mxu0 0.0
        %4602 = vmatpush1.msra.mxu0 0.0
        %4603 = vmatprep.subr.mxu0 0.0
        %4604 = vmatpush1.msra.mxu0 0.0
        %4605 = vmatprep.subr.mxu0 0.0
        %4606 = vmatpush1.msra.mxu0 0.0
        %4607 = vmatprep.subr.mxu0 0.0
        %4608 = vmatpush1.msra.mxu0 0.0
        %4609 = vmatprep.subr.mxu0 0.0
        %4610 = vmatpush1.msra.mxu0 0.0
        %4611 = vmatprep.subr.mxu0 0.0
        %4612 = vmatpush1.msra.mxu0 0.0
        %4613 = vmatprep.mubr.f32.mxu0 0.0
        %4614 = vmatmul.mubr.f32.gmra.mrb[0].mxu0 %v4449
        %v4615 = vpop.f32.mrb[0].mxu0
        %v4616 = vadd.f32 %v4527, %v4615
        %v4617 = vpop.f32.mrb[0].mxu0
        %v4618 = vadd.f32 %v4529, %v4617
        %4619 = vmatprep.mubr.f32.mxu0 0.0
        %4620 = vmatmul.mubr.f32.gmra.mrb[0].mxu0 %v4452
        %v4621 = vpop.f32.mrb[0].mxu0
        %v4622 = vadd.f32 %v4533, %v4621
        %v4623 = vpop.f32.mrb[0].mxu0
        %v4624 = vadd.f32 %v4535, %v4623
        %4625 = vmatprep.mubr.f32.mxu0 0.0
        %4626 = vmatmul.mubr.f32.gmra.mrb[0].mxu0 %v4455
        %v4627 = vpop.f32.mrb[0].mxu0
        %v4628 = vadd.f32 %v4539, %v4627
        %v4629 = vpop.f32.mrb[0].mxu0
        %v4630 = vadd.f32 %v4541, %v4629
        %4631 = vmatprep.mubr.f32.mxu0 0.0
        %4632 = vmatmul.mubr.f32.gmra.mrb[0].mxu0 %v4458
        %v4633 = vpop.f32.mrb[0].mxu0
        %v4634 = vadd.f32 %v4545, %v4633
        %v4635 = vpop.f32.mrb[0].mxu0
        %v4636 = vadd.f32 %v4547, %v4635
        %4637 = vdwg.mxu0
        %v4638 = vadd.f32 %v2638, %v4616
        %v4639 = vadd.f32 %v2639, %v4618
        %v4640 = vadd.f32 %v2640, %v4622
        %v4641 = vadd.f32 %v2641, %v4624
        %v4642 = vadd.f32 %v2642, %v4628
        %v4643 = vadd.f32 %v2643, %v4630
        %v4644 = vadd.f32 %v2644, %v4634
        %v4645 = vadd.f32 %v2645, %v4636
        %4646 = vst [vmem:[%s232] sm:$0xff] %v4638
        %4647 = vst [vmem:[%s232 + $0x8] sm:$0xff] %v4639
        %4648 = vst [vmem:[%s232 + $0x10] sm:$0xff] %v4640
        %4649 = vst [vmem:[%s232 + $0x18] sm:$0xff] %v4641
        %4650 = vst [vmem:[%s232 + $0x20] sm:$0xff] %v4642
        %4651 = vst [vmem:[%s232 + $0x28] sm:$0xff] %v4643
        %4652 = vst [vmem:[%s232 + $0x30] sm:$0xff] %v4644
        %4653 = vst [vmem:[%s232 + $0x38] sm:$0xff] %v4645
        %s4654 = sand.u32 %s138, 1
        %s4655 = scalar_lea.sflag [#allocation6], %s4654
        %s4656 = sand.u32 %s138, 1
        %s4657 = smul.addr %s4656, 64
        %s4658 = scalar_lea.vmem [#allocation7], %s4657
        // Predicated region
        $region45: #{tpu_custom_call.1} parent=39 // pred_check
          %p4659 = pneg %p148
        $region46: #{tpu_custom_call.1} parent=39 // pred_check_branch
          %4661 = sbr.rel (%p4659) target = $region48
        $region47: #{tpu_custom_call.1} parent=39 // pred_region
          %s4663 = ssub.s32 1024, 1024
          %4664 = vsyncadd %s4655, %s4663
          %s4665 = smul.addr %s20, 8
          %s4666 = smul.addr %s4665, 128
          %s4667 = scalar_lea.hbm %s5, %s4666
          %s4668 = sshll.u32 %s4658, 4
          %s4669 = int_to_ptr.vmem [resolvable:$true] %s4668
          %4674 = dma.vmem_to_hbm [thread:$0]  %s4669, 1024, %s4667, %s4655, 256, 256, 16
        $region48: #{tpu_custom_call.1} parent=39 // pred_fallthru
          _
      $region40: #{tpu_custom_call.1} parent=5 // pred_fallthru
        _
      %p4675 = scmp.le.s32.totalorder 2, %s15
      // Predicated region
      $region49: #{tpu_custom_call.1} parent=5 // pred_check
        %p4676 = pneg %p4675
      $region50: #{tpu_custom_call.1} parent=5 // pred_check_branch
        %4678 = sbr.rel (%p4676) target = $region52
      $region51: #{tpu_custom_call.1} parent=5 // pred_region
        %s4679 = ssub.s32 %s15, 2
        // Predicated region
        $region53: #{tpu_custom_call.1} parent=51 // pred_check
          %p4680 = pneg %p154
        $region54: #{tpu_custom_call.1} parent=51 // pred_check_branch
          %4682 = sbr.rel (%p4680) target = $region56
        $region55: #{tpu_custom_call.1} parent=51 // pred_region
          %s4683 = sand.u32 %s139, 1
          %s4684 = scalar_lea.sflag [#allocation6], %s4683
          %s4685 = sand.u32 %s139, 1
          %s4686 = smul.addr %s4685, 64
          %s4687 = scalar_lea.vmem [#allocation7], %s4686
          %4688 = dma.done %s4684, 1024
        $region56: #{tpu_custom_call.1} parent=51 // pred_fallthru
          _
      $region52: #{tpu_custom_call.1} parent=5 // pred_fallthru
        _
    $region6: #{tpu_custom_call.1} parent=1 // loop_footer
      %s19 = sadd.s32 1, %s15
    $region7: #{tpu_custom_call.1} parent=1 // loop_footer_branch
      %14 = sbr.rel target = $region3
    $region8: #{tpu_custom_call.1} parent=1 // loop_exit
      _
    %4689 = vsyncpa [#allocation5], 1
    %s4690 = scalar_lea.sflag [#allocation5], 1
    %4691 = vsyncpa %s4690, 1
    %4692 = vsyncpa [#allocation6], 1
    %s4693 = scalar_lea.sflag [#allocation6], 1
    %4694 = vsyncpa %s4693, 1

</llo_original>
